<compile_context>
chip_gen: v7x
topology: tpu7x:2x2x1
jax: 0.10.0
libtpu: 0.0.40
codegen_flags: <defaults>
</compile_context>

<pallas_src>
import functools
import math

import jax
import jax.numpy as jnp
from jax.experimental import pallas as pl
from jax.experimental.pallas import tpu as pltpu

LANE = 128
_BN_EPS = 1e-5


# ----------------------------------------------------------------------------
# Fused Pallas kernel: all ResTempBlocks + GAP for one (Bt, T, C_in) batch tile.
# ----------------------------------------------------------------------------
def _tcn_fused_kernel(*refs, layer_shifts, layer_has_ds, pad, t_len, bt, cp, c_in):
    """refs = (x_ref, *param_refs, o_ref, scr)

    x_ref  : (Bt, T, C_in)     bf16  raw (un-padded) input tile
    params : per layer         [w1 (K*Cp,Cp) bf16, c1 (1,Cp) f32,
                                w2 (K*Cp,Cp) bf16, c2 (1,Cp) f32,
                                (wd (Cp,Cp) bf16, bd (1,Cp) f32) if downsample]
             (BN scale + conv bias already folded into w*/c*)
    o_ref  : (1, Bt, Cp)       f32   per-tile GAP output
    scr    : (Bt, pad+T, Cp)   bf16  causal-zero-padded activation scratch
    """
    x_ref, o_ref, scr = refs[0], refs[-2], refs[-1]
    params = list(refs[1:-2])
    T = t_len
    M = bt * T

    # Zero the whole scratch every grid step (causal pad rows + padded channel lanes).
    # Do NOT gate this on program_id()==0 (second v7x core never runs step 0).
    scr[...] = jnp.zeros_like(scr)

    # In-kernel channel zero-pad: deposit the raw C_in channels into the lane-padded
    # scratch window and read the Cp-wide layer-0 activation back (input is bf16 in HBM).
    scr[:, pad:pad + T, :c_in] = x_ref[...].astype(scr.dtype)
    x = scr[:, pad:pad + T, :].astype(jnp.float32).reshape(M, cp)

    it = iter(params)
    for li, (shifts, has_ds) in enumerate(zip(layer_shifts, layer_has_ds)):
        w1_ref, c1_ref, w2_ref, c2_ref = next(it), next(it), next(it), next(it)
        wd_ref, bd_ref = (next(it), next(it)) if has_ds else (None, None)

        def conv_bn_relu(v, w_ref, c_ref, shifts=shifts, v_in_scr=False):
            if shifts == (0,):
                # Degenerate 1-tap conv (dilation >= T): skip the scratch round trip.
                lhs = v.astype(w_ref.dtype)
            else:
                if not v_in_scr:
                    scr[:, pad:pad + T, :] = v.reshape(bt, T, cp).astype(scr.dtype)
                taps = [scr[:, pad - s:pad - s + T, :] for s in shifts]
                stacked = taps[0] if len(taps) == 1 else jnp.concatenate(taps, axis=-1)
                lhs = stacked.reshape(M, len(shifts) * cp)
            y = jnp.dot(lhs, w_ref[...], preferred_element_type=jnp.float32)
            return jnp.maximum(y + c_ref[...], 0.0)

        # Layer-0 input already sits in the scratch window -> skip the redundant store.
        h = conv_bn_relu(x, w1_ref, c1_ref, v_in_scr=(li == 0))   # Conv1dBlock #1
        out = conv_bn_relu(h, w2_ref, c2_ref)                     # Conv1dBlock #2
        if has_ds:                                                # 1x1 conv residual (bf16 matmul)
            res = jnp.dot(x.astype(wd_ref.dtype), wd_ref[...],
                          preferred_element_type=jnp.float32) + bd_ref[...]
        else:                                                     # identity residual (f32, no matmul)
            res = x
        x = jnp.maximum(out + res, 0.0)

    # 'gap' flatten: adaptive_avg_pool1d(x, 1) == mean over the time axis.
    gap = jnp.sum(x.reshape(bt, T, cp), axis=1) * (1.0 / T)       # (Bt, Cp) f32
    o_ref[0] = gap.astype(o_ref.dtype)


# ----------------------------------------------------------------------------
# Parameter packing: general BN fold, scale folded into weights, lane padding,
# im2col weight flattening, static dead-tap removal.
# ----------------------------------------------------------------------------
def _pack_params(raw_params, *, c_in, t_len, ksize, dilation_base, lane):
    chans = [c_in] + [lp["w2"].shape[2] for lp in raw_params]
    cp = lane * ((max(chans) + lane - 1) // lane)

    packed, layer_shifts, layer_has_ds = [], [], []
    for i, lp in enumerate(raw_params):
        d = dilation_base ** i
        cin, cout = chans[i], chans[i + 1]
        live = [j for j in range(ksize) if (ksize - 1 - j) * d < t_len]
        shifts = tuple((ksize - 1 - j) * d for j in live)

        def fold(w, b, g, be, rm, rv):
            s = g / jnp.sqrt(rv + _BN_EPS)              # general BN (eval) fold
            return w * s[None, None, :], be - rm * s + b * s

        def pack_w(wf, ci):
            out = jnp.zeros((len(live) * cp, cp), jnp.float32)
            for idx, j in enumerate(live):
                out = out.at[idx * cp:idx * cp + ci, :cout].set(wf[j])
            return out.astype(jnp.bfloat16)

        def pack_vec(v):
            return jnp.zeros((1, cp), jnp.float32).at[0, :cout].set(v)

        w1f, c1 = fold(lp["w1"], lp["b1"], lp["g1"], lp["be1"], lp["rm1"], lp["rv1"])
        w2f, c2 = fold(lp["w2"], lp["b2"], lp["g2"], lp["be2"], lp["rm2"], lp["rv2"])
        packed += [pack_w(w1f, cin), pack_vec(c1), pack_w(w2f, cout), pack_vec(c2)]

        has_ds = cin != cout
        if has_ds:
            wd = jnp.zeros((cp, cp), jnp.float32).at[:cin, :cout].set(lp["wd"])
            packed += [wd.astype(jnp.bfloat16), pack_vec(lp["bd"])]
        layer_shifts.append(shifts)
        layer_has_ds.append(has_ds)

    # pad derived from live shifts only (dead taps read nothing)
    pad = max([0] + [max(s) for s in layer_shifts if s])
    return packed, tuple(layer_shifts), tuple(layer_has_ds), cp, pad


def _const_spec(shape):
    zeros = (0,) * len(shape)
    return pl.BlockSpec(shape, lambda b, zeros=zeros: zeros)


def _choose_bt(batch, t_len, cp, pad, *, target_rows=256, vmem_budget=24 << 20):
    """Batch-tile size: fill the MXU row dim, fit VMEM, keep >= 2 grid steps."""
    bt = max(1, min(batch, target_rows // max(t_len, 1)))
    # rough per-sample VMEM footprint: bf16 scratch + ~8 live f32 activation tiles
    per_sample = (pad + t_len) * cp * 2 + 8 * t_len * cp * 4
    bt = max(1, min(bt, vmem_budget // per_sample))
    # keep >= 2 grid steps so v7x's second TensorCore gets work
    if batch >= 2 and -(-batch // bt) < 2:
        bt = -(-batch // 2)
    return bt


# ----------------------------------------------------------------------------
# Wrapper: one pallas_call for the whole network.
# ----------------------------------------------------------------------------
def tcn_forward(x_nct, raw_params, *, ksize, dilation_base, lane=LANE):
    """x_nct: [batch, channel, time] like the PyTorch module. Returns (B, C_last)."""
    B, c_in, T = x_nct.shape
    packed, shifts, has_ds, cp, pad = _pack_params(
        raw_params, c_in=c_in, t_len=T, ksize=ksize,
        dilation_base=dilation_base, lane=lane)
    c_last = raw_params[-1]["w2"].shape[2]

    bt = _choose_bt(B, T, cp, pad)
    nb = -(-B // bt)
    b_pad = nb * bt

    # NCT -> (B, T, C_in) bf16: no channel pre-padding (done in-kernel), half the
    # input HBM bytes.  Only the batch is padded up to a multiple of the tile.
    x = jnp.transpose(x_nct, (0, 2, 1)).astype(jnp.bfloat16)
    if b_pad != B:
        x = jnp.pad(x, ((0, b_pad - B), (0, 0), (0, 0)))

    kern = functools.partial(_tcn_fused_kernel, layer_shifts=shifts,
                             layer_has_ds=has_ds, pad=pad, t_len=T,
                             bt=bt, cp=cp, c_in=c_in)

    # Explicit VMEM budget (v7x: 64 MiB physical / 32 MiB default scoped).
    w_bytes = sum(2 * p.size * p.dtype.itemsize for p in packed)   # double-buffered weights
    io_bytes = 2 * bt * T * c_in * 2 + 2 * bt * cp * 4             # in/out double buffers
    scr_bytes = bt * (pad + T) * cp * 2                            # bf16 scratch
    act_bytes = 8 * bt * T * cp * 4                                # live f32 activations
    vmem_limit = int(min(32 << 20, max(16 << 20,
                                       2 * (w_bytes + io_bytes + scr_bytes + act_bytes))))

    out = pl.pallas_call(
        kern,
        out_shape=jax.ShapeDtypeStruct((nb, bt, cp), jnp.float32),
        grid_spec=pltpu.PrefetchScalarGridSpec(
            num_scalar_prefetch=0,
            grid=(nb,),
            in_specs=[pl.BlockSpec((bt, T, c_in), lambda b: (b, 0, 0))]
                     + [_const_spec(p.shape) for p in packed],
            out_specs=pl.BlockSpec((1, bt, cp), lambda b: (b, 0, 0)),
            scratch_shapes=[pltpu.VMEM((bt, pad + T, cp), jnp.bfloat16)],
        ),
        compiler_params=pltpu.CompilerParams(
            dimension_semantics=("parallel",),
            vmem_limit_bytes=vmem_limit),
    )(x, *packed)

    return out.reshape(b_pad, cp)[:B, :c_last]


# ----------------------------------------------------------------------------
# Deterministic synthetic parameters (raw, PyTorch-like: conv + full BN stats)
# ----------------------------------------------------------------------------
def init_tcn_params(key, c_in, channels, ksize):
    raw = []
    for i, c_out in enumerate(channels):
        cin_i = c_in if i == 0 else channels[i - 1]
        key, *ks = jax.random.split(key, 15)

        def conv_w(k, ci, co):
            return jax.random.normal(k, (ksize, ci, co), jnp.float32) / math.sqrt(ci * ksize)

        lp = dict(
            w1=conv_w(ks[0], cin_i, c_out),
            b1=0.01 * jax.random.normal(ks[1], (c_out,), jnp.float32),
            g1=1.0 + 0.1 * jax.random.normal(ks[2], (c_out,), jnp.float32),
            be1=0.1 * jax.random.normal(ks[3], (c_out,), jnp.float32),
            rm1=0.05 * jax.random.normal(ks[4], (c_out,), jnp.float32),
            rv1=1.0 + 0.1 * jnp.abs(jax.random.normal(ks[5], (c_out,), jnp.float32)),
            w2=conv_w(ks[6], c_out, c_out),
            b2=0.01 * jax.random.normal(ks[7], (c_out,), jnp.float32),
            g2=1.0 + 0.1 * jax.random.normal(ks[8], (c_out,), jnp.float32),
            be2=0.1 * jax.random.normal(ks[9], (c_out,), jnp.float32),
            rm2=0.05 * jax.random.normal(ks[10], (c_out,), jnp.float32),
            rv2=1.0 + 0.1 * jnp.abs(jax.random.normal(ks[11], (c_out,), jnp.float32)),
            wd=None, bd=None,
        )
        if cin_i != c_out:
            lp["wd"] = jax.random.normal(ks[12], (cin_i, c_out), jnp.float32) / math.sqrt(cin_i)
            lp["bd"] = 0.01 * jax.random.normal(ks[13], (c_out,), jnp.float32)
        raw.append(lp)
    return raw


# ----------------------------------------------------------------------------
# Pure-JAX reference (full conv + BatchNorm math, f32) for validation
# ----------------------------------------------------------------------------
def ref_forward(x_nct, raw_params, *, ksize, dilation_base):
    x = jnp.transpose(x_nct, (0, 2, 1)).astype(jnp.float32)
    T = x.shape[1]
    for i, lp in enumerate(raw_params):
        d = dilation_base ** i

        def conv_bn_relu(inp, w, b, g, be, rm, rv):
            acc = jnp.zeros(inp.shape[:2] + (w.shape[2],), jnp.float32)
            for j in range(ksize):
                shift = (ksize - 1 - j) * d
                xs = inp if shift == 0 else jnp.pad(
                    inp, ((0, 0), (shift, 0), (0, 0)))[:, :T]
                acc = acc + jnp.einsum('btc,cd->btd', xs, w[j])
            y = (acc + b - rm) / jnp.sqrt(rv + _BN_EPS) * g + be
            return jnp.maximum(y, 0.0)

        h = conv_bn_relu(x, lp["w1"], lp["b1"], lp["g1"], lp["be1"], lp["rm1"], lp["rv1"])
        out = conv_bn_relu(h, lp["w2"], lp["b2"], lp["g2"], lp["be2"], lp["rm2"], lp["rv2"])
        res = x if lp["wd"] is None else jnp.einsum('btc,cd->btd', x, lp["wd"]) + lp["bd"]
        x = jnp.maximum(out + res, 0.0)
    return jnp.mean(x, axis=1)


# ----------------------------------------------------------------------------
if __name__ == "__main__":
    # Small config consistent with the module (eval mode, how_flatten='gap'):
    #   input_shape = (T=16, C=4), batch = 8
    #   n_tcn_channels = (8, 8, 16), tcn_kernel_size = 2, dilation_base = 4
    # dilation_base=4 makes the last block's dilation (16) >= T, exercising the
    # degenerate single-tap conv path as well as the ds / identity residual paths.
    B, C_IN, T = 8, 4, 16
    CHANNELS = (8, 8, 16)
    KSIZE = 2
    DILATION_BASE = 4

    key = jax.random.PRNGKey(0)
    key, xk = jax.random.split(key)
    x = jax.random.normal(xk, (B, C_IN, T), jnp.float32)   # PyTorch NCT layout

    raw = init_tcn_params(key, C_IN, CHANNELS, KSIZE)

    out = jax.block_until_ready(
        tcn_forward(x, raw, ksize=KSIZE, dilation_base=DILATION_BASE))
    ref = jax.block_until_ready(
        ref_forward(x, raw, ksize=KSIZE, dilation_base=DILATION_BASE))

    assert out.shape == (B, CHANNELS[-1]), out.shape
    # bf16 input + bf16 matmul operands with f32 accumulation -> loosened tolerance
    assert jnp.allclose(out, ref, rtol=5e-2, atol=5e-2), (
        float(jnp.max(jnp.abs(out - ref))))

    print("KERNEL_OK")
</pallas_src>

<mosaic_0001>
module attributes {stable_mosaic.version = 11 : i64} {
  func.func @_tcn_fused_kernel(%arg0: i32, %arg1: memref<4x16x4xbf16, #tpu.memory_space<vmem>>, %arg2: memref<256x128xbf16, #tpu.memory_space<vmem>>, %arg3: memref<1x128xf32, #tpu.memory_space<vmem>>, %arg4: memref<256x128xbf16, #tpu.memory_space<vmem>>, %arg5: memref<1x128xf32, #tpu.memory_space<vmem>>, %arg6: memref<128x128xbf16, #tpu.memory_space<vmem>>, %arg7: memref<1x128xf32, #tpu.memory_space<vmem>>, %arg8: memref<256x128xbf16, #tpu.memory_space<vmem>>, %arg9: memref<1x128xf32, #tpu.memory_space<vmem>>, %arg10: memref<256x128xbf16, #tpu.memory_space<vmem>>, %arg11: memref<1x128xf32, #tpu.memory_space<vmem>>, %arg12: memref<128x128xbf16, #tpu.memory_space<vmem>>, %arg13: memref<1x128xf32, #tpu.memory_space<vmem>>, %arg14: memref<128x128xbf16, #tpu.memory_space<vmem>>, %arg15: memref<1x128xf32, #tpu.memory_space<vmem>>, %arg16: memref<128x128xbf16, #tpu.memory_space<vmem>>, %arg17: memref<1x128xf32, #tpu.memory_space<vmem>>, %arg18: memref<1x4x128xf32, #tpu.memory_space<vmem>>, %arg19: memref<4x20x128xbf16, #tpu.memory_space<vmem>>) attributes {dimension_semantics = [#tpu.dimension_semantics<parallel>], iteration_bounds = array<i64: 2>, scalar_prefetch = 0 : i64, scratch_operands = 1 : i64, tpu.core_type = #tpu.core_type<tc>, window_params = [{transform_indices = @transform_0, window_bounds = array<i64: 4, 16, 4>}, {pipeline_mode = #tpu.pipeline_mode<synchronous>, transform_indices = @transform_1, window_bounds = array<i64: 256, 128>}, {pipeline_mode = #tpu.pipeline_mode<synchronous>, transform_indices = @transform_2, window_bounds = array<i64: 1, 128>}, {pipeline_mode = #tpu.pipeline_mode<synchronous>, transform_indices = @transform_3, window_bounds = array<i64: 256, 128>}, {pipeline_mode = #tpu.pipeline_mode<synchronous>, transform_indices = @transform_4, window_bounds = array<i64: 1, 128>}, {pipeline_mode = #tpu.pipeline_mode<synchronous>, transform_indices = @transform_5, window_bounds = array<i64: 128, 128>}, {pipeline_mode = #tpu.pipeline_mode<synchronous>, transform_indices = @transform_6, window_bounds = array<i64: 1, 128>}, {pipeline_mode = #tpu.pipeline_mode<synchronous>, transform_indices = @transform_7, window_bounds = array<i64: 256, 128>}, {pipeline_mode = #tpu.pipeline_mode<synchronous>, transform_indices = @transform_8, window_bounds = array<i64: 1, 128>}, {pipeline_mode = #tpu.pipeline_mode<synchronous>, transform_indices = @transform_9, window_bounds = array<i64: 256, 128>}, {pipeline_mode = #tpu.pipeline_mode<synchronous>, transform_indices = @transform_10, window_bounds = array<i64: 1, 128>}, {pipeline_mode = #tpu.pipeline_mode<synchronous>, transform_indices = @transform_11, window_bounds = array<i64: 128, 128>}, {pipeline_mode = #tpu.pipeline_mode<synchronous>, transform_indices = @transform_12, window_bounds = array<i64: 1, 128>}, {pipeline_mode = #tpu.pipeline_mode<synchronous>, transform_indices = @transform_13, window_bounds = array<i64: 128, 128>}, {pipeline_mode = #tpu.pipeline_mode<synchronous>, transform_indices = @transform_14, window_bounds = array<i64: 1, 128>}, {pipeline_mode = #tpu.pipeline_mode<synchronous>, transform_indices = @transform_15, window_bounds = array<i64: 128, 128>}, {pipeline_mode = #tpu.pipeline_mode<synchronous>, transform_indices = @transform_16, window_bounds = array<i64: 1, 128>}, {transform_indices = @transform_17, window_bounds = array<i64: 1, 4, 128>}]} {
    %cst = arith.constant 0.000000e+00 : bf16
    %0 = vector.broadcast %cst : bf16 to vector<4x20x128xbf16>
    %c0 = arith.constant 0 : index
    %c0_0 = arith.constant 0 : index
    %c0_1 = arith.constant 0 : index
    %1 = vector.load %arg19[%c0, %c0_0, %c0_1] : memref<4x20x128xbf16, #tpu.memory_space<vmem>>, vector<4x20x128xbf16>
    tpu.vector_store %arg19[%c0, %c0_0, %c0_1], %0 {strides = array<i32>} : memref<4x20x128xbf16, #tpu.memory_space<vmem>>, vector<4x20x128xbf16>,
    %c0_2 = arith.constant 0 : index
    %c0_3 = arith.constant 0 : index
    %c0_4 = arith.constant 0 : index
    %2 = vector.load %arg1[%c0_2, %c0_3, %c0_4] : memref<4x16x4xbf16, #tpu.memory_space<vmem>>, vector<4x16x4xbf16>
    %c0_5 = arith.constant 0 : index
    %c4 = arith.constant 4 : index
    %c0_6 = arith.constant 0 : index
    %3 = vector.load %arg19[%c0_5, %c4, %c0_6] : memref<4x20x128xbf16, #tpu.memory_space<vmem>>, vector<4x16x4xbf16>
    tpu.vector_store %arg19[%c0_5, %c4, %c0_6], %2 {strides = array<i32>} : memref<4x20x128xbf16, #tpu.memory_space<vmem>>, vector<4x16x4xbf16>,
    %c0_7 = arith.constant 0 : index
    %c4_8 = arith.constant 4 : index
    %c0_9 = arith.constant 0 : index
    %4 = vector.load %arg19[%c0_7, %c4_8, %c0_9] : memref<4x20x128xbf16, #tpu.memory_space<vmem>>, vector<4x16x128xbf16>
    %5 = arith.extf %4 : vector<4x16x128xbf16> to vector<4x16x128xf32>
    %6 = vector.shape_cast %5 : vector<4x16x128xf32> to vector<64x128xf32>
    %c0_10 = arith.constant 0 : index
    %c3 = arith.constant 3 : index
    %c0_11 = arith.constant 0 : index
    %7 = vector.load %arg19[%c0_10, %c3, %c0_11] : memref<4x20x128xbf16, #tpu.memory_space<vmem>>, vector<4x16x128xbf16>
    %c0_12 = arith.constant 0 : index
    %c4_13 = arith.constant 4 : index
    %c0_14 = arith.constant 0 : index
    %8 = vector.load %arg19[%c0_12, %c4_13, %c0_14] : memref<4x20x128xbf16, #tpu.memory_space<vmem>>, vector<4x16x128xbf16>
    %9 = tpu.concatenate %7, %8 in 2 : vector<4x16x128xbf16>, vector<4x16x128xbf16> -> vector<4x16x256xbf16>
    %10 = vector.shape_cast %9 : vector<4x16x256xbf16> to vector<64x256xbf16>
    %c0_15 = arith.constant 0 : index
    %c0_16 = arith.constant 0 : index
    %11 = vector.load %arg2[%c0_15, %c0_16] : memref<256x128xbf16, #tpu.memory_space<vmem>>, vector<256x128xbf16>
    %cst_17 = arith.constant dense<0.000000e+00> : vector<64x128xf32>
    %12 = tpu.matmul %10, %11, %cst_17 {dimension_numbers = #tpu.dot_dimension_numbers<[1], [0], [0], [1], [0, 0, 1, 1], [], []>} : vector<64x256xbf16>, vector<256x128xbf16>, vector<64x128xf32> -> vector<64x128xf32>
    %c0_18 = arith.constant 0 : index
    %c0_19 = arith.constant 0 : index
    %13 = vector.load %arg3[%c0_18, %c0_19] : memref<1x128xf32, #tpu.memory_space<vmem>>, vector<1x128xf32>
    %14 = vector.broadcast %13 : vector<1x128xf32> to vector<64x128xf32>
    %15 = arith.addf %12, %14 : vector<64x128xf32>
    %cst_20 = arith.constant 0.000000e+00 : f32
    %16 = vector.broadcast %cst_20 : f32 to vector<64x128xf32>
    %17 = arith.maximumf %15, %16 : vector<64x128xf32>
    %18 = vector.shape_cast %17 : vector<64x128xf32> to vector<4x16x128xf32>
    %19 = arith.truncf %18 : vector<4x16x128xf32> to vector<4x16x128xbf16>
    %c0_21 = arith.constant 0 : index
    %c4_22 = arith.constant 4 : index
    %c0_23 = arith.constant 0 : index
    %20 = vector.load %arg19[%c0_21, %c4_22, %c0_23] : memref<4x20x128xbf16, #tpu.memory_space<vmem>>, vector<4x16x128xbf16>
    tpu.vector_store %arg19[%c0_21, %c4_22, %c0_23], %19 {strides = array<i32>} : memref<4x20x128xbf16, #tpu.memory_space<vmem>>, vector<4x16x128xbf16>,
    %c0_24 = arith.constant 0 : index
    %c3_25 = arith.constant 3 : index
    %c0_26 = arith.constant 0 : index
    %21 = vector.load %arg19[%c0_24, %c3_25, %c0_26] : memref<4x20x128xbf16, #tpu.memory_space<vmem>>, vector<4x16x128xbf16>
    %c0_27 = arith.constant 0 : index
    %c4_28 = arith.constant 4 : index
    %c0_29 = arith.constant 0 : index
    %22 = vector.load %arg19[%c0_27, %c4_28, %c0_29] : memref<4x20x128xbf16, #tpu.memory_space<vmem>>, vector<4x16x128xbf16>
    %23 = tpu.concatenate %21, %22 in 2 : vector<4x16x128xbf16>, vector<4x16x128xbf16> -> vector<4x16x256xbf16>
    %24 = vector.shape_cast %23 : vector<4x16x256xbf16> to vector<64x256xbf16>
    %c0_30 = arith.constant 0 : index
    %c0_31 = arith.constant 0 : index
    %25 = vector.load %arg4[%c0_30, %c0_31] : memref<256x128xbf16, #tpu.memory_space<vmem>>, vector<256x128xbf16>
    %cst_32 = arith.constant dense<0.000000e+00> : vector<64x128xf32>
    %26 = tpu.matmul %24, %25, %cst_32 {dimension_numbers = #tpu.dot_dimension_numbers<[1], [0], [0], [1], [0, 0, 1, 1], [], []>} : vector<64x256xbf16>, vector<256x128xbf16>, vector<64x128xf32> -> vector<64x128xf32>
    %c0_33 = arith.constant 0 : index
    %c0_34 = arith.constant 0 : index
    %27 = vector.load %arg5[%c0_33, %c0_34] : memref<1x128xf32, #tpu.memory_space<vmem>>, vector<1x128xf32>
    %28 = vector.broadcast %27 : vector<1x128xf32> to vector<64x128xf32>
    %29 = arith.addf %26, %28 : vector<64x128xf32>
    %cst_35 = arith.constant 0.000000e+00 : f32
    %30 = vector.broadcast %cst_35 : f32 to vector<64x128xf32>
    %31 = arith.maximumf %29, %30 : vector<64x128xf32>
    %32 = arith.truncf %6 : vector<64x128xf32> to vector<64x128xbf16>
    %c0_36 = arith.constant 0 : index
    %c0_37 = arith.constant 0 : index
    %33 = vector.load %arg6[%c0_36, %c0_37] : memref<128x128xbf16, #tpu.memory_space<vmem>>, vector<128x128xbf16>
    %cst_38 = arith.constant dense<0.000000e+00> : vector<64x128xf32>
    %34 = tpu.matmul %32, %33, %cst_38 {dimension_numbers = #tpu.dot_dimension_numbers<[1], [0], [0], [1], [0, 0, 1, 1], [], []>} : vector<64x128xbf16>, vector<128x128xbf16>, vector<64x128xf32> -> vector<64x128xf32>
    %c0_39 = arith.constant 0 : index
    %c0_40 = arith.constant 0 : index
    %35 = vector.load %arg7[%c0_39, %c0_40] : memref<1x128xf32, #tpu.memory_space<vmem>>, vector<1x128xf32>
    %36 = vector.broadcast %35 : vector<1x128xf32> to vector<64x128xf32>
    %37 = arith.addf %34, %36 : vector<64x128xf32>
    %38 = arith.addf %31, %37 : vector<64x128xf32>
    %cst_41 = arith.constant 0.000000e+00 : f32
    %39 = vector.broadcast %cst_41 : f32 to vector<64x128xf32>
    %40 = arith.maximumf %38, %39 : vector<64x128xf32>
    %41 = vector.shape_cast %40 : vector<64x128xf32> to vector<4x16x128xf32>
    %42 = arith.truncf %41 : vector<4x16x128xf32> to vector<4x16x128xbf16>
    %c0_42 = arith.constant 0 : index
    %c4_43 = arith.constant 4 : index
    %c0_44 = arith.constant 0 : index
    %43 = vector.load %arg19[%c0_42, %c4_43, %c0_44] : memref<4x20x128xbf16, #tpu.memory_space<vmem>>, vector<4x16x128xbf16>
    tpu.vector_store %arg19[%c0_42, %c4_43, %c0_44], %42 {strides = array<i32>} : memref<4x20x128xbf16, #tpu.memory_space<vmem>>, vector<4x16x128xbf16>,
    %c0_45 = arith.constant 0 : index
    %c0_46 = arith.constant 0 : index
    %c0_47 = arith.constant 0 : index
    %44 = vector.load %arg19[%c0_45, %c0_46, %c0_47] : memref<4x20x128xbf16, #tpu.memory_space<vmem>>, vector<4x16x128xbf16>
    %c0_48 = arith.constant 0 : index
    %c4_49 = arith.constant 4 : index
    %c0_50 = arith.constant 0 : index
    %45 = vector.load %arg19[%c0_48, %c4_49, %c0_50] : memref<4x20x128xbf16, #tpu.memory_space<vmem>>, vector<4x16x128xbf16>
    %46 = tpu.concatenate %44, %45 in 2 : vector<4x16x128xbf16>, vector<4x16x128xbf16> -> vector<4x16x256xbf16>
    %47 = vector.shape_cast %46 : vector<4x16x256xbf16> to vector<64x256xbf16>
    %c0_51 = arith.constant 0 : index
    %c0_52 = arith.constant 0 : index
    %48 = vector.load %arg8[%c0_51, %c0_52] : memref<256x128xbf16, #tpu.memory_space<vmem>>, vector<256x128xbf16>
    %cst_53 = arith.constant dense<0.000000e+00> : vector<64x128xf32>
    %49 = tpu.matmul %47, %48, %cst_53 {dimension_numbers = #tpu.dot_dimension_numbers<[1], [0], [0], [1], [0, 0, 1, 1], [], []>} : vector<64x256xbf16>, vector<256x128xbf16>, vector<64x128xf32> -> vector<64x128xf32>
    %c0_54 = arith.constant 0 : index
    %c0_55 = arith.constant 0 : index
    %50 = vector.load %arg9[%c0_54, %c0_55] : memref<1x128xf32, #tpu.memory_space<vmem>>, vector<1x128xf32>
    %51 = vector.broadcast %50 : vector<1x128xf32> to vector<64x128xf32>
    %52 = arith.addf %49, %51 : vector<64x128xf32>
    %cst_56 = arith.constant 0.000000e+00 : f32
    %53 = vector.broadcast %cst_56 : f32 to vector<64x128xf32>
    %54 = arith.maximumf %52, %53 : vector<64x128xf32>
    %55 = vector.shape_cast %54 : vector<64x128xf32> to vector<4x16x128xf32>
    %56 = arith.truncf %55 : vector<4x16x128xf32> to vector<4x16x128xbf16>
    %c0_57 = arith.constant 0 : index
    %c4_58 = arith.constant 4 : index
    %c0_59 = arith.constant 0 : index
    %57 = vector.load %arg19[%c0_57, %c4_58, %c0_59] : memref<4x20x128xbf16, #tpu.memory_space<vmem>>, vector<4x16x128xbf16>
    tpu.vector_store %arg19[%c0_57, %c4_58, %c0_59], %56 {strides = array<i32>} : memref<4x20x128xbf16, #tpu.memory_space<vmem>>, vector<4x16x128xbf16>,
    %c0_60 = arith.constant 0 : index
    %c0_61 = arith.constant 0 : index
    %c0_62 = arith.constant 0 : index
    %58 = vector.load %arg19[%c0_60, %c0_61, %c0_62] : memref<4x20x128xbf16, #tpu.memory_space<vmem>>, vector<4x16x128xbf16>
    %c0_63 = arith.constant 0 : index
    %c4_64 = arith.constant 4 : index
    %c0_65 = arith.constant 0 : index
    %59 = vector.load %arg19[%c0_63, %c4_64, %c0_65] : memref<4x20x128xbf16, #tpu.memory_space<vmem>>, vector<4x16x128xbf16>
    %60 = tpu.concatenate %58, %59 in 2 : vector<4x16x128xbf16>, vector<4x16x128xbf16> -> vector<4x16x256xbf16>
    %61 = vector.shape_cast %60 : vector<4x16x256xbf16> to vector<64x256xbf16>
    %c0_66 = arith.constant 0 : index
    %c0_67 = arith.constant 0 : index
    %62 = vector.load %arg10[%c0_66, %c0_67] : memref<256x128xbf16, #tpu.memory_space<vmem>>, vector<256x128xbf16>
    %cst_68 = arith.constant dense<0.000000e+00> : vector<64x128xf32>
    %63 = tpu.matmul %61, %62, %cst_68 {dimension_numbers = #tpu.dot_dimension_numbers<[1], [0], [0], [1], [0, 0, 1, 1], [], []>} : vector<64x256xbf16>, vector<256x128xbf16>, vector<64x128xf32> -> vector<64x128xf32>
    %c0_69 = arith.constant 0 : index
    %c0_70 = arith.constant 0 : index
    %64 = vector.load %arg11[%c0_69, %c0_70] : memref<1x128xf32, #tpu.memory_space<vmem>>, vector<1x128xf32>
    %65 = vector.broadcast %64 : vector<1x128xf32> to vector<64x128xf32>
    %66 = arith.addf %63, %65 : vector<64x128xf32>
    %cst_71 = arith.constant 0.000000e+00 : f32
    %67 = vector.broadcast %cst_71 : f32 to vector<64x128xf32>
    %68 = arith.maximumf %66, %67 : vector<64x128xf32>
    %69 = arith.addf %68, %40 : vector<64x128xf32>
    %cst_72 = arith.constant 0.000000e+00 : f32
    %70 = vector.broadcast %cst_72 : f32 to vector<64x128xf32>
    %71 = arith.maximumf %69, %70 : vector<64x128xf32>
    %72 = arith.truncf %71 : vector<64x128xf32> to vector<64x128xbf16>
    %c0_73 = arith.constant 0 : index
    %c0_74 = arith.constant 0 : index
    %73 = vector.load %arg12[%c0_73, %c0_74] : memref<128x128xbf16, #tpu.memory_space<vmem>>, vector<128x128xbf16>
    %cst_75 = arith.constant dense<0.000000e+00> : vector<64x128xf32>
    %74 = tpu.matmul %72, %73, %cst_75 {dimension_numbers = #tpu.dot_dimension_numbers<[1], [0], [0], [1], [0, 0, 1, 1], [], []>} : vector<64x128xbf16>, vector<128x128xbf16>, vector<64x128xf32> -> vector<64x128xf32>
    %c0_76 = arith.constant 0 : index
    %c0_77 = arith.constant 0 : index
    %75 = vector.load %arg13[%c0_76, %c0_77] : memref<1x128xf32, #tpu.memory_space<vmem>>, vector<1x128xf32>
    %76 = vector.broadcast %75 : vector<1x128xf32> to vector<64x128xf32>
    %77 = arith.addf %74, %76 : vector<64x128xf32>
    %cst_78 = arith.constant 0.000000e+00 : f32
    %78 = vector.broadcast %cst_78 : f32 to vector<64x128xf32>
    %79 = arith.maximumf %77, %78 : vector<64x128xf32>
    %80 = arith.truncf %79 : vector<64x128xf32> to vector<64x128xbf16>
    %c0_79 = arith.constant 0 : index
    %c0_80 = arith.constant 0 : index
    %81 = vector.load %arg14[%c0_79, %c0_80] : memref<128x128xbf16, #tpu.memory_space<vmem>>, vector<128x128xbf16>
    %cst_81 = arith.constant dense<0.000000e+00> : vector<64x128xf32>
    %82 = tpu.matmul %80, %81, %cst_81 {dimension_numbers = #tpu.dot_dimension_numbers<[1], [0], [0], [1], [0, 0, 1, 1], [], []>} : vector<64x128xbf16>, vector<128x128xbf16>, vector<64x128xf32> -> vector<64x128xf32>
    %c0_82 = arith.constant 0 : index
    %c0_83 = arith.constant 0 : index
    %83 = vector.load %arg15[%c0_82, %c0_83] : memref<1x128xf32, #tpu.memory_space<vmem>>, vector<1x128xf32>
    %84 = vector.broadcast %83 : vector<1x128xf32> to vector<64x128xf32>
    %85 = arith.addf %82, %84 : vector<64x128xf32>
    %cst_84 = arith.constant 0.000000e+00 : f32
    %86 = vector.broadcast %cst_84 : f32 to vector<64x128xf32>
    %87 = arith.maximumf %85, %86 : vector<64x128xf32>
    %88 = arith.truncf %71 : vector<64x128xf32> to vector<64x128xbf16>
    %c0_85 = arith.constant 0 : index
    %c0_86 = arith.constant 0 : index
    %89 = vector.load %arg16[%c0_85, %c0_86] : memref<128x128xbf16, #tpu.memory_space<vmem>>, vector<128x128xbf16>
    %cst_87 = arith.constant dense<0.000000e+00> : vector<64x128xf32>
    %90 = tpu.matmul %88, %89, %cst_87 {dimension_numbers = #tpu.dot_dimension_numbers<[1], [0], [0], [1], [0, 0, 1, 1], [], []>} : vector<64x128xbf16>, vector<128x128xbf16>, vector<64x128xf32> -> vector<64x128xf32>
    %c0_88 = arith.constant 0 : index
    %c0_89 = arith.constant 0 : index
    %91 = vector.load %arg17[%c0_88, %c0_89] : memref<1x128xf32, #tpu.memory_space<vmem>>, vector<1x128xf32>
    %92 = vector.broadcast %91 : vector<1x128xf32> to vector<64x128xf32>
    %93 = arith.addf %90, %92 : vector<64x128xf32>
    %94 = arith.addf %87, %93 : vector<64x128xf32>
    %cst_90 = arith.constant 0.000000e+00 : f32
    %95 = vector.broadcast %cst_90 : f32 to vector<64x128xf32>
    %96 = arith.maximumf %94, %95 : vector<64x128xf32>
    %97 = vector.shape_cast %96 : vector<64x128xf32> to vector<4x16x128xf32>
    %cst_91 = arith.constant dense<0.000000e+00> : vector<4x128xf32>
    %98 = vector.multi_reduction <add>, %97, %cst_91 [1] : vector<4x16x128xf32> to vector<4x128xf32>
    %cst_92 = arith.constant 6.250000e-02 : f32
    %99 = vector.broadcast %cst_92 : f32 to vector<4x128xf32>
    %100 = arith.mulf %98, %99 : vector<4x128xf32>
    %c0_93 = arith.constant 0 : index
    %c0_94 = arith.constant 0 : index
    %c0_95 = arith.constant 0 : index
    %101 = vector.load %arg18[%c0_93, %c0_94, %c0_95] : memref<1x4x128xf32, #tpu.memory_space<vmem>>, vector<1x4x128xf32>
    %102 = vector.shape_cast %101 : vector<1x4x128xf32> to vector<4x128xf32>
    %103 = vector.shape_cast %100 : vector<4x128xf32> to vector<1x4x128xf32>
    tpu.vector_store %arg18[%c0_93, %c0_94, %c0_95], %103 {strides = array<i32>} : memref<1x4x128xf32, #tpu.memory_space<vmem>>, vector<1x4x128xf32>,
    return
  }
  func.func @transform_0(%arg0: i32) -> (i32, i32, i32) {
    %c0_i32 = arith.constant 0 : i32
    %c0_i32_0 = arith.constant 0 : i32
    %c0_i32_1 = arith.constant 0 : i32
    return %arg0, %c0_i32, %c0_i32_0 : i32, i32, i32
  }
  func.func @transform_1(%arg0: i32) -> (i32, i32) {
    %c0_i32 = arith.constant 0 : i32
    %c0_i32_0 = arith.constant 0 : i32
    %c0_i32_1 = arith.constant 0 : i32
    return %c0_i32, %c0_i32_0 : i32, i32
  }
  func.func @transform_2(%arg0: i32) -> (i32, i32) {
    %c0_i32 = arith.constant 0 : i32
    %c0_i32_0 = arith.constant 0 : i32
    %c0_i32_1 = arith.constant 0 : i32
    return %c0_i32, %c0_i32_0 : i32, i32
  }
  func.func @transform_3(%arg0: i32) -> (i32, i32) {
    %c0_i32 = arith.constant 0 : i32
    %c0_i32_0 = arith.constant 0 : i32
    %c0_i32_1 = arith.constant 0 : i32
    return %c0_i32, %c0_i32_0 : i32, i32
  }
  func.func @transform_4(%arg0: i32) -> (i32, i32) {
    %c0_i32 = arith.constant 0 : i32
    %c0_i32_0 = arith.constant 0 : i32
    %c0_i32_1 = arith.constant 0 : i32
    return %c0_i32, %c0_i32_0 : i32, i32
  }
  func.func @transform_5(%arg0: i32) -> (i32, i32) {
    %c0_i32 = arith.constant 0 : i32
    %c0_i32_0 = arith.constant 0 : i32
    %c0_i32_1 = arith.constant 0 : i32
    return %c0_i32, %c0_i32_0 : i32, i32
  }
  func.func @transform_6(%arg0: i32) -> (i32, i32) {
    %c0_i32 = arith.constant 0 : i32
    %c0_i32_0 = arith.constant 0 : i32
    %c0_i32_1 = arith.constant 0 : i32
    return %c0_i32, %c0_i32_0 : i32, i32
  }
  func.func @transform_7(%arg0: i32) -> (i32, i32) {
    %c0_i32 = arith.constant 0 : i32
    %c0_i32_0 = arith.constant 0 : i32
    %c0_i32_1 = arith.constant 0 : i32
    return %c0_i32, %c0_i32_0 : i32, i32
  }
  func.func @transform_8(%arg0: i32) -> (i32, i32) {
    %c0_i32 = arith.constant 0 : i32
    %c0_i32_0 = arith.constant 0 : i32
    %c0_i32_1 = arith.constant 0 : i32
    return %c0_i32, %c0_i32_0 : i32, i32
  }
  func.func @transform_9(%arg0: i32) -> (i32, i32) {
    %c0_i32 = arith.constant 0 : i32
    %c0_i32_0 = arith.constant 0 : i32
    %c0_i32_1 = arith.constant 0 : i32
    return %c0_i32, %c0_i32_0 : i32, i32
  }
  func.func @transform_10(%arg0: i32) -> (i32, i32) {
    %c0_i32 = arith.constant 0 : i32
    %c0_i32_0 = arith.constant 0 : i32
    %c0_i32_1 = arith.constant 0 : i32
    return %c0_i32, %c0_i32_0 : i32, i32
  }
  func.func @transform_11(%arg0: i32) -> (i32, i32) {
    %c0_i32 = arith.constant 0 : i32
    %c0_i32_0 = arith.constant 0 : i32
    %c0_i32_1 = arith.constant 0 : i32
    return %c0_i32, %c0_i32_0 : i32, i32
  }
  func.func @transform_12(%arg0: i32) -> (i32, i32) {
    %c0_i32 = arith.constant 0 : i32
    %c0_i32_0 = arith.constant 0 : i32
    %c0_i32_1 = arith.constant 0 : i32
    return %c0_i32, %c0_i32_0 : i32, i32
  }
  func.func @transform_13(%arg0: i32) -> (i32, i32) {
    %c0_i32 = arith.constant 0 : i32
    %c0_i32_0 = arith.constant 0 : i32
    %c0_i32_1 = arith.constant 0 : i32
    return %c0_i32, %c0_i32_0 : i32, i32
  }
  func.func @transform_14(%arg0: i32) -> (i32, i32) {
    %c0_i32 = arith.constant 0 : i32
    %c0_i32_0 = arith.constant 0 : i32
    %c0_i32_1 = arith.constant 0 : i32
    return %c0_i32, %c0_i32_0 : i32, i32
  }
  func.func @transform_15(%arg0: i32) -> (i32, i32) {
    %c0_i32 = arith.constant 0 : i32
    %c0_i32_0 = arith.constant 0 : i32
    %c0_i32_1 = arith.constant 0 : i32
    return %c0_i32, %c0_i32_0 : i32, i32
  }
  func.func @transform_16(%arg0: i32) -> (i32, i32) {
    %c0_i32 = arith.constant 0 : i32
    %c0_i32_0 = arith.constant 0 : i32
    %c0_i32_1 = arith.constant 0 : i32
    return %c0_i32, %c0_i32_0 : i32, i32
  }
  func.func @transform_17(%arg0: i32) -> (i32, i32, i32) {
    %c0_i32 = arith.constant 0 : i32
    %c0_i32_0 = arith.constant 0 : i32
    %c0_i32_1 = arith.constant 0 : i32
    return %arg0, %c0_i32, %c0_i32_0 : i32, i32, i32
  }
}

</mosaic_0001>

<llo_original>
// kernel: tpu_custom_call.1
$region0: #{tpu_custom_call.1}
  #allocation0 [shape = 'u32[]', space=smem, size = 0x4, offset = 0x4, fixed_abs, tag = 'smem constant byte address 0x4 - core index']
  #allocation1 [shape = 'u32[144,128]{1,0:T(1,128)}', space=vmem, size = 0x12000, scoped, tag = 'internal scratch']
  #allocation2 [shape = 'bf16[4,20,128]{2,1,0:T(8,128)(2,1)}', space=vmem, size = 0x6000, scoped, tag = 'scratch operand']
  %s0 = inlined_call_operand.vmem [shape: bf16[8,16,4], index: 0, kind: input, shape index: {}]
  %s1 = inlined_call_operand.hbm [shape: bf16[256,128], index: 1, kind: input, shape index: {}]
  %s2 = inlined_call_operand.vmem [shape: f32[1,128], index: 2, kind: input, shape index: {}]
  %s3 = inlined_call_operand.hbm [shape: bf16[256,128], index: 3, kind: input, shape index: {}]
  %s4 = inlined_call_operand.hbm [shape: f32[1,128], index: 4, kind: input, shape index: {}]
  %s5 = inlined_call_operand.vmem [shape: bf16[128,128], index: 5, kind: input, shape index: {}]
  %s6 = inlined_call_operand.hbm [shape: f32[1,128], index: 6, kind: input, shape index: {}]
  %s7 = inlined_call_operand.hbm [shape: bf16[256,128], index: 7, kind: input, shape index: {}]
  %s8 = inlined_call_operand.hbm [shape: f32[1,128], index: 8, kind: input, shape index: {}]
  %s9 = inlined_call_operand.hbm [shape: bf16[256,128], index: 9, kind: input, shape index: {}]
  %s10 = inlined_call_operand.hbm [shape: f32[1,128], index: 10, kind: input, shape index: {}]
  %s11 = inlined_call_operand.hbm [shape: bf16[128,128], index: 11, kind: input, shape index: {}]
  %s12 = inlined_call_operand.hbm [shape: f32[1,128], index: 12, kind: input, shape index: {}]
  %s13 = inlined_call_operand.vmem [shape: bf16[128,128], index: 13, kind: input, shape index: {}]
  %s14 = inlined_call_operand.vmem [shape: f32[1,128], index: 14, kind: input, shape index: {}]
  %s15 = inlined_call_operand.hbm [shape: bf16[128,128], index: 15, kind: input, shape index: {}]
  %s16 = inlined_call_operand.vmem [shape: f32[1,128], index: 16, kind: input, shape index: {}]
  %s17 = inlined_call_operand.hbm [shape: f32[2,4,128], index: 17, kind: output, shape index: {}]
  %s18 = sld [smem:[#allocation0]]
  $region145: #{tpu_custom_call.1} parent=0
    _
  %s20 = ssub.s32 1, %s18
  %s21 = scalar_select 0, %s20, %s18
  $region1: #{tpu_custom_call.1} parent=0
    #allocation3 [shape = 'u8[65536]{0}', space=vmem, size = 0x10000, scoped, tag = 'input window, operand 1, single buffered']
    #allocation4 [shape = 's32[2]{0}', space=sflag, size = 0x8, scoped, tag = 'scoped memory for tpu_custom_call.1']
    #allocation5 [shape = 's32[2]{0}', space=sflag, size = 0x8, scoped, tag = 'scoped memory for tpu_custom_call.1']
    #allocation6 [shape = 'u8[65536]{0}', space=vmem, size = 0x10000, scoped, tag = 'input window, operand 3, single buffered']
    #allocation7 [shape = 's32[1]{0}', space=sflag, size = 0x4, scoped, tag = 'scoped memory for tpu_custom_call.1']
    #allocation8 [shape = 'u8[512]{0}', space=vmem, size = 0x400, scoped, tag = 'input window, operand 4, single buffered']
    #allocation9 [shape = 'u8[512]{0}', space=vmem, size = 0x400, scoped, tag = 'input window, operand 6, single buffered']
    #allocation10 [shape = 's32[1]{0}', space=sflag, size = 0x4, scoped, tag = 'scoped memory for tpu_custom_call.1']
    #allocation11 [shape = 'u8[65536]{0}', space=vmem, size = 0x10000, scoped, tag = 'input window, operand 7, single buffered']
    #allocation12 [shape = 'u8[512]{0}', space=vmem, size = 0x400, scoped, tag = 'input window, operand 8, single buffered']
    #allocation13 [shape = 's32[1]{0}', space=sflag, size = 0x4, scoped, tag = 'scoped memory for tpu_custom_call.1']
    #allocation14 [shape = 'u8[65536]{0}', space=vmem, size = 0x10000, scoped, tag = 'input window, operand 9, single buffered']
    #allocation15 [shape = 'u8[512]{0}', space=vmem, size = 0x400, scoped, tag = 'input window, operand 10, single buffered']
    #allocation16 [shape = 's32[1]{0}', space=sflag, size = 0x4, scoped, tag = 'scoped memory for tpu_custom_call.1']
    #allocation17 [shape = 'u8[32768]{0}', space=vmem, size = 0x8000, scoped, tag = 'input window, operand 11, single buffered']
    #allocation18 [shape = 'u8[512]{0}', space=vmem, size = 0x400, scoped, tag = 'input window, operand 12, single buffered']
    #allocation19 [shape = 's32[1]{0}', space=sflag, size = 0x4, scoped, tag = 'scoped memory for tpu_custom_call.1']
    #allocation20 [shape = 'u8[32768]{0}', space=vmem, size = 0x8000, scoped, tag = 'input window, operand 15, single buffered']
    #allocation21 [shape = 'u8[4096]{0}', space=vmem, size = 0x1000, scoped, tag = 'output window, operand 0']
    %22 = vsyncpa [#allocation4], 0
    %23 = vsyncpa [#allocation7], 0
    %24 = vsyncpa [#allocation10], 0
    %25 = vsyncpa [#allocation13], 0
    %26 = vsyncpa [#allocation16], 0
    %27 = vsyncpa [#allocation19], 0
    %28 = vsyncpa [#allocation5], 0
    %s29 = scalar_lea.sflag [#allocation5], 1
    %30 = vsyncpa %s29, 0
    loop: start=0, step=1, limit=4
    $region2: #{tpu_custom_call.1} parent=1 // loop_pre_header
      _
    $region3: #{tpu_custom_call.1} parent=1 // loop_header
      %s32 = sphi 0, %s36
      %p33 = scmp.ge.s32.totalorder %s32, 4
      %s42 = sphi 0, %s44
      %s45 = sphi 0, %s42
      %s46 = sphi 0, %s45
      %s62 = sphi 0, %s46
      %s66 = sphi 0, %s66
      %s68 = sphi 0, %s66
      %s69 = sphi 0, %s68
      %s83 = sphi 0, %s69
      %s87 = sphi 0, %s87
      %s89 = sphi 0, %s87
      %s90 = sphi 0, %s89
      %s104 = sphi 0, %s90
      %s108 = sphi 0, %s108
      %s110 = sphi 0, %s108
      %s111 = sphi 0, %s110
      %s125 = sphi 0, %s111
      %s129 = sphi 0, %s129
      %s131 = sphi 0, %s129
      %s132 = sphi 0, %s131
      %s146 = sphi 0, %s132
      %s150 = sphi 0, %s150
      %s152 = sphi 0, %s150
      %s153 = sphi 0, %s152
      %s167 = sphi 0, %s153
      %s171 = sphi 0, %s171
      %s173 = sphi 0, %s171
      %s174 = sphi 0, %s173
      %s188 = sphi 0, %s174
      %s192 = sphi 0, %s192
      %s194 = sphi 0, %s192
      %s195 = sphi 0, %s194
      %s209 = sphi 0, %s195
      %s213 = sphi 0, %s213
      %s215 = sphi 0, %s213
      %s216 = sphi 0, %s215
      %s230 = sphi 0, %s216
      %s234 = sphi 0, %s234
      %s236 = sphi 0, %s234
      %s237 = sphi 0, %s236
      %s251 = sphi 0, %s237
      %s255 = sphi 0, %s255
      %s257 = sphi 0, %s255
      %s258 = sphi 0, %s257
      %s272 = sphi 0, %s258
      %s276 = sphi 0, %s276
      %s278 = sphi 0, %s276
      %s279 = sphi 0, %s278
      %s293 = sphi 0, %s279
      %s297 = sphi 0, %s297
      %s299 = sphi 0, %s297
      %s300 = sphi 0, %s299
      %s314 = sphi 0, %s300
      %s318 = sphi 0, %s318
      %s320 = sphi 0, %s318
      %s321 = sphi 0, %s320
      %s335 = sphi 0, %s321
      %s339 = sphi 0, %s339
      %s341 = sphi 0, %s339
      %s342 = sphi 0, %s341
      %s356 = sphi 0, %s342
      %s360 = sphi 0, %s360
      %s362 = sphi 0, %s360
      %s363 = sphi 0, %s362
      %s377 = sphi 0, %s363
      %s381 = sphi 0, %s381
      %s383 = sphi 0, %s381
      %s384 = sphi 0, %s383
      %s398 = sphi 0, %s384
      %s404 = sphi 0, %s406
      %s407 = sphi 0, %s404
      %s408 = sphi 0, %s407
      %s424 = sphi 0, %s408
    $region4: #{tpu_custom_call.1} parent=1 // loop_header_branch
      %35 = sbr.rel (%p33) target = $region8
    $region5: #{tpu_custom_call.1} parent=1 // loop_body
      %s37 = ssub.s32 %s32, 1
      %s38 = ssub.s32 %s32, 2
      %s39 = sadd.s32 %s32, 1
      %s40 = ssub.s32 %s32, %s39
      %p41 = scmp.eq.s32.totalorder %s40, 0
      %s43 = sadd.s32 %s42, 1
      %s44 = scalar_select %p41, %s42, %s43
      %p47 = pneg %p41
      %p48 = scmp.eq.s32.totalorder %s32, 1
      %p49 = por %p47, %p48
      %p50 = scmp.ne.s32.totalorder %s42, %s45
      %p51 = scmp.eq.s32.totalorder %s32, 0
      %p52 = por %p50, %p51
      %p53 = scmp.ne.s32.totalorder %s42, %s45
      %p54 = scmp.eq.s32.totalorder %s37, 1
      %p55 = por %p53, %p54
      %p56 = scmp.ne.s32.totalorder %s45, %s46
      %p57 = scmp.eq.s32.totalorder %s37, 0
      %p58 = por %p56, %p57
      %p59 = scmp.ne.s32.totalorder %s45, %s46
      %p60 = scmp.eq.s32.totalorder %s38, 1
      %p61 = por %p59, %p60
      %p63 = scmp.ne.s32.totalorder %s46, %s62
      %p64 = scmp.eq.s32.totalorder %s38, 0
      %p65 = por %p63, %p64
      %s67 = sadd.s32 %s66, 1
      %p70 = scmp.eq.s32.totalorder %s32, 1
      %p71 = scmp.ne.s32.totalorder %s66, %s68
      %p72 = scmp.eq.s32.totalorder %s32, 0
      %p73 = por %p71, %p72
      %p74 = scmp.ne.s32.totalorder %s66, %s68
      %p75 = scmp.eq.s32.totalorder %s37, 1
      %p76 = por %p74, %p75
      %p77 = scmp.ne.s32.totalorder %s68, %s69
      %p78 = scmp.eq.s32.totalorder %s37, 0
      %p79 = por %p77, %p78
      %p80 = scmp.ne.s32.totalorder %s68, %s69
      %p81 = scmp.eq.s32.totalorder %s38, 1
      %p82 = por %p80, %p81
      %p84 = scmp.ne.s32.totalorder %s69, %s83
      %p85 = scmp.eq.s32.totalorder %s38, 0
      %p86 = por %p84, %p85
      %s88 = sadd.s32 %s87, 1
      %p91 = scmp.eq.s32.totalorder %s32, 1
      %p92 = scmp.ne.s32.totalorder %s87, %s89
      %p93 = scmp.eq.s32.totalorder %s32, 0
      %p94 = por %p92, %p93
      %p95 = scmp.ne.s32.totalorder %s87, %s89
      %p96 = scmp.eq.s32.totalorder %s37, 1
      %p97 = por %p95, %p96
      %p98 = scmp.ne.s32.totalorder %s89, %s90
      %p99 = scmp.eq.s32.totalorder %s37, 0
      %p100 = por %p98, %p99
      %p101 = scmp.ne.s32.totalorder %s89, %s90
      %p102 = scmp.eq.s32.totalorder %s38, 1
      %p103 = por %p101, %p102
      %p105 = scmp.ne.s32.totalorder %s90, %s104
      %p106 = scmp.eq.s32.totalorder %s38, 0
      %p107 = por %p105, %p106
      %s109 = sadd.s32 %s108, 1
      %p112 = scmp.eq.s32.totalorder %s32, 1
      %p113 = scmp.ne.s32.totalorder %s108, %s110
      %p114 = scmp.eq.s32.totalorder %s32, 0
      %p115 = por %p113, %p114
      %p116 = scmp.ne.s32.totalorder %s108, %s110
      %p117 = scmp.eq.s32.totalorder %s37, 1
      %p118 = por %p116, %p117
      %p119 = scmp.ne.s32.totalorder %s110, %s111
      %p120 = scmp.eq.s32.totalorder %s37, 0
      %p121 = por %p119, %p120
      %p122 = scmp.ne.s32.totalorder %s110, %s111
      %p123 = scmp.eq.s32.totalorder %s38, 1
      %p124 = por %p122, %p123
      %p126 = scmp.ne.s32.totalorder %s111, %s125
      %p127 = scmp.eq.s32.totalorder %s38, 0
      %p128 = por %p126, %p127
      %s130 = sadd.s32 %s129, 1
      %p133 = scmp.eq.s32.totalorder %s32, 1
      %p134 = scmp.ne.s32.totalorder %s129, %s131
      %p135 = scmp.eq.s32.totalorder %s32, 0
      %p136 = por %p134, %p135
      %p137 = scmp.ne.s32.totalorder %s129, %s131
      %p138 = scmp.eq.s32.totalorder %s37, 1
      %p139 = por %p137, %p138
      %p140 = scmp.ne.s32.totalorder %s131, %s132
      %p141 = scmp.eq.s32.totalorder %s37, 0
      %p142 = por %p140, %p141
      %p143 = scmp.ne.s32.totalorder %s131, %s132
      %p144 = scmp.eq.s32.totalorder %s38, 1
      %p145 = por %p143, %p144
      %p147 = scmp.ne.s32.totalorder %s132, %s146
      %p148 = scmp.eq.s32.totalorder %s38, 0
      %p149 = por %p147, %p148
      %s151 = sadd.s32 %s150, 1
      %p154 = scmp.eq.s32.totalorder %s32, 1
      %p155 = scmp.ne.s32.totalorder %s150, %s152
      %p156 = scmp.eq.s32.totalorder %s32, 0
      %p157 = por %p155, %p156
      %p158 = scmp.ne.s32.totalorder %s150, %s152
      %p159 = scmp.eq.s32.totalorder %s37, 1
      %p160 = por %p158, %p159
      %p161 = scmp.ne.s32.totalorder %s152, %s153
      %p162 = scmp.eq.s32.totalorder %s37, 0
      %p163 = por %p161, %p162
      %p164 = scmp.ne.s32.totalorder %s152, %s153
      %p165 = scmp.eq.s32.totalorder %s38, 1
      %p166 = por %p164, %p165
      %p168 = scmp.ne.s32.totalorder %s153, %s167
      %p169 = scmp.eq.s32.totalorder %s38, 0
      %p170 = por %p168, %p169
      %s172 = sadd.s32 %s171, 1
      %p175 = scmp.eq.s32.totalorder %s32, 1
      %p176 = scmp.ne.s32.totalorder %s171, %s173
      %p177 = scmp.eq.s32.totalorder %s32, 0
      %p178 = por %p176, %p177
      %p179 = scmp.ne.s32.totalorder %s171, %s173
      %p180 = scmp.eq.s32.totalorder %s37, 1
      %p181 = por %p179, %p180
      %p182 = scmp.ne.s32.totalorder %s173, %s174
      %p183 = scmp.eq.s32.totalorder %s37, 0
      %p184 = por %p182, %p183
      %p185 = scmp.ne.s32.totalorder %s173, %s174
      %p186 = scmp.eq.s32.totalorder %s38, 1
      %p187 = por %p185, %p186
      %p189 = scmp.ne.s32.totalorder %s174, %s188
      %p190 = scmp.eq.s32.totalorder %s38, 0
      %p191 = por %p189, %p190
      %s193 = sadd.s32 %s192, 1
      %p196 = scmp.eq.s32.totalorder %s32, 1
      %p197 = scmp.ne.s32.totalorder %s192, %s194
      %p198 = scmp.eq.s32.totalorder %s32, 0
      %p199 = por %p197, %p198
      %p200 = scmp.ne.s32.totalorder %s192, %s194
      %p201 = scmp.eq.s32.totalorder %s37, 1
      %p202 = por %p200, %p201
      %p203 = scmp.ne.s32.totalorder %s194, %s195
      %p204 = scmp.eq.s32.totalorder %s37, 0
      %p205 = por %p203, %p204
      %p206 = scmp.ne.s32.totalorder %s194, %s195
      %p207 = scmp.eq.s32.totalorder %s38, 1
      %p208 = por %p206, %p207
      %p210 = scmp.ne.s32.totalorder %s195, %s209
      %p211 = scmp.eq.s32.totalorder %s38, 0
      %p212 = por %p210, %p211
      %s214 = sadd.s32 %s213, 1
      %p217 = scmp.eq.s32.totalorder %s32, 1
      %p218 = scmp.ne.s32.totalorder %s213, %s215
      %p219 = scmp.eq.s32.totalorder %s32, 0
      %p220 = por %p218, %p219
      %p221 = scmp.ne.s32.totalorder %s213, %s215
      %p222 = scmp.eq.s32.totalorder %s37, 1
      %p223 = por %p221, %p222
      %p224 = scmp.ne.s32.totalorder %s215, %s216
      %p225 = scmp.eq.s32.totalorder %s37, 0
      %p226 = por %p224, %p225
      %p227 = scmp.ne.s32.totalorder %s215, %s216
      %p228 = scmp.eq.s32.totalorder %s38, 1
      %p229 = por %p227, %p228
      %p231 = scmp.ne.s32.totalorder %s216, %s230
      %p232 = scmp.eq.s32.totalorder %s38, 0
      %p233 = por %p231, %p232
      %s235 = sadd.s32 %s234, 1
      %p238 = scmp.eq.s32.totalorder %s32, 1
      %p239 = scmp.ne.s32.totalorder %s234, %s236
      %p240 = scmp.eq.s32.totalorder %s32, 0
      %p241 = por %p239, %p240
      %p242 = scmp.ne.s32.totalorder %s234, %s236
      %p243 = scmp.eq.s32.totalorder %s37, 1
      %p244 = por %p242, %p243
      %p245 = scmp.ne.s32.totalorder %s236, %s237
      %p246 = scmp.eq.s32.totalorder %s37, 0
      %p247 = por %p245, %p246
      %p248 = scmp.ne.s32.totalorder %s236, %s237
      %p249 = scmp.eq.s32.totalorder %s38, 1
      %p250 = por %p248, %p249
      %p252 = scmp.ne.s32.totalorder %s237, %s251
      %p253 = scmp.eq.s32.totalorder %s38, 0
      %p254 = por %p252, %p253
      %s256 = sadd.s32 %s255, 1
      %p259 = scmp.eq.s32.totalorder %s32, 1
      %p260 = scmp.ne.s32.totalorder %s255, %s257
      %p261 = scmp.eq.s32.totalorder %s32, 0
      %p262 = por %p260, %p261
      %p263 = scmp.ne.s32.totalorder %s255, %s257
      %p264 = scmp.eq.s32.totalorder %s37, 1
      %p265 = por %p263, %p264
      %p266 = scmp.ne.s32.totalorder %s257, %s258
      %p267 = scmp.eq.s32.totalorder %s37, 0
      %p268 = por %p266, %p267
      %p269 = scmp.ne.s32.totalorder %s257, %s258
      %p270 = scmp.eq.s32.totalorder %s38, 1
      %p271 = por %p269, %p270
      %p273 = scmp.ne.s32.totalorder %s258, %s272
      %p274 = scmp.eq.s32.totalorder %s38, 0
      %p275 = por %p273, %p274
      %s277 = sadd.s32 %s276, 1
      %p280 = scmp.eq.s32.totalorder %s32, 1
      %p281 = scmp.ne.s32.totalorder %s276, %s278
      %p282 = scmp.eq.s32.totalorder %s32, 0
      %p283 = por %p281, %p282
      %p284 = scmp.ne.s32.totalorder %s276, %s278
      %p285 = scmp.eq.s32.totalorder %s37, 1
      %p286 = por %p284, %p285
      %p287 = scmp.ne.s32.totalorder %s278, %s279
      %p288 = scmp.eq.s32.totalorder %s37, 0
      %p289 = por %p287, %p288
      %p290 = scmp.ne.s32.totalorder %s278, %s279
      %p291 = scmp.eq.s32.totalorder %s38, 1
      %p292 = por %p290, %p291
      %p294 = scmp.ne.s32.totalorder %s279, %s293
      %p295 = scmp.eq.s32.totalorder %s38, 0
      %p296 = por %p294, %p295
      %s298 = sadd.s32 %s297, 1
      %p301 = scmp.eq.s32.totalorder %s32, 1
      %p302 = scmp.ne.s32.totalorder %s297, %s299
      %p303 = scmp.eq.s32.totalorder %s32, 0
      %p304 = por %p302, %p303
      %p305 = scmp.ne.s32.totalorder %s297, %s299
      %p306 = scmp.eq.s32.totalorder %s37, 1
      %p307 = por %p305, %p306
      %p308 = scmp.ne.s32.totalorder %s299, %s300
      %p309 = scmp.eq.s32.totalorder %s37, 0
      %p310 = por %p308, %p309
      %p311 = scmp.ne.s32.totalorder %s299, %s300
      %p312 = scmp.eq.s32.totalorder %s38, 1
      %p313 = por %p311, %p312
      %p315 = scmp.ne.s32.totalorder %s300, %s314
      %p316 = scmp.eq.s32.totalorder %s38, 0
      %p317 = por %p315, %p316
      %s319 = sadd.s32 %s318, 1
      %p322 = scmp.eq.s32.totalorder %s32, 1
      %p323 = scmp.ne.s32.totalorder %s318, %s320
      %p324 = scmp.eq.s32.totalorder %s32, 0
      %p325 = por %p323, %p324
      %p326 = scmp.ne.s32.totalorder %s318, %s320
      %p327 = scmp.eq.s32.totalorder %s37, 1
      %p328 = por %p326, %p327
      %p329 = scmp.ne.s32.totalorder %s320, %s321
      %p330 = scmp.eq.s32.totalorder %s37, 0
      %p331 = por %p329, %p330
      %p332 = scmp.ne.s32.totalorder %s320, %s321
      %p333 = scmp.eq.s32.totalorder %s38, 1
      %p334 = por %p332, %p333
      %p336 = scmp.ne.s32.totalorder %s321, %s335
      %p337 = scmp.eq.s32.totalorder %s38, 0
      %p338 = por %p336, %p337
      %s340 = sadd.s32 %s339, 1
      %p343 = scmp.eq.s32.totalorder %s32, 1
      %p344 = scmp.ne.s32.totalorder %s339, %s341
      %p345 = scmp.eq.s32.totalorder %s32, 0
      %p346 = por %p344, %p345
      %p347 = scmp.ne.s32.totalorder %s339, %s341
      %p348 = scmp.eq.s32.totalorder %s37, 1
      %p349 = por %p347, %p348
      %p350 = scmp.ne.s32.totalorder %s341, %s342
      %p351 = scmp.eq.s32.totalorder %s37, 0
      %p352 = por %p350, %p351
      %p353 = scmp.ne.s32.totalorder %s341, %s342
      %p354 = scmp.eq.s32.totalorder %s38, 1
      %p355 = por %p353, %p354
      %p357 = scmp.ne.s32.totalorder %s342, %s356
      %p358 = scmp.eq.s32.totalorder %s38, 0
      %p359 = por %p357, %p358
      %s361 = sadd.s32 %s360, 1
      %p364 = scmp.eq.s32.totalorder %s32, 1
      %p365 = scmp.ne.s32.totalorder %s360, %s362
      %p366 = scmp.eq.s32.totalorder %s32, 0
      %p367 = por %p365, %p366
      %p368 = scmp.ne.s32.totalorder %s360, %s362
      %p369 = scmp.eq.s32.totalorder %s37, 1
      %p370 = por %p368, %p369
      %p371 = scmp.ne.s32.totalorder %s362, %s363
      %p372 = scmp.eq.s32.totalorder %s37, 0
      %p373 = por %p371, %p372
      %p374 = scmp.ne.s32.totalorder %s362, %s363
      %p375 = scmp.eq.s32.totalorder %s38, 1
      %p376 = por %p374, %p375
      %p378 = scmp.ne.s32.totalorder %s363, %s377
      %p379 = scmp.eq.s32.totalorder %s38, 0
      %p380 = por %p378, %p379
      %s382 = sadd.s32 %s381, 1
      %p385 = scmp.eq.s32.totalorder %s32, 1
      %p386 = scmp.ne.s32.totalorder %s381, %s383
      %p387 = scmp.eq.s32.totalorder %s32, 0
      %p388 = por %p386, %p387
      %p389 = scmp.ne.s32.totalorder %s381, %s383
      %p390 = scmp.eq.s32.totalorder %s37, 1
      %p391 = por %p389, %p390
      %p392 = scmp.ne.s32.totalorder %s383, %s384
      %p393 = scmp.eq.s32.totalorder %s37, 0
      %p394 = por %p392, %p393
      %p395 = scmp.ne.s32.totalorder %s383, %s384
      %p396 = scmp.eq.s32.totalorder %s38, 1
      %p397 = por %p395, %p396
      %p399 = scmp.ne.s32.totalorder %s384, %s398
      %p400 = scmp.eq.s32.totalorder %s38, 0
      %p401 = por %p399, %p400
      %s402 = ssub.s32 %s32, %s39
      %p403 = scmp.eq.s32.totalorder %s402, 0
      %s405 = sadd.s32 %s404, 1
      %s406 = scalar_select %p403, %s404, %s405
      %p409 = pneg %p403
      %p410 = scmp.eq.s32.totalorder %s32, 1
      %p411 = por %p409, %p410
      %p412 = scmp.ne.s32.totalorder %s404, %s407
      %p413 = scmp.eq.s32.totalorder %s32, 0
      %p414 = por %p412, %p413
      %p415 = scmp.ne.s32.totalorder %s404, %s407
      %p416 = scmp.eq.s32.totalorder %s37, 1
      %p417 = por %p415, %p416
      %p418 = scmp.ne.s32.totalorder %s407, %s408
      %p419 = scmp.eq.s32.totalorder %s37, 0
      %p420 = por %p418, %p419
      %p421 = scmp.ne.s32.totalorder %s407, %s408
      %p422 = scmp.eq.s32.totalorder %s38, 1
      %p423 = por %p421, %p422
      %p425 = scmp.ne.s32.totalorder %s408, %s424
      %p426 = scmp.eq.s32.totalorder %s38, 0
      %p427 = por %p425, %p426
      %p428 = scmp.le.s32.totalorder 1, %s32
      %p429 = scmp.lt.s32.totalorder %s32, 3
      %p430 = pnand %p428, %p429
      %p431 = pneg %p430
      // Predicated region
      $region9: #{tpu_custom_call.1} parent=5 // pred_check
        _
      $region10: #{tpu_custom_call.1} parent=5 // pred_check_branch
        %433 = sbr.rel (%p430) target = $region12
      $region11: #{tpu_custom_call.1} parent=5 // pred_region
        %s434 = ssub.s32 %s32, 1
        // Predicated region
        $region13: #{tpu_custom_call.1} parent=11 // pred_check
          %p435 = pneg %p79
        $region14: #{tpu_custom_call.1} parent=11 // pred_check_branch
          %437 = sbr.rel (%p435) target = $region16
        $region15: #{tpu_custom_call.1} parent=11 // pred_region
          %s439 = ssub.s32 2048, 2048
          %440 = vsyncadd [#allocation4], %s439
          %s441 = sshll.u32 [#allocation3], 4
          %s442 = int_to_ptr.vmem [resolvable:$true] %s441
          %447 = dma.hbm_to_vmem [thread:$0]  %s1, 2048, %s442, [#allocation4], 64, 64, 4
        $region16: #{tpu_custom_call.1} parent=11 // pred_fallthru
          _
        // Predicated region
        $region17: #{tpu_custom_call.1} parent=11 // pred_check
          %p448 = pneg %p100
        $region18: #{tpu_custom_call.1} parent=11 // pred_check_branch
          %450 = sbr.rel (%p448) target = $region20
        $region19: #{tpu_custom_call.1} parent=11 // pred_region
          _
        $region20: #{tpu_custom_call.1} parent=11 // pred_fallthru
          _
        // Predicated region
        $region21: #{tpu_custom_call.1} parent=11 // pred_check
          %p451 = pneg %p121
        $region22: #{tpu_custom_call.1} parent=11 // pred_check_branch
          %453 = sbr.rel (%p451) target = $region24
        $region23: #{tpu_custom_call.1} parent=11 // pred_region
          %s455 = ssub.s32 2048, 2048
          %456 = vsyncadd [#allocation7], %s455
          %s457 = sshll.u32 [#allocation6], 4
          %s458 = int_to_ptr.vmem [resolvable:$true] %s457
          %463 = dma.hbm_to_vmem [thread:$0]  %s3, 2048, %s458, [#allocation7], 64, 64, 4
        $region24: #{tpu_custom_call.1} parent=11 // pred_fallthru
          _
        // Predicated region
        $region25: #{tpu_custom_call.1} parent=11 // pred_check
          %p464 = pneg %p142
        $region26: #{tpu_custom_call.1} parent=11 // pred_check_branch
          %466 = sbr.rel (%p464) target = $region28
        $region27: #{tpu_custom_call.1} parent=11 // pred_region
          %s468 = ssub.s32 16, 16
          %469 = vsyncadd [#allocation7], %s468
          %s471 = sshll.u32 [#allocation8], 4
          %s472 = int_to_ptr.vmem [resolvable:$true] %s471
          %474 = dma.hbm_to_vmem [thread:$0]  %s4, 16, %s472, [#allocation7]
        $region28: #{tpu_custom_call.1} parent=11 // pred_fallthru
          _
        // Predicated region
        $region29: #{tpu_custom_call.1} parent=11 // pred_check
          %p475 = pneg %p163
        $region30: #{tpu_custom_call.1} parent=11 // pred_check_branch
          %477 = sbr.rel (%p475) target = $region32
        $region31: #{tpu_custom_call.1} parent=11 // pred_region
          _
        $region32: #{tpu_custom_call.1} parent=11 // pred_fallthru
          _
        // Predicated region
        $region33: #{tpu_custom_call.1} parent=11 // pred_check
          %p478 = pneg %p184
        $region34: #{tpu_custom_call.1} parent=11 // pred_check_branch
          %480 = sbr.rel (%p478) target = $region36
        $region35: #{tpu_custom_call.1} parent=11 // pred_region
          %s482 = ssub.s32 16, 16
          %483 = vsyncadd [#allocation10], %s482
          %s485 = sshll.u32 [#allocation9], 4
          %s486 = int_to_ptr.vmem [resolvable:$true] %s485
          %488 = dma.hbm_to_vmem [thread:$0]  %s6, 16, %s486, [#allocation10]
        $region36: #{tpu_custom_call.1} parent=11 // pred_fallthru
          _
        // Predicated region
        $region37: #{tpu_custom_call.1} parent=11 // pred_check
          %p489 = pneg %p205
        $region38: #{tpu_custom_call.1} parent=11 // pred_check_branch
          %491 = sbr.rel (%p489) target = $region40
        $region39: #{tpu_custom_call.1} parent=11 // pred_region
          %s493 = ssub.s32 2048, 2048
          %494 = vsyncadd [#allocation10], %s493
          %s495 = sshll.u32 [#allocation11], 4
          %s496 = int_to_ptr.vmem [resolvable:$true] %s495
          %501 = dma.hbm_to_vmem [thread:$0]  %s7, 2048, %s496, [#allocation10], 64, 64, 4
        $region40: #{tpu_custom_call.1} parent=11 // pred_fallthru
          _
        // Predicated region
        $region41: #{tpu_custom_call.1} parent=11 // pred_check
          %p502 = pneg %p226
        $region42: #{tpu_custom_call.1} parent=11 // pred_check_branch
          %504 = sbr.rel (%p502) target = $region44
        $region43: #{tpu_custom_call.1} parent=11 // pred_region
          %s506 = ssub.s32 16, 16
          %507 = vsyncadd [#allocation13], %s506
          %s509 = sshll.u32 [#allocation12], 4
          %s510 = int_to_ptr.vmem [resolvable:$true] %s509
          %512 = dma.hbm_to_vmem [thread:$0]  %s8, 16, %s510, [#allocation13]
        $region44: #{tpu_custom_call.1} parent=11 // pred_fallthru
          _
        // Predicated region
        $region45: #{tpu_custom_call.1} parent=11 // pred_check
          %p513 = pneg %p247
        $region46: #{tpu_custom_call.1} parent=11 // pred_check_branch
          %515 = sbr.rel (%p513) target = $region48
        $region47: #{tpu_custom_call.1} parent=11 // pred_region
          %s517 = ssub.s32 2048, 2048
          %518 = vsyncadd [#allocation13], %s517
          %s519 = sshll.u32 [#allocation14], 4
          %s520 = int_to_ptr.vmem [resolvable:$true] %s519
          %525 = dma.hbm_to_vmem [thread:$0]  %s9, 2048, %s520, [#allocation13], 64, 64, 4
        $region48: #{tpu_custom_call.1} parent=11 // pred_fallthru
          _
        // Predicated region
        $region49: #{tpu_custom_call.1} parent=11 // pred_check
          %p526 = pneg %p268
        $region50: #{tpu_custom_call.1} parent=11 // pred_check_branch
          %528 = sbr.rel (%p526) target = $region52
        $region51: #{tpu_custom_call.1} parent=11 // pred_region
          %s530 = ssub.s32 16, 16
          %531 = vsyncadd [#allocation16], %s530
          %s533 = sshll.u32 [#allocation15], 4
          %s534 = int_to_ptr.vmem [resolvable:$true] %s533
          %536 = dma.hbm_to_vmem [thread:$0]  %s10, 16, %s534, [#allocation16]
        $region52: #{tpu_custom_call.1} parent=11 // pred_fallthru
          _
        // Predicated region
        $region53: #{tpu_custom_call.1} parent=11 // pred_check
          %p537 = pneg %p289
        $region54: #{tpu_custom_call.1} parent=11 // pred_check_branch
          %539 = sbr.rel (%p537) target = $region56
        $region55: #{tpu_custom_call.1} parent=11 // pred_region
          %s541 = ssub.s32 1024, 1024
          %542 = vsyncadd [#allocation16], %s541
          %s543 = sshll.u32 [#allocation17], 4
          %s544 = int_to_ptr.vmem [resolvable:$true] %s543
          %549 = dma.hbm_to_vmem [thread:$0]  %s11, 1024, %s544, [#allocation16], 64, 64, 4
        $region56: #{tpu_custom_call.1} parent=11 // pred_fallthru
          _
        // Predicated region
        $region57: #{tpu_custom_call.1} parent=11 // pred_check
          %p550 = pneg %p310
        $region58: #{tpu_custom_call.1} parent=11 // pred_check_branch
          %552 = sbr.rel (%p550) target = $region60
        $region59: #{tpu_custom_call.1} parent=11 // pred_region
          %s554 = ssub.s32 16, 16
          %555 = vsyncadd [#allocation19], %s554
          %s557 = sshll.u32 [#allocation18], 4
          %s558 = int_to_ptr.vmem [resolvable:$true] %s557
          %560 = dma.hbm_to_vmem [thread:$0]  %s12, 16, %s558, [#allocation19]
        $region60: #{tpu_custom_call.1} parent=11 // pred_fallthru
          _
        // Predicated region
        $region61: #{tpu_custom_call.1} parent=11 // pred_check
          %p561 = pneg %p331
        $region62: #{tpu_custom_call.1} parent=11 // pred_check_branch
          %563 = sbr.rel (%p561) target = $region64
        $region63: #{tpu_custom_call.1} parent=11 // pred_region
          _
        $region64: #{tpu_custom_call.1} parent=11 // pred_fallthru
          _
        // Predicated region
        $region65: #{tpu_custom_call.1} parent=11 // pred_check
          %p564 = pneg %p352
        $region66: #{tpu_custom_call.1} parent=11 // pred_check_branch
          %566 = sbr.rel (%p564) target = $region68
        $region67: #{tpu_custom_call.1} parent=11 // pred_region
          _
        $region68: #{tpu_custom_call.1} parent=11 // pred_fallthru
          _
        // Predicated region
        $region69: #{tpu_custom_call.1} parent=11 // pred_check
          %p567 = pneg %p373
        $region70: #{tpu_custom_call.1} parent=11 // pred_check_branch
          %569 = sbr.rel (%p567) target = $region72
        $region71: #{tpu_custom_call.1} parent=11 // pred_region
          %s571 = ssub.s32 1024, 1024
          %572 = vsyncadd [#allocation19], %s571
          %s573 = sshll.u32 [#allocation20], 4
          %s574 = int_to_ptr.vmem [resolvable:$true] %s573
          %579 = dma.hbm_to_vmem [thread:$0]  %s15, 1024, %s574, [#allocation19], 64, 64, 4
        $region72: #{tpu_custom_call.1} parent=11 // pred_fallthru
          _
        // Predicated region
        $region73: #{tpu_custom_call.1} parent=11 // pred_check
          %p580 = pneg %p394
        $region74: #{tpu_custom_call.1} parent=11 // pred_check_branch
          %582 = sbr.rel (%p580) target = $region76
        $region75: #{tpu_custom_call.1} parent=11 // pred_region
          _
        $region76: #{tpu_custom_call.1} parent=11 // pred_fallthru
          _
      $region12: #{tpu_custom_call.1} parent=5 // pred_fallthru
        _
      %p583 = scmp.lt.s32.totalorder %s32, 2
      // Predicated region
      $region77: #{tpu_custom_call.1} parent=5 // pred_check
        %p584 = pneg %p583
      $region78: #{tpu_custom_call.1} parent=5 // pred_check_branch
        %586 = sbr.rel (%p584) target = $region80
      $region79: #{tpu_custom_call.1} parent=5 // pred_region
        // Predicated region
        $region81: #{tpu_custom_call.1} parent=79 // pred_check
          %p587 = pneg %p52
        $region82: #{tpu_custom_call.1} parent=79 // pred_check_branch
          %589 = sbr.rel (%p587) target = $region84
        $region83: #{tpu_custom_call.1} parent=79 // pred_region
          %s590 = smul.u32 4, %s32
          %p591 = scmp.lt.s32.totalorder %s590, 7
          %s592 = scalar_select %p591, %s590, 7
          %s593 = smul.addr %s592, 2
          %s594 = smul.addr %s593, 4
          %s595 = scalar_lea.vmem %s0, %s594
          %s596 = smul.u32 4, %s32
        $region84: #{tpu_custom_call.1} parent=79 // pred_fallthru
          _
      $region80: #{tpu_custom_call.1} parent=5 // pred_fallthru
        _
      %p597 = scmp.le.s32.totalorder 1, %s32
      %p598 = scmp.lt.s32.totalorder %s32, 3
      %p599 = pnand %p597, %p598
      %p600 = pneg %p599
      // Predicated region
      $region85: #{tpu_custom_call.1} parent=5 // pred_check
        _
      $region86: #{tpu_custom_call.1} parent=5 // pred_check_branch
        %602 = sbr.rel (%p599) target = $region88
      $region87: #{tpu_custom_call.1} parent=5 // pred_region
        %s603 = ssub.s32 %s32, 1
        // Predicated region
        $region89: #{tpu_custom_call.1} parent=87 // pred_check
          %p604 = pneg %p79
        $region90: #{tpu_custom_call.1} parent=87 // pred_check_branch
          %606 = sbr.rel (%p604) target = $region92
        $region91: #{tpu_custom_call.1} parent=87 // pred_region
          %607 = dma.done [#allocation4], 2048
        $region92: #{tpu_custom_call.1} parent=87 // pred_fallthru
          _
        // Predicated region
        $region93: #{tpu_custom_call.1} parent=87 // pred_check
          %p608 = pneg %p121
        $region94: #{tpu_custom_call.1} parent=87 // pred_check_branch
          %610 = sbr.rel (%p608) target = $region96
        $region95: #{tpu_custom_call.1} parent=87 // pred_region
          %611 = dma.done [#allocation7], 2048
        $region96: #{tpu_custom_call.1} parent=87 // pred_fallthru
          _
        // Predicated region
        $region97: #{tpu_custom_call.1} parent=87 // pred_check
          %p612 = pneg %p142
        $region98: #{tpu_custom_call.1} parent=87 // pred_check_branch
          %614 = sbr.rel (%p612) target = $region100
        $region99: #{tpu_custom_call.1} parent=87 // pred_region
          %615 = dma.done [#allocation7], 16
        $region100: #{tpu_custom_call.1} parent=87 // pred_fallthru
          _
        // Predicated region
        $region101: #{tpu_custom_call.1} parent=87 // pred_check
          %p616 = pneg %p184
        $region102: #{tpu_custom_call.1} parent=87 // pred_check_branch
          %618 = sbr.rel (%p616) target = $region104
        $region103: #{tpu_custom_call.1} parent=87 // pred_region
          %619 = dma.done [#allocation10], 16
        $region104: #{tpu_custom_call.1} parent=87 // pred_fallthru
          _
        // Predicated region
        $region105: #{tpu_custom_call.1} parent=87 // pred_check
          %p620 = pneg %p205
        $region106: #{tpu_custom_call.1} parent=87 // pred_check_branch
          %622 = sbr.rel (%p620) target = $region108
        $region107: #{tpu_custom_call.1} parent=87 // pred_region
          %623 = dma.done [#allocation10], 2048
        $region108: #{tpu_custom_call.1} parent=87 // pred_fallthru
          _
        // Predicated region
        $region109: #{tpu_custom_call.1} parent=87 // pred_check
          %p624 = pneg %p226
        $region110: #{tpu_custom_call.1} parent=87 // pred_check_branch
          %626 = sbr.rel (%p624) target = $region112
        $region111: #{tpu_custom_call.1} parent=87 // pred_region
          %627 = dma.done [#allocation13], 16
        $region112: #{tpu_custom_call.1} parent=87 // pred_fallthru
          _
        // Predicated region
        $region113: #{tpu_custom_call.1} parent=87 // pred_check
          %p628 = pneg %p247
        $region114: #{tpu_custom_call.1} parent=87 // pred_check_branch
          %630 = sbr.rel (%p628) target = $region116
        $region115: #{tpu_custom_call.1} parent=87 // pred_region
          %631 = dma.done [#allocation13], 2048
        $region116: #{tpu_custom_call.1} parent=87 // pred_fallthru
          _
        // Predicated region
        $region117: #{tpu_custom_call.1} parent=87 // pred_check
          %p632 = pneg %p268
        $region118: #{tpu_custom_call.1} parent=87 // pred_check_branch
          %634 = sbr.rel (%p632) target = $region120
        $region119: #{tpu_custom_call.1} parent=87 // pred_region
          %635 = dma.done [#allocation16], 16
        $region120: #{tpu_custom_call.1} parent=87 // pred_fallthru
          _
        // Predicated region
        $region121: #{tpu_custom_call.1} parent=87 // pred_check
          %p636 = pneg %p289
        $region122: #{tpu_custom_call.1} parent=87 // pred_check_branch
          %638 = sbr.rel (%p636) target = $region124
        $region123: #{tpu_custom_call.1} parent=87 // pred_region
          %639 = dma.done [#allocation16], 1024
        $region124: #{tpu_custom_call.1} parent=87 // pred_fallthru
          _
        // Predicated region
        $region125: #{tpu_custom_call.1} parent=87 // pred_check
          %p640 = pneg %p310
        $region126: #{tpu_custom_call.1} parent=87 // pred_check_branch
          %642 = sbr.rel (%p640) target = $region128
        $region127: #{tpu_custom_call.1} parent=87 // pred_region
          %643 = dma.done [#allocation19], 16
        $region128: #{tpu_custom_call.1} parent=87 // pred_fallthru
          _
        // Predicated region
        $region129: #{tpu_custom_call.1} parent=87 // pred_check
          %p644 = pneg %p373
        $region130: #{tpu_custom_call.1} parent=87 // pred_check_branch
          %646 = sbr.rel (%p644) target = $region132
        $region131: #{tpu_custom_call.1} parent=87 // pred_region
          %647 = dma.done [#allocation19], 1024
        $region132: #{tpu_custom_call.1} parent=87 // pred_fallthru
          _
        %s648 = smul.u32 4, %s37
        %p649 = scmp.lt.s32.totalorder %s648, 7
        %s650 = scalar_select %p649, %s648, 7
        %s651 = smul.addr %s650, 2
        %s652 = smul.addr %s651, 4
        %s653 = scalar_lea.vmem %s0, %s652
        %p654 = pneg %p58
        %p655 = pneg %p55
        %p656 = pneg %p79
        %p657 = pneg %p76
        %p658 = pneg %p100
        %p659 = pneg %p97
        %p660 = pneg %p121
        %p661 = pneg %p118
        %p662 = pneg %p142
        %p663 = pneg %p139
        %p664 = pneg %p163
        %p665 = pneg %p160
        %p666 = pneg %p184
        %p667 = pneg %p181
        %p668 = pneg %p205
        %p669 = pneg %p202
        %p670 = pneg %p226
        %p671 = pneg %p223
        %p672 = pneg %p247
        %p673 = pneg %p244
        %p674 = pneg %p268
        %p675 = pneg %p265
        %p676 = pneg %p289
        %p677 = pneg %p286
        %p678 = pneg %p310
        %p679 = pneg %p307
        %p680 = pneg %p331
        %p681 = pneg %p328
        %p682 = pneg %p352
        %p683 = pneg %p349
        %p684 = pneg %p373
        %p685 = pneg %p370
        %p686 = pneg %p394
        %p687 = pneg %p391
        %p688 = pneg %p420
        %p689 = pneg %p417
        %s690 = sand.u32 %s407, 1
        %s691 = scalar_lea.sflag [#allocation5], %s690
        %s692 = sand.u32 %s407, 1
        %s693 = smul.addr %s692, 4
        %s694 = scalar_lea.vmem [#allocation21], %s693
        %s695 = smul.u32 4, %s37
        %p696 = scmp.lt.s32.totalorder %s695, 7
        %s697 = scalar_select %p696, %s695, 7
        %s698 = smul.addr %s697, 2
        %s699 = smul.addr %s698, 4
        %s700 = scalar_lea.vmem %s0, %s699
        %s701 = smul.u32 4, %s37
        %703 = vst [vmem:[#allocation2] sm:$0xf] 0
        %704 = vst [vmem:[#allocation2 + $0x4] sm:$0xf] 0
        %705 = vst [vmem:[#allocation2 + $0x8] sm:$0x3] 0
        %706 = vst [vmem:[#allocation2 + $0xc] sm:$0xf] 0
        %707 = vst [vmem:[#allocation2 + $0x10] sm:$0xf] 0
        %708 = vst [vmem:[#allocation2 + $0x14] sm:$0x3] 0
        %709 = vst [vmem:[#allocation2 + $0x18] sm:$0xf] 0
        %710 = vst [vmem:[#allocation2 + $0x1c] sm:$0xf] 0
        %711 = vst [vmem:[#allocation2 + $0x20] sm:$0x3] 0
        %712 = vst [vmem:[#allocation2 + $0x24] sm:$0xf] 0
        %713 = vst [vmem:[#allocation2 + $0x28] sm:$0xf] 0
        %714 = vst [vmem:[#allocation2 + $0x2c] sm:$0x3] 0
        %v715 = vld [vmem:[%s700] sm:$0xf]
        %v716 = vld [vmem:[%s700 + $0x4] sm:$0xf]
        %v717 = vld [vmem:[%s700 + $0x8] sm:$0xf]
        %v718 = vld [vmem:[%s700 + $0xc] sm:$0xf]
        %v719 = vld [vmem:[%s700 + $0x10] sm:$0xf]
        %v720 = vld [vmem:[%s700 + $0x14] sm:$0xf]
        %v721 = vld [vmem:[%s700 + $0x18] sm:$0xf]
        %v722 = vld [vmem:[%s700 + $0x1c] sm:$0xf]
        %vm731 = vcmask 1041408
        %vm732 = vcmask 1045508
        %vm733 = vmor %vm731, %vm732
        %v734 = vrot.slane %v715, 6
        %v735 = vrot.slane %v734, 4
        %v736 = vrot.slane %v716, 6
        %v737 = vsel %vm733, %v735, %v736
        %v738 = vrot.slane %v736, 4
        %v739 = vrot.slane %v717, 6
        %v740 = vrot.slane %v739, 4
        %v741 = vrot.slane %v718, 6
        %v742 = vsel %vm733, %v740, %v741
        %v743 = vrot.slane %v741, 4
        %v744 = vrot.slane %v719, 6
        %v745 = vrot.slane %v744, 4
        %v746 = vrot.slane %v720, 6
        %v747 = vsel %vm733, %v745, %v746
        %v748 = vrot.slane %v746, 4
        %v749 = vrot.slane %v721, 6
        %v750 = vrot.slane %v749, 4
        %v751 = vrot.slane %v722, 6
        %v752 = vsel %vm733, %v750, %v751
        %v753 = vrot.slane %v751, 4
        %vm766 = vcmask 27650
        %767 = vst.msk [vmem:[#allocation2] sm:$0xc] %vm766, %v734
        %vm768 = vcmask 27648
        %769 = vst.msk [vmem:[#allocation2 + $0x4] sm:$0xf] %vm768, %v737
        %vm770 = vcmask 25600
        %771 = vst.msk [vmem:[#allocation2 + $0x8] sm:$0x3] %vm770, %v738
        %772 = vst.msk [vmem:[#allocation2 + $0xc] sm:$0xc] %vm766, %v739
        %773 = vst.msk [vmem:[#allocation2 + $0x10] sm:$0xf] %vm768, %v742
        %774 = vst.msk [vmem:[#allocation2 + $0x14] sm:$0x3] %vm770, %v743
        %775 = vst.msk [vmem:[#allocation2 + $0x18] sm:$0xc] %vm766, %v744
        %776 = vst.msk [vmem:[#allocation2 + $0x1c] sm:$0xf] %vm768, %v747
        %777 = vst.msk [vmem:[#allocation2 + $0x20] sm:$0x3] %vm770, %v748
        %778 = vst.msk [vmem:[#allocation2 + $0x24] sm:$0xc] %vm766, %v749
        %779 = vst.msk [vmem:[#allocation2 + $0x28] sm:$0xf] %vm768, %v752
        %780 = vst.msk [vmem:[#allocation2 + $0x2c] sm:$0x3] %vm770, %v753
        %v781 = vld [vmem:[#allocation2] sm:$0xc]
        %v782 = vld [vmem:[#allocation2 + $0x4] sm:$0xf]
        %v783 = vld [vmem:[#allocation2 + $0x8] sm:$0x3]
        %v784 = vld [vmem:[#allocation2 + $0xc] sm:$0xc]
        %v785 = vld [vmem:[#allocation2 + $0x10] sm:$0xf]
        %v786 = vld [vmem:[#allocation2 + $0x14] sm:$0x3]
        %v787 = vld [vmem:[#allocation2 + $0x18] sm:$0xc]
        %v788 = vld [vmem:[#allocation2 + $0x1c] sm:$0xf]
        %v789 = vld [vmem:[#allocation2 + $0x20] sm:$0x3]
        %v790 = vld [vmem:[#allocation2 + $0x24] sm:$0xc]
        %v791 = vld [vmem:[#allocation2 + $0x28] sm:$0xf]
        %v792 = vld [vmem:[#allocation2 + $0x2c] sm:$0x3]
        %v793 = vunpack.c.l.bf16 %v781
        %v794 = vunpack.c.l.bf16 %v782
        %v795 = vunpack.c.l.bf16 %v783
        %v796 = vunpack.c.l.bf16 %v784
        %v797 = vunpack.c.l.bf16 %v785
        %v798 = vunpack.c.l.bf16 %v786
        %v799 = vunpack.c.l.bf16 %v787
        %v800 = vunpack.c.l.bf16 %v788
        %v801 = vunpack.c.l.bf16 %v789
        %v802 = vunpack.c.l.bf16 %v790
        %v803 = vunpack.c.l.bf16 %v791
        %v804 = vunpack.c.l.bf16 %v792
        %vm817 = vcmask 1043456
        %v818 = vrot.slane %v793, 4
        %v819 = vrot.slane %v794, 4
        %v820 = vsel %vm817, %v818, %v819
        %v821 = vrot.slane %v795, 4
        %v822 = vsel %vm817, %v819, %v821
        %v823 = vrot.slane %v796, 4
        %v824 = vrot.slane %v797, 4
        %v825 = vsel %vm817, %v823, %v824
        %v826 = vrot.slane %v798, 4
        %v827 = vsel %vm817, %v824, %v826
        %v828 = vrot.slane %v799, 4
        %v829 = vrot.slane %v800, 4
        %v830 = vsel %vm817, %v828, %v829
        %v831 = vrot.slane %v801, 4
        %v832 = vsel %vm817, %v829, %v831
        %v833 = vrot.slane %v802, 4
        %v834 = vrot.slane %v803, 4
        %v835 = vsel %vm817, %v833, %v834
        %v836 = vrot.slane %v804, 4
        %v837 = vsel %vm817, %v834, %v836
        %v846 = vld [vmem:[#allocation2] sm:$0xe]
        %v847 = vld [vmem:[#allocation2 + $0xc] sm:$0xe]
        %v848 = vld [vmem:[#allocation2 + $0x18] sm:$0xe]
        %v849 = vld [vmem:[#allocation2 + $0x24] sm:$0xe]
        %v862 = vunpack.c.l.b16 %v846
        %v863 = vunpack.c.l.b16 %v782
        %v864 = vunpack.c.l.b16 %v783
        %v865 = vunpack.c.l.b16 %v847
        %v866 = vunpack.c.l.b16 %v785
        %v867 = vunpack.c.l.b16 %v786
        %v868 = vunpack.c.l.b16 %v848
        %v869 = vunpack.c.l.b16 %v788
        %v870 = vunpack.c.l.b16 %v789
        %v871 = vunpack.c.l.b16 %v849
        %v872 = vunpack.c.l.b16 %v791
        %v873 = vunpack.c.l.b16 %v792
        %v874 = vpack.c.b16 %v863, %v862
        %v875 = vpack.c.b16 %v864, %v864
        %v876 = vpack.c.b16 %v866, %v865
        %v877 = vpack.c.b16 %v867, %v867
        %v878 = vpack.c.b16 %v869, %v868
        %v879 = vpack.c.b16 %v870, %v870
        %v880 = vpack.c.b16 %v872, %v871
        %v881 = vpack.c.b16 %v873, %v873
        %v886 = vunpack.c.l.b16 %v781
        %v887 = vunpack.c.l.b16 %v784
        %v888 = vunpack.c.l.b16 %v787
        %v889 = vunpack.c.l.b16 %v790
        %v890 = vpack.c.b16 %v863, %v886
        %v891 = vpack.c.b16 %v866, %v887
        %v892 = vpack.c.b16 %v869, %v888
        %v893 = vpack.c.b16 %v872, %v889
        %vm894 = vsmask.f32 7424
        %v896 = vshrl.u32 %v890, 16
        %v898 = vshll.u32 %v890, 16
        %v900 = vrot.slane %v898, 1
        %v901 = vor.u32 %v896, %v900
        %v903 = vshll.u32 %v875, 16
        %v905 = vrot.slane %v903, 1
        %v906 = vsel %vm894, %v901, %v905
        %v907 = vshrl.u32 %v875, 16
        %v909 = vor.u32 %v907, %v905
        %v911 = vshrl.u32 %v891, 16
        %v913 = vshll.u32 %v891, 16
        %v915 = vrot.slane %v913, 1
        %v916 = vor.u32 %v911, %v915
        %v918 = vshll.u32 %v877, 16
        %v920 = vrot.slane %v918, 1
        %v921 = vsel %vm894, %v916, %v920
        %v922 = vshrl.u32 %v877, 16
        %v924 = vor.u32 %v922, %v920
        %v926 = vshrl.u32 %v892, 16
        %v928 = vshll.u32 %v892, 16
        %v930 = vrot.slane %v928, 1
        %v931 = vor.u32 %v926, %v930
        %v933 = vshll.u32 %v879, 16
        %v935 = vrot.slane %v933, 1
        %v936 = vsel %vm894, %v931, %v935
        %v937 = vshrl.u32 %v879, 16
        %v939 = vor.u32 %v937, %v935
        %v941 = vshrl.u32 %v893, 16
        %v943 = vshll.u32 %v893, 16
        %v945 = vrot.slane %v943, 1
        %v946 = vor.u32 %v941, %v945
        %v948 = vshll.u32 %v881, 16
        %v950 = vrot.slane %v948, 1
        %v951 = vsel %vm894, %v946, %v950
        %v952 = vshrl.u32 %v881, 16
        %v954 = vor.u32 %v952, %v950
        %vm955 = vsmask.f32 6400
        %v957 = vshrl.u32 %v874, 16
        %v959 = vrot.slane %v957, 1
        %v960 = vshll.u32 %v874, 16
        %v962 = vrot.slane %v960, 2
        %v963 = vor.u32 %v959, %v962
        %v964 = vrot.slane %v907, 1
        %v965 = vrot.slane %v903, 2
        %v966 = vor.u32 %v964, %v965
        %v967 = vsel %vm955, %v963, %v966
        %v969 = vshrl.u32 %v906, 16
        %v971 = vrot.slane %v969, 1
        %v972 = vshll.u32 %v906, 16
        %v974 = vrot.slane %v972, 2
        %v975 = vor.u32 %v971, %v974
        %v977 = vshrl.u32 %v909, 16
        %v979 = vrot.slane %v977, 1
        %v980 = vshll.u32 %v909, 16
        %v982 = vrot.slane %v980, 2
        %v983 = vor.u32 %v979, %v982
        %v984 = vsel %vm955, %v975, %v983
        %v986 = vshrl.u32 %v876, 16
        %v988 = vrot.slane %v986, 1
        %v989 = vshll.u32 %v876, 16
        %v991 = vrot.slane %v989, 2
        %v992 = vor.u32 %v988, %v991
        %v993 = vrot.slane %v922, 1
        %v994 = vrot.slane %v918, 2
        %v995 = vor.u32 %v993, %v994
        %v996 = vsel %vm955, %v992, %v995
        %v998 = vshrl.u32 %v921, 16
        %v1000 = vrot.slane %v998, 1
        %v1001 = vshll.u32 %v921, 16
        %v1003 = vrot.slane %v1001, 2
        %v1004 = vor.u32 %v1000, %v1003
        %v1006 = vshrl.u32 %v924, 16
        %v1008 = vrot.slane %v1006, 1
        %v1009 = vshll.u32 %v924, 16
        %v1011 = vrot.slane %v1009, 2
        %v1012 = vor.u32 %v1008, %v1011
        %v1013 = vsel %vm955, %v1004, %v1012
        %v1015 = vshrl.u32 %v878, 16
        %v1017 = vrot.slane %v1015, 1
        %v1018 = vshll.u32 %v878, 16
        %v1020 = vrot.slane %v1018, 2
        %v1021 = vor.u32 %v1017, %v1020
        %v1022 = vrot.slane %v937, 1
        %v1023 = vrot.slane %v933, 2
        %v1024 = vor.u32 %v1022, %v1023
        %v1025 = vsel %vm955, %v1021, %v1024
        %v1027 = vshrl.u32 %v936, 16
        %v1029 = vrot.slane %v1027, 1
        %v1030 = vshll.u32 %v936, 16
        %v1032 = vrot.slane %v1030, 2
        %v1033 = vor.u32 %v1029, %v1032
        %v1035 = vshrl.u32 %v939, 16
        %v1037 = vrot.slane %v1035, 1
        %v1038 = vshll.u32 %v939, 16
        %v1040 = vrot.slane %v1038, 2
        %v1041 = vor.u32 %v1037, %v1040
        %v1042 = vsel %vm955, %v1033, %v1041
        %v1044 = vshrl.u32 %v880, 16
        %v1046 = vrot.slane %v1044, 1
        %v1047 = vshll.u32 %v880, 16
        %v1049 = vrot.slane %v1047, 2
        %v1050 = vor.u32 %v1046, %v1049
        %v1051 = vrot.slane %v952, 1
        %v1052 = vrot.slane %v948, 2
        %v1053 = vor.u32 %v1051, %v1052
        %v1054 = vsel %vm955, %v1050, %v1053
        %v1056 = vshrl.u32 %v951, 16
        %v1058 = vrot.slane %v1056, 1
        %v1059 = vshll.u32 %v951, 16
        %v1061 = vrot.slane %v1059, 2
        %v1062 = vor.u32 %v1058, %v1061
        %v1064 = vshrl.u32 %v954, 16
        %v1066 = vrot.slane %v1064, 1
        %v1067 = vshll.u32 %v954, 16
        %v1069 = vrot.slane %v1067, 2
        %v1070 = vor.u32 %v1066, %v1069
        %v1071 = vsel %vm955, %v1062, %v1070
        %v1080 = vld [vmem:[#allocation3] sm:$0xf]
        %v1081 = vld [vmem:[#allocation3 + $0x4] sm:$0xf]
        %v1082 = vld [vmem:[#allocation3 + $0x8] sm:$0xf]
        %v1083 = vld [vmem:[#allocation3 + $0xc] sm:$0xf]
        %v1084 = vld [vmem:[#allocation3 + $0x10] sm:$0xf]
        %v1085 = vld [vmem:[#allocation3 + $0x14] sm:$0xf]
        %v1086 = vld [vmem:[#allocation3 + $0x18] sm:$0xf]
        %v1087 = vld [vmem:[#allocation3 + $0x1c] sm:$0xf]
        %v1088 = vld [vmem:[#allocation3 + $0x20] sm:$0xf]
        %v1089 = vld [vmem:[#allocation3 + $0x24] sm:$0xf]
        %v1090 = vld [vmem:[#allocation3 + $0x28] sm:$0xf]
        %v1091 = vld [vmem:[#allocation3 + $0x2c] sm:$0xf]
        %v1092 = vld [vmem:[#allocation3 + $0x30] sm:$0xf]
        %v1093 = vld [vmem:[#allocation3 + $0x34] sm:$0xf]
        %v1094 = vld [vmem:[#allocation3 + $0x38] sm:$0xf]
        %v1095 = vld [vmem:[#allocation3 + $0x3c] sm:$0xf]
        %v1096 = vld [vmem:[#allocation3 + $0x40] sm:$0xf]
        %v1097 = vld [vmem:[#allocation3 + $0x44] sm:$0xf]
        %v1098 = vld [vmem:[#allocation3 + $0x48] sm:$0xf]
        %v1099 = vld [vmem:[#allocation3 + $0x4c] sm:$0xf]
        %v1100 = vld [vmem:[#allocation3 + $0x50] sm:$0xf]
        %v1101 = vld [vmem:[#allocation3 + $0x54] sm:$0xf]
        %v1102 = vld [vmem:[#allocation3 + $0x58] sm:$0xf]
        %v1103 = vld [vmem:[#allocation3 + $0x5c] sm:$0xf]
        %v1104 = vld [vmem:[#allocation3 + $0x60] sm:$0xf]
        %v1105 = vld [vmem:[#allocation3 + $0x64] sm:$0xf]
        %v1106 = vld [vmem:[#allocation3 + $0x68] sm:$0xf]
        %v1107 = vld [vmem:[#allocation3 + $0x6c] sm:$0xf]
        %v1108 = vld [vmem:[#allocation3 + $0x70] sm:$0xf]
        %v1109 = vld [vmem:[#allocation3 + $0x74] sm:$0xf]
        %v1110 = vld [vmem:[#allocation3 + $0x78] sm:$0xf]
        %v1111 = vld [vmem:[#allocation3 + $0x7c] sm:$0xf]
        %v1112 = vld [vmem:[%s2] sm:$0x1]
        %v1114 = vlaneseq
        %v1115 = vshrl.u32 %v1114, 7
        %v1116 = vsub.s32 0, %v1115
        %v1117 = vrot.slane %v1112, %v1116
        %v1151 = vunpack.c.l.b16 %v1080
        %v1152 = vunpack.c.l.b16 %v1081
        %v1153 = vunpack.c.l.b16 %v1082
        %v1154 = vunpack.c.l.b16 %v1083
        %v1155 = vunpack.c.l.b16 %v1084
        %v1156 = vunpack.c.l.b16 %v1085
        %v1157 = vunpack.c.l.b16 %v1086
        %v1158 = vunpack.c.l.b16 %v1087
        %v1159 = vunpack.c.l.b16 %v1088
        %v1160 = vunpack.c.l.b16 %v1089
        %v1161 = vunpack.c.l.b16 %v1090
        %v1162 = vunpack.c.l.b16 %v1091
        %v1163 = vunpack.c.l.b16 %v1092
        %v1164 = vunpack.c.l.b16 %v1093
        %v1165 = vunpack.c.l.b16 %v1094
        %v1166 = vunpack.c.l.b16 %v1095
        %v1167 = vunpack.c.l.b16 %v1096
        %v1168 = vunpack.c.l.b16 %v1097
        %v1169 = vunpack.c.l.b16 %v1098
        %v1170 = vunpack.c.l.b16 %v1099
        %v1171 = vunpack.c.l.b16 %v1100
        %v1172 = vunpack.c.l.b16 %v1101
        %v1173 = vunpack.c.l.b16 %v1102
        %v1174 = vunpack.c.l.b16 %v1103
        %v1175 = vunpack.c.l.b16 %v1104
        %v1176 = vunpack.c.l.b16 %v1105
        %v1177 = vunpack.c.l.b16 %v1106
        %v1178 = vunpack.c.l.b16 %v1107
        %v1179 = vunpack.c.l.b16 %v1108
        %v1180 = vunpack.c.l.b16 %v1109
        %v1181 = vunpack.c.l.b16 %v1110
        %v1182 = vunpack.c.l.b16 %v1111
        %v1183 = vpack.c.b16 %v1152, %v1151
        %v1184 = vpack.c.b16 %v1154, %v1153
        %v1185 = vpack.c.b16 %v1156, %v1155
        %v1186 = vpack.c.b16 %v1158, %v1157
        %v1187 = vpack.c.b16 %v1160, %v1159
        %v1188 = vpack.c.b16 %v1162, %v1161
        %v1189 = vpack.c.b16 %v1164, %v1163
        %v1190 = vpack.c.b16 %v1166, %v1165
        %v1191 = vpack.c.b16 %v1168, %v1167
        %v1192 = vpack.c.b16 %v1170, %v1169
        %v1193 = vpack.c.b16 %v1172, %v1171
        %v1194 = vpack.c.b16 %v1174, %v1173
        %v1195 = vpack.c.b16 %v1176, %v1175
        %v1196 = vpack.c.b16 %v1178, %v1177
        %v1197 = vpack.c.b16 %v1180, %v1179
        %v1198 = vpack.c.b16 %v1182, %v1181
        %1215 = vmatprep.subr.bf16.mxu0 0
        %1216 = vmatpush1.bf16.msra.mxu0 %v1183
        %1217 = vmatprep.subr.bf16.mxu0 0
        %1218 = vmatpush1.bf16.msra.mxu0 %v1184
        %1219 = vmatprep.subr.bf16.mxu0 0
        %1220 = vmatpush1.bf16.msra.mxu0 %v1185
        %1221 = vmatprep.subr.bf16.mxu0 0
        %1222 = vmatpush1.bf16.msra.mxu0 %v1186
        %1223 = vmatprep.subr.bf16.mxu0 0
        %1224 = vmatpush1.bf16.msra.mxu0 %v1187
        %1225 = vmatprep.subr.bf16.mxu0 0
        %1226 = vmatpush1.bf16.msra.mxu0 %v1188
        %1227 = vmatprep.subr.bf16.mxu0 0
        %1228 = vmatpush1.bf16.msra.mxu0 %v1189
        %1229 = vmatprep.subr.bf16.mxu0 0
        %1230 = vmatpush1.bf16.msra.mxu0 %v1190
        %1231 = vmatprep.subr.bf16.mxu0 0
        %1232 = vmatpush1.bf16.msra.mxu0 %v1191
        %1233 = vmatprep.subr.bf16.mxu0 0
        %1234 = vmatpush1.bf16.msra.mxu0 %v1192
        %1235 = vmatprep.subr.bf16.mxu0 0
        %1236 = vmatpush1.bf16.msra.mxu0 %v1193
        %1237 = vmatprep.subr.bf16.mxu0 0
        %1238 = vmatpush1.bf16.msra.mxu0 %v1194
        %1239 = vmatprep.subr.bf16.mxu0 0
        %1240 = vmatpush1.bf16.msra.mxu0 %v1195
        %1241 = vmatprep.subr.bf16.mxu0 0
        %1242 = vmatpush1.bf16.msra.mxu0 %v1196
        %1243 = vmatprep.subr.bf16.mxu0 0
        %1244 = vmatpush1.bf16.msra.mxu0 %v1197
        %1245 = vmatprep.subr.bf16.mxu0 0
        %1246 = vmatpush1.bf16.msra.mxu0 %v1198
        %1247 = vmatprep.mubr.bf16.mxu0 %v984
        %1248 = vmatmul.mubr.bf16.gmra.mrb[0].mxu0 %v967
        %v1249 = vpop.f32.mrb[0].mxu0
        %v1250 = vadd.f32 %v1117, %v1249
        %v1251 = vpop.f32.mrb[0].mxu0
        %v1252 = vpop.f32.mrb[0].mxu0
        %v1253 = vadd.f32 %v1117, %v1252
        %v1254 = vpop.f32.mrb[0].mxu0
        %1255 = vmatprep.mubr.bf16.mxu0 %v1013
        %1256 = vmatmul.mubr.bf16.gmra.mrb[0].mxu0 %v996
        %v1257 = vpop.f32.mrb[0].mxu0
        %v1258 = vadd.f32 %v1117, %v1257
        %v1259 = vpop.f32.mrb[0].mxu0
        %v1260 = vpop.f32.mrb[0].mxu0
        %v1261 = vadd.f32 %v1117, %v1260
        %v1262 = vpop.f32.mrb[0].mxu0
        %1263 = vmatprep.mubr.bf16.mxu0 %v1042
        %1264 = vmatmul.mubr.bf16.gmra.mrb[0].mxu0 %v1025
        %v1265 = vpop.f32.mrb[0].mxu0
        %v1266 = vadd.f32 %v1117, %v1265
        %v1267 = vpop.f32.mrb[0].mxu0
        %v1268 = vpop.f32.mrb[0].mxu0
        %v1269 = vadd.f32 %v1117, %v1268
        %v1270 = vpop.f32.mrb[0].mxu0
        %1271 = vmatprep.mubr.bf16.mxu0 %v1071
        %1272 = vmatmul.mubr.bf16.gmra.mrb[0].mxu0 %v1054
        %v1273 = vpop.f32.mrb[0].mxu0
        %v1274 = vadd.f32 %v1117, %v1273
        %v1275 = vpop.f32.mrb[0].mxu0
        %v1276 = vpop.f32.mrb[0].mxu0
        %v1277 = vadd.f32 %v1117, %v1276
        %v1278 = vpop.f32.mrb[0].mxu0
        %1279 = vdwg.mxu0
        %v1280 = vmax.f32 %v1250, 0.0
        %v1281 = vmax.f32 %v1253, 0.0
        %v1282 = vmax.f32 %v1258, 0.0
        %v1283 = vmax.f32 %v1261, 0.0
        %v1284 = vmax.f32 %v1266, 0.0
        %v1285 = vmax.f32 %v1269, 0.0
        %v1286 = vmax.f32 %v1274, 0.0
        %v1287 = vmax.f32 %v1277, 0.0
        %v1288 = vpack.c.bf16 %v1281, %v1280
        %v1289 = vpack.c.bf16 %v1283, %v1282
        %v1290 = vpack.c.bf16 %v1285, %v1284
        %v1291 = vpack.c.bf16 %v1287, %v1286
        %v1296 = vunpack.c.l.b16 %v1288
        %v1297 = vunpack.c.h.b16 %v1288
        %v1298 = vunpack.c.l.b16 %v1289
        %v1299 = vunpack.c.h.b16 %v1289
        %v1300 = vunpack.c.l.b16 %v1290
        %v1301 = vunpack.c.h.b16 %v1290
        %v1302 = vunpack.c.l.b16 %v1291
        %v1303 = vunpack.c.h.b16 %v1291
        %v1304 = vpack.c.b16 %v1296, %v1296
        %v1305 = vpack.c.b16 %v1297, %v1297
        %v1306 = vpack.c.b16 %v1298, %v1298
        %v1307 = vpack.c.b16 %v1299, %v1299
        %v1308 = vpack.c.b16 %v1300, %v1300
        %v1309 = vpack.c.b16 %v1301, %v1301
        %v1310 = vpack.c.b16 %v1302, %v1302
        %v1311 = vpack.c.b16 %v1303, %v1303
        %v1312 = vrot.slane %v1304, 6
        %v1313 = vrot.slane %v1312, 4
        %v1314 = vrot.slane %v1305, 6
        %v1315 = vsel %vm733, %v1313, %v1314
        %v1316 = vrot.slane %v1314, 4
        %v1317 = vrot.slane %v1306, 6
        %v1318 = vrot.slane %v1317, 4
        %v1319 = vrot.slane %v1307, 6
        %v1320 = vsel %vm733, %v1318, %v1319
        %v1321 = vrot.slane %v1319, 4
        %v1322 = vrot.slane %v1308, 6
        %v1323 = vrot.slane %v1322, 4
        %v1324 = vrot.slane %v1309, 6
        %v1325 = vsel %vm733, %v1323, %v1324
        %v1326 = vrot.slane %v1324, 4
        %v1327 = vrot.slane %v1310, 6
        %v1328 = vrot.slane %v1327, 4
        %v1329 = vrot.slane %v1311, 6
        %v1330 = vsel %vm733, %v1328, %v1329
        %v1331 = vrot.slane %v1329, 4
        %1344 = vst [vmem:[#allocation2] sm:$0xc] %v1312
        %1345 = vst [vmem:[#allocation2 + $0x4] sm:$0xf] %v1315
        %1346 = vst [vmem:[#allocation2 + $0x8] sm:$0x3] %v1316
        %1347 = vst [vmem:[#allocation2 + $0xc] sm:$0xc] %v1317
        %1348 = vst [vmem:[#allocation2 + $0x10] sm:$0xf] %v1320
        %1349 = vst [vmem:[#allocation2 + $0x14] sm:$0x3] %v1321
        %1350 = vst [vmem:[#allocation2 + $0x18] sm:$0xc] %v1322
        %1351 = vst [vmem:[#allocation2 + $0x1c] sm:$0xf] %v1325
        %1352 = vst [vmem:[#allocation2 + $0x20] sm:$0x3] %v1326
        %1353 = vst [vmem:[#allocation2 + $0x24] sm:$0xc] %v1327
        %1354 = vst [vmem:[#allocation2 + $0x28] sm:$0xf] %v1330
        %1355 = vst [vmem:[#allocation2 + $0x2c] sm:$0x3] %v1331
        %v1356 = vld [vmem:[#allocation2] sm:$0xe]
        %v1357 = vld [vmem:[#allocation2 + $0x4] sm:$0xf]
        %v1358 = vld [vmem:[#allocation2 + $0x8] sm:$0x3]
        %v1359 = vld [vmem:[#allocation2 + $0xc] sm:$0xe]
        %v1360 = vld [vmem:[#allocation2 + $0x10] sm:$0xf]
        %v1361 = vld [vmem:[#allocation2 + $0x14] sm:$0x3]
        %v1362 = vld [vmem:[#allocation2 + $0x18] sm:$0xe]
        %v1363 = vld [vmem:[#allocation2 + $0x1c] sm:$0xf]
        %v1364 = vld [vmem:[#allocation2 + $0x20] sm:$0x3]
        %v1365 = vld [vmem:[#allocation2 + $0x24] sm:$0xe]
        %v1366 = vld [vmem:[#allocation2 + $0x28] sm:$0xf]
        %v1367 = vld [vmem:[#allocation2 + $0x2c] sm:$0x3]
        %v1368 = vld [vmem:[#allocation2] sm:$0xc]
        %v1369 = vld [vmem:[#allocation2 + $0xc] sm:$0xc]
        %v1370 = vld [vmem:[#allocation2 + $0x18] sm:$0xc]
        %v1371 = vld [vmem:[#allocation2 + $0x24] sm:$0xc]
        %v1384 = vunpack.c.l.b16 %v1356
        %v1385 = vunpack.c.l.b16 %v1357
        %v1386 = vunpack.c.l.b16 %v1358
        %v1387 = vunpack.c.l.b16 %v1359
        %v1388 = vunpack.c.l.b16 %v1360
        %v1389 = vunpack.c.l.b16 %v1361
        %v1390 = vunpack.c.l.b16 %v1362
        %v1391 = vunpack.c.l.b16 %v1363
        %v1392 = vunpack.c.l.b16 %v1364
        %v1393 = vunpack.c.l.b16 %v1365
        %v1394 = vunpack.c.l.b16 %v1366
        %v1395 = vunpack.c.l.b16 %v1367
        %v1396 = vpack.c.b16 %v1385, %v1384
        %v1397 = vpack.c.b16 %v1386, %v1386
        %v1398 = vpack.c.b16 %v1388, %v1387
        %v1399 = vpack.c.b16 %v1389, %v1389
        %v1400 = vpack.c.b16 %v1391, %v1390
        %v1401 = vpack.c.b16 %v1392, %v1392
        %v1402 = vpack.c.b16 %v1394, %v1393
        %v1403 = vpack.c.b16 %v1395, %v1395
        %v1408 = vunpack.c.l.b16 %v1368
        %v1409 = vunpack.c.l.b16 %v1369
        %v1410 = vunpack.c.l.b16 %v1370
        %v1411 = vunpack.c.l.b16 %v1371
        %v1412 = vpack.c.b16 %v1385, %v1408
        %v1413 = vpack.c.b16 %v1388, %v1409
        %v1414 = vpack.c.b16 %v1391, %v1410
        %v1415 = vpack.c.b16 %v1394, %v1411
        %v1417 = vshrl.u32 %v1412, 16
        %v1419 = vshll.u32 %v1412, 16
        %v1421 = vrot.slane %v1419, 1
        %v1422 = vor.u32 %v1417, %v1421
        %v1424 = vshll.u32 %v1397, 16
        %v1426 = vrot.slane %v1424, 1
        %v1427 = vsel %vm894, %v1422, %v1426
        %v1428 = vshrl.u32 %v1397, 16
        %v1430 = vor.u32 %v1428, %v1426
        %v1432 = vshrl.u32 %v1413, 16
        %v1434 = vshll.u32 %v1413, 16
        %v1436 = vrot.slane %v1434, 1
        %v1437 = vor.u32 %v1432, %v1436
        %v1439 = vshll.u32 %v1399, 16
        %v1441 = vrot.slane %v1439, 1
        %v1442 = vsel %vm894, %v1437, %v1441
        %v1443 = vshrl.u32 %v1399, 16
        %v1445 = vor.u32 %v1443, %v1441
        %v1447 = vshrl.u32 %v1414, 16
        %v1449 = vshll.u32 %v1414, 16
        %v1451 = vrot.slane %v1449, 1
        %v1452 = vor.u32 %v1447, %v1451
        %v1454 = vshll.u32 %v1401, 16
        %v1456 = vrot.slane %v1454, 1
        %v1457 = vsel %vm894, %v1452, %v1456
        %v1458 = vshrl.u32 %v1401, 16
        %v1460 = vor.u32 %v1458, %v1456
        %v1462 = vshrl.u32 %v1415, 16
        %v1464 = vshll.u32 %v1415, 16
        %v1466 = vrot.slane %v1464, 1
        %v1467 = vor.u32 %v1462, %v1466
        %v1469 = vshll.u32 %v1403, 16
        %v1471 = vrot.slane %v1469, 1
        %v1472 = vsel %vm894, %v1467, %v1471
        %v1473 = vshrl.u32 %v1403, 16
        %v1475 = vor.u32 %v1473, %v1471
        %v1477 = vshrl.u32 %v1396, 16
        %v1479 = vrot.slane %v1477, 1
        %v1480 = vshll.u32 %v1396, 16
        %v1482 = vrot.slane %v1480, 2
        %v1483 = vor.u32 %v1479, %v1482
        %v1484 = vrot.slane %v1428, 1
        %v1485 = vrot.slane %v1424, 2
        %v1486 = vor.u32 %v1484, %v1485
        %v1487 = vsel %vm955, %v1483, %v1486
        %v1489 = vshrl.u32 %v1427, 16
        %v1491 = vrot.slane %v1489, 1
        %v1492 = vshll.u32 %v1427, 16
        %v1494 = vrot.slane %v1492, 2
        %v1495 = vor.u32 %v1491, %v1494
        %v1497 = vshrl.u32 %v1430, 16
        %v1499 = vrot.slane %v1497, 1
        %v1500 = vshll.u32 %v1430, 16
        %v1502 = vrot.slane %v1500, 2
        %v1503 = vor.u32 %v1499, %v1502
        %v1504 = vsel %vm955, %v1495, %v1503
        %v1506 = vshrl.u32 %v1398, 16
        %v1508 = vrot.slane %v1506, 1
        %v1509 = vshll.u32 %v1398, 16
        %v1511 = vrot.slane %v1509, 2
        %v1512 = vor.u32 %v1508, %v1511
        %v1513 = vrot.slane %v1443, 1
        %v1514 = vrot.slane %v1439, 2
        %v1515 = vor.u32 %v1513, %v1514
        %v1516 = vsel %vm955, %v1512, %v1515
        %v1518 = vshrl.u32 %v1442, 16
        %v1520 = vrot.slane %v1518, 1
        %v1521 = vshll.u32 %v1442, 16
        %v1523 = vrot.slane %v1521, 2
        %v1524 = vor.u32 %v1520, %v1523
        %v1526 = vshrl.u32 %v1445, 16
        %v1528 = vrot.slane %v1526, 1
        %v1529 = vshll.u32 %v1445, 16
        %v1531 = vrot.slane %v1529, 2
        %v1532 = vor.u32 %v1528, %v1531
        %v1533 = vsel %vm955, %v1524, %v1532
        %v1535 = vshrl.u32 %v1400, 16
        %v1537 = vrot.slane %v1535, 1
        %v1538 = vshll.u32 %v1400, 16
        %v1540 = vrot.slane %v1538, 2
        %v1541 = vor.u32 %v1537, %v1540
        %v1542 = vrot.slane %v1458, 1
        %v1543 = vrot.slane %v1454, 2
        %v1544 = vor.u32 %v1542, %v1543
        %v1545 = vsel %vm955, %v1541, %v1544
        %v1547 = vshrl.u32 %v1457, 16
        %v1549 = vrot.slane %v1547, 1
        %v1550 = vshll.u32 %v1457, 16
        %v1552 = vrot.slane %v1550, 2
        %v1553 = vor.u32 %v1549, %v1552
        %v1555 = vshrl.u32 %v1460, 16
        %v1557 = vrot.slane %v1555, 1
        %v1558 = vshll.u32 %v1460, 16
        %v1560 = vrot.slane %v1558, 2
        %v1561 = vor.u32 %v1557, %v1560
        %v1562 = vsel %vm955, %v1553, %v1561
        %v1564 = vshrl.u32 %v1402, 16
        %v1566 = vrot.slane %v1564, 1
        %v1567 = vshll.u32 %v1402, 16
        %v1569 = vrot.slane %v1567, 2
        %v1570 = vor.u32 %v1566, %v1569
        %v1571 = vrot.slane %v1473, 1
        %v1572 = vrot.slane %v1469, 2
        %v1573 = vor.u32 %v1571, %v1572
        %v1574 = vsel %vm955, %v1570, %v1573
        %v1576 = vshrl.u32 %v1472, 16
        %v1578 = vrot.slane %v1576, 1
        %v1579 = vshll.u32 %v1472, 16
        %v1581 = vrot.slane %v1579, 2
        %v1582 = vor.u32 %v1578, %v1581
        %v1584 = vshrl.u32 %v1475, 16
        %v1586 = vrot.slane %v1584, 1
        %v1587 = vshll.u32 %v1475, 16
        %v1589 = vrot.slane %v1587, 2
        %v1590 = vor.u32 %v1586, %v1589
        %v1591 = vsel %vm955, %v1582, %v1590
        %v1600 = vld [vmem:[#allocation6] sm:$0xf]
        %v1601 = vld [vmem:[#allocation6 + $0x4] sm:$0xf]
        %v1602 = vld [vmem:[#allocation6 + $0x8] sm:$0xf]
        %v1603 = vld [vmem:[#allocation6 + $0xc] sm:$0xf]
        %v1604 = vld [vmem:[#allocation6 + $0x10] sm:$0xf]
        %v1605 = vld [vmem:[#allocation6 + $0x14] sm:$0xf]
        %v1606 = vld [vmem:[#allocation6 + $0x18] sm:$0xf]
        %v1607 = vld [vmem:[#allocation6 + $0x1c] sm:$0xf]
        %v1608 = vld [vmem:[#allocation6 + $0x20] sm:$0xf]
        %v1609 = vld [vmem:[#allocation6 + $0x24] sm:$0xf]
        %v1610 = vld [vmem:[#allocation6 + $0x28] sm:$0xf]
        %v1611 = vld [vmem:[#allocation6 + $0x2c] sm:$0xf]
        %v1612 = vld [vmem:[#allocation6 + $0x30] sm:$0xf]
        %v1613 = vld [vmem:[#allocation6 + $0x34] sm:$0xf]
        %v1614 = vld [vmem:[#allocation6 + $0x38] sm:$0xf]
        %v1615 = vld [vmem:[#allocation6 + $0x3c] sm:$0xf]
        %v1616 = vld [vmem:[#allocation6 + $0x40] sm:$0xf]
        %v1617 = vld [vmem:[#allocation6 + $0x44] sm:$0xf]
        %v1618 = vld [vmem:[#allocation6 + $0x48] sm:$0xf]
        %v1619 = vld [vmem:[#allocation6 + $0x4c] sm:$0xf]
        %v1620 = vld [vmem:[#allocation6 + $0x50] sm:$0xf]
        %v1621 = vld [vmem:[#allocation6 + $0x54] sm:$0xf]
        %v1622 = vld [vmem:[#allocation6 + $0x58] sm:$0xf]
        %v1623 = vld [vmem:[#allocation6 + $0x5c] sm:$0xf]
        %v1624 = vld [vmem:[#allocation6 + $0x60] sm:$0xf]
        %v1625 = vld [vmem:[#allocation6 + $0x64] sm:$0xf]
        %v1626 = vld [vmem:[#allocation6 + $0x68] sm:$0xf]
        %v1627 = vld [vmem:[#allocation6 + $0x6c] sm:$0xf]
        %v1628 = vld [vmem:[#allocation6 + $0x70] sm:$0xf]
        %v1629 = vld [vmem:[#allocation6 + $0x74] sm:$0xf]
        %v1630 = vld [vmem:[#allocation6 + $0x78] sm:$0xf]
        %v1631 = vld [vmem:[#allocation6 + $0x7c] sm:$0xf]
        %v1632 = vld [vmem:[#allocation8] sm:$0x1]
        %v1634 = vlaneseq
        %v1635 = vshrl.u32 %v1634, 7
        %v1636 = vsub.s32 0, %v1635
        %v1637 = vrot.slane %v1632, %v1636
        %v1671 = vunpack.c.l.b16 %v1600
        %v1672 = vunpack.c.l.b16 %v1601
        %v1673 = vunpack.c.l.b16 %v1602
        %v1674 = vunpack.c.l.b16 %v1603
        %v1675 = vunpack.c.l.b16 %v1604
        %v1676 = vunpack.c.l.b16 %v1605
        %v1677 = vunpack.c.l.b16 %v1606
        %v1678 = vunpack.c.l.b16 %v1607
        %v1679 = vunpack.c.l.b16 %v1608
        %v1680 = vunpack.c.l.b16 %v1609
        %v1681 = vunpack.c.l.b16 %v1610
        %v1682 = vunpack.c.l.b16 %v1611
        %v1683 = vunpack.c.l.b16 %v1612
        %v1684 = vunpack.c.l.b16 %v1613
        %v1685 = vunpack.c.l.b16 %v1614
        %v1686 = vunpack.c.l.b16 %v1615
        %v1687 = vunpack.c.l.b16 %v1616
        %v1688 = vunpack.c.l.b16 %v1617
        %v1689 = vunpack.c.l.b16 %v1618
        %v1690 = vunpack.c.l.b16 %v1619
        %v1691 = vunpack.c.l.b16 %v1620
        %v1692 = vunpack.c.l.b16 %v1621
        %v1693 = vunpack.c.l.b16 %v1622
        %v1694 = vunpack.c.l.b16 %v1623
        %v1695 = vunpack.c.l.b16 %v1624
        %v1696 = vunpack.c.l.b16 %v1625
        %v1697 = vunpack.c.l.b16 %v1626
        %v1698 = vunpack.c.l.b16 %v1627
        %v1699 = vunpack.c.l.b16 %v1628
        %v1700 = vunpack.c.l.b16 %v1629
        %v1701 = vunpack.c.l.b16 %v1630
        %v1702 = vunpack.c.l.b16 %v1631
        %v1703 = vpack.c.b16 %v1672, %v1671
        %v1704 = vpack.c.b16 %v1674, %v1673
        %v1705 = vpack.c.b16 %v1676, %v1675
        %v1706 = vpack.c.b16 %v1678, %v1677
        %v1707 = vpack.c.b16 %v1680, %v1679
        %v1708 = vpack.c.b16 %v1682, %v1681
        %v1709 = vpack.c.b16 %v1684, %v1683
        %v1710 = vpack.c.b16 %v1686, %v1685
        %v1711 = vpack.c.b16 %v1688, %v1687
        %v1712 = vpack.c.b16 %v1690, %v1689
        %v1713 = vpack.c.b16 %v1692, %v1691
        %v1714 = vpack.c.b16 %v1694, %v1693
        %v1715 = vpack.c.b16 %v1696, %v1695
        %v1716 = vpack.c.b16 %v1698, %v1697
        %v1717 = vpack.c.b16 %v1700, %v1699
        %v1718 = vpack.c.b16 %v1702, %v1701
        %1735 = vmatprep.subr.bf16.mxu0 0
        %1736 = vmatpush1.bf16.msra.mxu0 %v1703
        %1737 = vmatprep.subr.bf16.mxu0 0
        %1738 = vmatpush1.bf16.msra.mxu0 %v1704
        %1739 = vmatprep.subr.bf16.mxu0 0
        %1740 = vmatpush1.bf16.msra.mxu0 %v1705
        %1741 = vmatprep.subr.bf16.mxu0 0
        %1742 = vmatpush1.bf16.msra.mxu0 %v1706
        %1743 = vmatprep.subr.bf16.mxu0 0
        %1744 = vmatpush1.bf16.msra.mxu0 %v1707
        %1745 = vmatprep.subr.bf16.mxu0 0
        %1746 = vmatpush1.bf16.msra.mxu0 %v1708
        %1747 = vmatprep.subr.bf16.mxu0 0
        %1748 = vmatpush1.bf16.msra.mxu0 %v1709
        %1749 = vmatprep.subr.bf16.mxu0 0
        %1750 = vmatpush1.bf16.msra.mxu0 %v1710
        %1751 = vmatprep.subr.bf16.mxu0 0
        %1752 = vmatpush1.bf16.msra.mxu0 %v1711
        %1753 = vmatprep.subr.bf16.mxu0 0
        %1754 = vmatpush1.bf16.msra.mxu0 %v1712
        %1755 = vmatprep.subr.bf16.mxu0 0
        %1756 = vmatpush1.bf16.msra.mxu0 %v1713
        %1757 = vmatprep.subr.bf16.mxu0 0
        %1758 = vmatpush1.bf16.msra.mxu0 %v1714
        %1759 = vmatprep.subr.bf16.mxu0 0
        %1760 = vmatpush1.bf16.msra.mxu0 %v1715
        %1761 = vmatprep.subr.bf16.mxu0 0
        %1762 = vmatpush1.bf16.msra.mxu0 %v1716
        %1763 = vmatprep.subr.bf16.mxu0 0
        %1764 = vmatpush1.bf16.msra.mxu0 %v1717
        %1765 = vmatprep.subr.bf16.mxu0 0
        %1766 = vmatpush1.bf16.msra.mxu0 %v1718
        %1767 = vmatprep.mubr.bf16.mxu0 %v1504
        %1768 = vmatmul.mubr.bf16.gmra.mrb[0].mxu0 %v1487
        %v1769 = vpop.f32.mrb[0].mxu0
        %v1770 = vadd.f32 %v1637, %v1769
        %v1771 = vpop.f32.mrb[0].mxu0
        %v1772 = vpop.f32.mrb[0].mxu0
        %v1773 = vadd.f32 %v1637, %v1772
        %v1774 = vpop.f32.mrb[0].mxu0
        %1775 = vmatprep.mubr.bf16.mxu0 %v1533
        %1776 = vmatmul.mubr.bf16.gmra.mrb[0].mxu0 %v1516
        %v1777 = vpop.f32.mrb[0].mxu0
        %v1778 = vadd.f32 %v1637, %v1777
        %v1779 = vpop.f32.mrb[0].mxu0
        %v1780 = vpop.f32.mrb[0].mxu0
        %v1781 = vadd.f32 %v1637, %v1780
        %v1782 = vpop.f32.mrb[0].mxu0
        %1783 = vmatprep.mubr.bf16.mxu0 %v1562
        %1784 = vmatmul.mubr.bf16.gmra.mrb[0].mxu0 %v1545
        %v1785 = vpop.f32.mrb[0].mxu0
        %v1786 = vadd.f32 %v1637, %v1785
        %v1787 = vpop.f32.mrb[0].mxu0
        %v1788 = vpop.f32.mrb[0].mxu0
        %v1789 = vadd.f32 %v1637, %v1788
        %v1790 = vpop.f32.mrb[0].mxu0
        %1791 = vmatprep.mubr.bf16.mxu0 %v1591
        %1792 = vmatmul.mubr.bf16.gmra.mrb[0].mxu0 %v1574
        %v1793 = vpop.f32.mrb[0].mxu0
        %v1794 = vadd.f32 %v1637, %v1793
        %v1795 = vpop.f32.mrb[0].mxu0
        %v1796 = vpop.f32.mrb[0].mxu0
        %v1797 = vadd.f32 %v1637, %v1796
        %v1798 = vpop.f32.mrb[0].mxu0
        %1799 = vdwg.mxu0
        %v1800 = vmax.f32 %v1770, 0.0
        %v1801 = vmax.f32 %v1773, 0.0
        %v1802 = vmax.f32 %v1778, 0.0
        %v1803 = vmax.f32 %v1781, 0.0
        %v1804 = vmax.f32 %v1786, 0.0
        %v1805 = vmax.f32 %v1789, 0.0
        %v1806 = vmax.f32 %v1794, 0.0
        %v1807 = vmax.f32 %v1797, 0.0
        %v1808 = vpack.c.bf16 %v822, %v820
        %v1809 = vpack.c.bf16 %v827, %v825
        %v1810 = vpack.c.bf16 %v832, %v830
        %v1811 = vpack.c.bf16 %v837, %v835
        %v1812 = vld [vmem:[%s5] sm:$0xf]
        %v1813 = vld [vmem:[%s5 + $0x4] sm:$0xf]
        %v1814 = vld [vmem:[%s5 + $0x8] sm:$0xf]
        %v1815 = vld [vmem:[%s5 + $0xc] sm:$0xf]
        %v1816 = vld [vmem:[%s5 + $0x10] sm:$0xf]
        %v1817 = vld [vmem:[%s5 + $0x14] sm:$0xf]
        %v1818 = vld [vmem:[%s5 + $0x18] sm:$0xf]
        %v1819 = vld [vmem:[%s5 + $0x1c] sm:$0xf]
        %v1820 = vld [vmem:[%s5 + $0x20] sm:$0xf]
        %v1821 = vld [vmem:[%s5 + $0x24] sm:$0xf]
        %v1822 = vld [vmem:[%s5 + $0x28] sm:$0xf]
        %v1823 = vld [vmem:[%s5 + $0x2c] sm:$0xf]
        %v1824 = vld [vmem:[%s5 + $0x30] sm:$0xf]
        %v1825 = vld [vmem:[%s5 + $0x34] sm:$0xf]
        %v1826 = vld [vmem:[%s5 + $0x38] sm:$0xf]
        %v1827 = vld [vmem:[%s5 + $0x3c] sm:$0xf]
        %v1828 = vld [vmem:[#allocation9] sm:$0x1]
        %v1830 = vlaneseq
        %v1831 = vshrl.u32 %v1830, 7
        %v1832 = vsub.s32 0, %v1831
        %v1833 = vrot.slane %v1828, %v1832
        %v1851 = vunpack.c.l.b16 %v1812
        %v1852 = vunpack.c.l.b16 %v1813
        %v1853 = vunpack.c.l.b16 %v1814
        %v1854 = vunpack.c.l.b16 %v1815
        %v1855 = vunpack.c.l.b16 %v1816
        %v1856 = vunpack.c.l.b16 %v1817
        %v1857 = vunpack.c.l.b16 %v1818
        %v1858 = vunpack.c.l.b16 %v1819
        %v1859 = vunpack.c.l.b16 %v1820
        %v1860 = vunpack.c.l.b16 %v1821
        %v1861 = vunpack.c.l.b16 %v1822
        %v1862 = vunpack.c.l.b16 %v1823
        %v1863 = vunpack.c.l.b16 %v1824
        %v1864 = vunpack.c.l.b16 %v1825
        %v1865 = vunpack.c.l.b16 %v1826
        %v1866 = vunpack.c.l.b16 %v1827
        %v1867 = vpack.c.b16 %v1852, %v1851
        %v1868 = vpack.c.b16 %v1854, %v1853
        %v1869 = vpack.c.b16 %v1856, %v1855
        %v1870 = vpack.c.b16 %v1858, %v1857
        %v1871 = vpack.c.b16 %v1860, %v1859
        %v1872 = vpack.c.b16 %v1862, %v1861
        %v1873 = vpack.c.b16 %v1864, %v1863
        %v1874 = vpack.c.b16 %v1866, %v1865
        %1883 = vmatprep.subr.bf16.mxu0 0
        %1884 = vmatpush1.bf16.msra.mxu0 %v1867
        %1885 = vmatprep.subr.bf16.mxu0 0
        %1886 = vmatpush1.bf16.msra.mxu0 %v1868
        %1887 = vmatprep.subr.bf16.mxu0 0
        %1888 = vmatpush1.bf16.msra.mxu0 %v1869
        %1889 = vmatprep.subr.bf16.mxu0 0
        %1890 = vmatpush1.bf16.msra.mxu0 %v1870
        %1891 = vmatprep.subr.bf16.mxu0 0
        %1892 = vmatpush1.bf16.msra.mxu0 %v1871
        %1893 = vmatprep.subr.bf16.mxu0 0
        %1894 = vmatpush1.bf16.msra.mxu0 %v1872
        %1895 = vmatprep.subr.bf16.mxu0 0
        %1896 = vmatpush1.bf16.msra.mxu0 %v1873
        %1897 = vmatprep.subr.bf16.mxu0 0
        %1898 = vmatpush1.bf16.msra.mxu0 %v1874
        %1899 = vmatprep.subr.bf16.mxu0 0
        %1900 = vmatpush1.bf16.msra.mxu0 0
        %1901 = vmatprep.subr.bf16.mxu0 0
        %1902 = vmatpush1.bf16.msra.mxu0 0
        %1903 = vmatprep.subr.bf16.mxu0 0
        %1904 = vmatpush1.bf16.msra.mxu0 0
        %1905 = vmatprep.subr.bf16.mxu0 0
        %1906 = vmatpush1.bf16.msra.mxu0 0
        %1907 = vmatprep.subr.bf16.mxu0 0
        %1908 = vmatpush1.bf16.msra.mxu0 0
        %1909 = vmatprep.subr.bf16.mxu0 0
        %1910 = vmatpush1.bf16.msra.mxu0 0
        %1911 = vmatprep.subr.bf16.mxu0 0
        %1912 = vmatpush1.bf16.msra.mxu0 0
        %1913 = vmatprep.subr.bf16.mxu0 0
        %1914 = vmatpush1.bf16.msra.mxu0 0
        %1915 = vmatprep.mubr.bf16.mxu0 0
        %1916 = vmatmul.mubr.bf16.gmra.mrb[0].mxu0 %v1808
        %v1917 = vpop.f32.mrb[0].mxu0
        %v1918 = vadd.f32 %v1833, %v1917
        %v1919 = vpop.f32.mrb[0].mxu0
        %v1920 = vpop.f32.mrb[0].mxu0
        %v1921 = vadd.f32 %v1833, %v1920
        %v1922 = vpop.f32.mrb[0].mxu0
        %1923 = vmatprep.mubr.bf16.mxu0 0
        %1924 = vmatmul.mubr.bf16.gmra.mrb[0].mxu0 %v1809
        %v1925 = vpop.f32.mrb[0].mxu0
        %v1926 = vadd.f32 %v1833, %v1925
        %v1927 = vpop.f32.mrb[0].mxu0
        %v1928 = vpop.f32.mrb[0].mxu0
        %v1929 = vadd.f32 %v1833, %v1928
        %v1930 = vpop.f32.mrb[0].mxu0
        %1931 = vmatprep.mubr.bf16.mxu0 0
        %1932 = vmatmul.mubr.bf16.gmra.mrb[0].mxu0 %v1810
        %v1933 = vpop.f32.mrb[0].mxu0
        %v1934 = vadd.f32 %v1833, %v1933
        %v1935 = vpop.f32.mrb[0].mxu0
        %v1936 = vpop.f32.mrb[0].mxu0
        %v1937 = vadd.f32 %v1833, %v1936
        %v1938 = vpop.f32.mrb[0].mxu0
        %1939 = vmatprep.mubr.bf16.mxu0 0
        %1940 = vmatmul.mubr.bf16.gmra.mrb[0].mxu0 %v1811
        %v1941 = vpop.f32.mrb[0].mxu0
        %v1942 = vadd.f32 %v1833, %v1941
        %v1943 = vpop.f32.mrb[0].mxu0
        %v1944 = vpop.f32.mrb[0].mxu0
        %v1945 = vadd.f32 %v1833, %v1944
        %v1946 = vpop.f32.mrb[0].mxu0
        %1947 = vdwg.mxu0
        %v1948 = vadd.f32 %v1800, %v1918
        %v1949 = vadd.f32 %v1801, %v1921
        %v1950 = vadd.f32 %v1802, %v1926
        %v1951 = vadd.f32 %v1803, %v1929
        %v1952 = vadd.f32 %v1804, %v1934
        %v1953 = vadd.f32 %v1805, %v1937
        %v1954 = vadd.f32 %v1806, %v1942
        %v1955 = vadd.f32 %v1807, %v1945
        %v1956 = vmax.f32 %v1948, 0.0
        %v1957 = vmax.f32 %v1949, 0.0
        %v1958 = vmax.f32 %v1950, 0.0
        %v1959 = vmax.f32 %v1951, 0.0
        %v1960 = vmax.f32 %v1952, 0.0
        %v1961 = vmax.f32 %v1953, 0.0
        %v1962 = vmax.f32 %v1954, 0.0
        %v1963 = vmax.f32 %v1955, 0.0
        %v1964 = vpack.c.bf16 %v1957, %v1956
        %v1965 = vpack.c.bf16 %v1959, %v1958
        %v1966 = vpack.c.bf16 %v1961, %v1960
        %v1967 = vpack.c.bf16 %v1963, %v1962
        %v1972 = vunpack.c.l.b16 %v1964
        %v1973 = vunpack.c.h.b16 %v1964
        %v1974 = vunpack.c.l.b16 %v1965
        %v1975 = vunpack.c.h.b16 %v1965
        %v1976 = vunpack.c.l.b16 %v1966
        %v1977 = vunpack.c.h.b16 %v1966
        %v1978 = vunpack.c.l.b16 %v1967
        %v1979 = vunpack.c.h.b16 %v1967
        %v1980 = vpack.c.b16 %v1972, %v1972
        %v1981 = vpack.c.b16 %v1973, %v1973
        %v1982 = vpack.c.b16 %v1974, %v1974
        %v1983 = vpack.c.b16 %v1975, %v1975
        %v1984 = vpack.c.b16 %v1976, %v1976
        %v1985 = vpack.c.b16 %v1977, %v1977
        %v1986 = vpack.c.b16 %v1978, %v1978
        %v1987 = vpack.c.b16 %v1979, %v1979
        %v1988 = vrot.slane %v1980, 6
        %v1989 = vrot.slane %v1988, 4
        %v1990 = vrot.slane %v1981, 6
        %v1991 = vsel %vm733, %v1989, %v1990
        %v1992 = vrot.slane %v1990, 4
        %v1993 = vrot.slane %v1982, 6
        %v1994 = vrot.slane %v1993, 4
        %v1995 = vrot.slane %v1983, 6
        %v1996 = vsel %vm733, %v1994, %v1995
        %v1997 = vrot.slane %v1995, 4
        %v1998 = vrot.slane %v1984, 6
        %v1999 = vrot.slane %v1998, 4
        %v2000 = vrot.slane %v1985, 6
        %v2001 = vsel %vm733, %v1999, %v2000
        %v2002 = vrot.slane %v2000, 4
        %v2003 = vrot.slane %v1986, 6
        %v2004 = vrot.slane %v2003, 4
        %v2005 = vrot.slane %v1987, 6
        %v2006 = vsel %vm733, %v2004, %v2005
        %v2007 = vrot.slane %v2005, 4
        %2020 = vst [vmem:[#allocation2] sm:$0xc] %v1988
        %2021 = vst [vmem:[#allocation2 + $0x4] sm:$0xf] %v1991
        %2022 = vst [vmem:[#allocation2 + $0x8] sm:$0x3] %v1992
        %2023 = vst [vmem:[#allocation2 + $0xc] sm:$0xc] %v1993
        %2024 = vst [vmem:[#allocation2 + $0x10] sm:$0xf] %v1996
        %2025 = vst [vmem:[#allocation2 + $0x14] sm:$0x3] %v1997
        %2026 = vst [vmem:[#allocation2 + $0x18] sm:$0xc] %v1998
        %2027 = vst [vmem:[#allocation2 + $0x1c] sm:$0xf] %v2001
        %2028 = vst [vmem:[#allocation2 + $0x20] sm:$0x3] %v2002
        %2029 = vst [vmem:[#allocation2 + $0x24] sm:$0xc] %v2003
        %2030 = vst [vmem:[#allocation2 + $0x28] sm:$0xf] %v2006
        %2031 = vst [vmem:[#allocation2 + $0x2c] sm:$0x3] %v2007
        %v2032 = vld [vmem:[#allocation2] sm:$0xf]
        %v2033 = vld [vmem:[#allocation2 + $0x4] sm:$0xf]
        %v2034 = vld [vmem:[#allocation2 + $0xc] sm:$0xf]
        %v2035 = vld [vmem:[#allocation2 + $0x10] sm:$0xf]
        %v2036 = vld [vmem:[#allocation2 + $0x18] sm:$0xf]
        %v2037 = vld [vmem:[#allocation2 + $0x1c] sm:$0xf]
        %v2038 = vld [vmem:[#allocation2 + $0x24] sm:$0xf]
        %v2039 = vld [vmem:[#allocation2 + $0x28] sm:$0xf]
        %v2040 = vld [vmem:[#allocation2] sm:$0xc]
        %v2041 = vld [vmem:[#allocation2 + $0x8] sm:$0x3]
        %v2042 = vld [vmem:[#allocation2 + $0xc] sm:$0xc]
        %v2043 = vld [vmem:[#allocation2 + $0x14] sm:$0x3]
        %v2044 = vld [vmem:[#allocation2 + $0x18] sm:$0xc]
        %v2045 = vld [vmem:[#allocation2 + $0x20] sm:$0x3]
        %v2046 = vld [vmem:[#allocation2 + $0x24] sm:$0xc]
        %v2047 = vld [vmem:[#allocation2 + $0x2c] sm:$0x3]
        %v2056 = vunpack.c.l.b16 %v2032
        %v2057 = vunpack.c.l.b16 %v2033
        %v2058 = vunpack.c.l.b16 %v2034
        %v2059 = vunpack.c.l.b16 %v2035
        %v2060 = vunpack.c.l.b16 %v2036
        %v2061 = vunpack.c.l.b16 %v2037
        %v2062 = vunpack.c.l.b16 %v2038
        %v2063 = vunpack.c.l.b16 %v2039
        %v2064 = vpack.c.b16 %v2057, %v2056
        %v2065 = vpack.c.b16 %v2059, %v2058
        %v2066 = vpack.c.b16 %v2061, %v2060
        %v2067 = vpack.c.b16 %v2063, %v2062
        %v2080 = vunpack.c.l.b16 %v2040
        %v2081 = vunpack.c.l.b16 %v2041
        %v2082 = vunpack.c.l.b16 %v2042
        %v2083 = vunpack.c.l.b16 %v2043
        %v2084 = vunpack.c.l.b16 %v2044
        %v2085 = vunpack.c.l.b16 %v2045
        %v2086 = vunpack.c.l.b16 %v2046
        %v2087 = vunpack.c.l.b16 %v2047
        %v2088 = vpack.c.b16 %v2057, %v2080
        %v2089 = vpack.c.b16 %v2081, %v2081
        %v2090 = vpack.c.b16 %v2059, %v2082
        %v2091 = vpack.c.b16 %v2083, %v2083
        %v2092 = vpack.c.b16 %v2061, %v2084
        %v2093 = vpack.c.b16 %v2085, %v2085
        %v2094 = vpack.c.b16 %v2063, %v2086
        %v2095 = vpack.c.b16 %v2087, %v2087
        %vm2096 = vcmask 1045504
        %v2097 = vrot.slane %v2088, 2
        %v2098 = vrot.slane %v2089, 2
        %v2099 = vsel %vm2096, %v2097, %v2098
        %v2100 = vrot.slane %v2090, 2
        %v2101 = vrot.slane %v2091, 2
        %v2102 = vsel %vm2096, %v2100, %v2101
        %v2103 = vrot.slane %v2092, 2
        %v2104 = vrot.slane %v2093, 2
        %v2105 = vsel %vm2096, %v2103, %v2104
        %v2106 = vrot.slane %v2094, 2
        %v2107 = vrot.slane %v2095, 2
        %v2108 = vsel %vm2096, %v2106, %v2107
        %v2113 = vld [vmem:[#allocation11] sm:$0xf]
        %v2114 = vld [vmem:[#allocation11 + $0x4] sm:$0xf]
        %v2115 = vld [vmem:[#allocation11 + $0x8] sm:$0xf]
        %v2116 = vld [vmem:[#allocation11 + $0xc] sm:$0xf]
        %v2117 = vld [vmem:[#allocation11 + $0x10] sm:$0xf]
        %v2118 = vld [vmem:[#allocation11 + $0x14] sm:$0xf]
        %v2119 = vld [vmem:[#allocation11 + $0x18] sm:$0xf]
        %v2120 = vld [vmem:[#allocation11 + $0x1c] sm:$0xf]
        %v2121 = vld [vmem:[#allocation11 + $0x20] sm:$0xf]
        %v2122 = vld [vmem:[#allocation11 + $0x24] sm:$0xf]
        %v2123 = vld [vmem:[#allocation11 + $0x28] sm:$0xf]
        %v2124 = vld [vmem:[#allocation11 + $0x2c] sm:$0xf]
        %v2125 = vld [vmem:[#allocation11 + $0x30] sm:$0xf]
        %v2126 = vld [vmem:[#allocation11 + $0x34] sm:$0xf]
        %v2127 = vld [vmem:[#allocation11 + $0x38] sm:$0xf]
        %v2128 = vld [vmem:[#allocation11 + $0x3c] sm:$0xf]
        %v2129 = vld [vmem:[#allocation11 + $0x40] sm:$0xf]
        %v2130 = vld [vmem:[#allocation11 + $0x44] sm:$0xf]
        %v2131 = vld [vmem:[#allocation11 + $0x48] sm:$0xf]
        %v2132 = vld [vmem:[#allocation11 + $0x4c] sm:$0xf]
        %v2133 = vld [vmem:[#allocation11 + $0x50] sm:$0xf]
        %v2134 = vld [vmem:[#allocation11 + $0x54] sm:$0xf]
        %v2135 = vld [vmem:[#allocation11 + $0x58] sm:$0xf]
        %v2136 = vld [vmem:[#allocation11 + $0x5c] sm:$0xf]
        %v2137 = vld [vmem:[#allocation11 + $0x60] sm:$0xf]
        %v2138 = vld [vmem:[#allocation11 + $0x64] sm:$0xf]
        %v2139 = vld [vmem:[#allocation11 + $0x68] sm:$0xf]
        %v2140 = vld [vmem:[#allocation11 + $0x6c] sm:$0xf]
        %v2141 = vld [vmem:[#allocation11 + $0x70] sm:$0xf]
        %v2142 = vld [vmem:[#allocation11 + $0x74] sm:$0xf]
        %v2143 = vld [vmem:[#allocation11 + $0x78] sm:$0xf]
        %v2144 = vld [vmem:[#allocation11 + $0x7c] sm:$0xf]
        %v2145 = vld [vmem:[#allocation12] sm:$0x1]
        %v2147 = vlaneseq
        %v2148 = vshrl.u32 %v2147, 7
        %v2149 = vsub.s32 0, %v2148
        %v2150 = vrot.slane %v2145, %v2149
        %v2184 = vunpack.c.l.b16 %v2113
        %v2185 = vunpack.c.l.b16 %v2114
        %v2186 = vunpack.c.l.b16 %v2115
        %v2187 = vunpack.c.l.b16 %v2116
        %v2188 = vunpack.c.l.b16 %v2117
        %v2189 = vunpack.c.l.b16 %v2118
        %v2190 = vunpack.c.l.b16 %v2119
        %v2191 = vunpack.c.l.b16 %v2120
        %v2192 = vunpack.c.l.b16 %v2121
        %v2193 = vunpack.c.l.b16 %v2122
        %v2194 = vunpack.c.l.b16 %v2123
        %v2195 = vunpack.c.l.b16 %v2124
        %v2196 = vunpack.c.l.b16 %v2125
        %v2197 = vunpack.c.l.b16 %v2126
        %v2198 = vunpack.c.l.b16 %v2127
        %v2199 = vunpack.c.l.b16 %v2128
        %v2200 = vunpack.c.l.b16 %v2129
        %v2201 = vunpack.c.l.b16 %v2130
        %v2202 = vunpack.c.l.b16 %v2131
        %v2203 = vunpack.c.l.b16 %v2132
        %v2204 = vunpack.c.l.b16 %v2133
        %v2205 = vunpack.c.l.b16 %v2134
        %v2206 = vunpack.c.l.b16 %v2135
        %v2207 = vunpack.c.l.b16 %v2136
        %v2208 = vunpack.c.l.b16 %v2137
        %v2209 = vunpack.c.l.b16 %v2138
        %v2210 = vunpack.c.l.b16 %v2139
        %v2211 = vunpack.c.l.b16 %v2140
        %v2212 = vunpack.c.l.b16 %v2141
        %v2213 = vunpack.c.l.b16 %v2142
        %v2214 = vunpack.c.l.b16 %v2143
        %v2215 = vunpack.c.l.b16 %v2144
        %v2216 = vpack.c.b16 %v2185, %v2184
        %v2217 = vpack.c.b16 %v2187, %v2186
        %v2218 = vpack.c.b16 %v2189, %v2188
        %v2219 = vpack.c.b16 %v2191, %v2190
        %v2220 = vpack.c.b16 %v2193, %v2192
        %v2221 = vpack.c.b16 %v2195, %v2194
        %v2222 = vpack.c.b16 %v2197, %v2196
        %v2223 = vpack.c.b16 %v2199, %v2198
        %v2224 = vpack.c.b16 %v2201, %v2200
        %v2225 = vpack.c.b16 %v2203, %v2202
        %v2226 = vpack.c.b16 %v2205, %v2204
        %v2227 = vpack.c.b16 %v2207, %v2206
        %v2228 = vpack.c.b16 %v2209, %v2208
        %v2229 = vpack.c.b16 %v2211, %v2210
        %v2230 = vpack.c.b16 %v2213, %v2212
        %v2231 = vpack.c.b16 %v2215, %v2214
        %2248 = vmatprep.subr.bf16.mxu0 0
        %2249 = vmatpush1.bf16.msra.mxu0 %v2216
        %2250 = vmatprep.subr.bf16.mxu0 0
        %2251 = vmatpush1.bf16.msra.mxu0 %v2217
        %2252 = vmatprep.subr.bf16.mxu0 0
        %2253 = vmatpush1.bf16.msra.mxu0 %v2218
        %2254 = vmatprep.subr.bf16.mxu0 0
        %2255 = vmatpush1.bf16.msra.mxu0 %v2219
        %2256 = vmatprep.subr.bf16.mxu0 0
        %2257 = vmatpush1.bf16.msra.mxu0 %v2220
        %2258 = vmatprep.subr.bf16.mxu0 0
        %2259 = vmatpush1.bf16.msra.mxu0 %v2221
        %2260 = vmatprep.subr.bf16.mxu0 0
        %2261 = vmatpush1.bf16.msra.mxu0 %v2222
        %2262 = vmatprep.subr.bf16.mxu0 0
        %2263 = vmatpush1.bf16.msra.mxu0 %v2223
        %2264 = vmatprep.subr.bf16.mxu0 0
        %2265 = vmatpush1.bf16.msra.mxu0 %v2224
        %2266 = vmatprep.subr.bf16.mxu0 0
        %2267 = vmatpush1.bf16.msra.mxu0 %v2225
        %2268 = vmatprep.subr.bf16.mxu0 0
        %2269 = vmatpush1.bf16.msra.mxu0 %v2226
        %2270 = vmatprep.subr.bf16.mxu0 0
        %2271 = vmatpush1.bf16.msra.mxu0 %v2227
        %2272 = vmatprep.subr.bf16.mxu0 0
        %2273 = vmatpush1.bf16.msra.mxu0 %v2228
        %2274 = vmatprep.subr.bf16.mxu0 0
        %2275 = vmatpush1.bf16.msra.mxu0 %v2229
        %2276 = vmatprep.subr.bf16.mxu0 0
        %2277 = vmatpush1.bf16.msra.mxu0 %v2230
        %2278 = vmatprep.subr.bf16.mxu0 0
        %2279 = vmatpush1.bf16.msra.mxu0 %v2231
        %2280 = vmatprep.mubr.bf16.mxu0 %v2099
        %2281 = vmatmul.mubr.bf16.gmra.mrb[0].mxu0 %v2064
        %v2282 = vpop.f32.mrb[0].mxu0
        %v2283 = vadd.f32 %v2150, %v2282
        %v2284 = vpop.f32.mrb[0].mxu0
        %v2285 = vpop.f32.mrb[0].mxu0
        %v2286 = vadd.f32 %v2150, %v2285
        %v2287 = vpop.f32.mrb[0].mxu0
        %2288 = vmatprep.mubr.bf16.mxu0 %v2102
        %2289 = vmatmul.mubr.bf16.gmra.mrb[0].mxu0 %v2065
        %v2290 = vpop.f32.mrb[0].mxu0
        %v2291 = vadd.f32 %v2150, %v2290
        %v2292 = vpop.f32.mrb[0].mxu0
        %v2293 = vpop.f32.mrb[0].mxu0
        %v2294 = vadd.f32 %v2150, %v2293
        %v2295 = vpop.f32.mrb[0].mxu0
        %2296 = vmatprep.mubr.bf16.mxu0 %v2105
        %2297 = vmatmul.mubr.bf16.gmra.mrb[0].mxu0 %v2066
        %v2298 = vpop.f32.mrb[0].mxu0
        %v2299 = vadd.f32 %v2150, %v2298
        %v2300 = vpop.f32.mrb[0].mxu0
        %v2301 = vpop.f32.mrb[0].mxu0
        %v2302 = vadd.f32 %v2150, %v2301
        %v2303 = vpop.f32.mrb[0].mxu0
        %2304 = vmatprep.mubr.bf16.mxu0 %v2108
        %2305 = vmatmul.mubr.bf16.gmra.mrb[0].mxu0 %v2067
        %v2306 = vpop.f32.mrb[0].mxu0
        %v2307 = vadd.f32 %v2150, %v2306
        %v2308 = vpop.f32.mrb[0].mxu0
        %v2309 = vpop.f32.mrb[0].mxu0
        %v2310 = vadd.f32 %v2150, %v2309
        %v2311 = vpop.f32.mrb[0].mxu0
        %2312 = vdwg.mxu0
        %v2313 = vmax.f32 %v2283, 0.0
        %v2314 = vmax.f32 %v2286, 0.0
        %v2315 = vmax.f32 %v2291, 0.0
        %v2316 = vmax.f32 %v2294, 0.0
        %v2317 = vmax.f32 %v2299, 0.0
        %v2318 = vmax.f32 %v2302, 0.0
        %v2319 = vmax.f32 %v2307, 0.0
        %v2320 = vmax.f32 %v2310, 0.0
        %v2321 = vpack.c.bf16 %v2314, %v2313
        %v2322 = vpack.c.bf16 %v2316, %v2315
        %v2323 = vpack.c.bf16 %v2318, %v2317
        %v2324 = vpack.c.bf16 %v2320, %v2319
        %v2329 = vunpack.c.l.b16 %v2321
        %v2330 = vunpack.c.h.b16 %v2321
        %v2331 = vunpack.c.l.b16 %v2322
        %v2332 = vunpack.c.h.b16 %v2322
        %v2333 = vunpack.c.l.b16 %v2323
        %v2334 = vunpack.c.h.b16 %v2323
        %v2335 = vunpack.c.l.b16 %v2324
        %v2336 = vunpack.c.h.b16 %v2324
        %v2337 = vpack.c.b16 %v2329, %v2329
        %v2338 = vpack.c.b16 %v2330, %v2330
        %v2339 = vpack.c.b16 %v2331, %v2331
        %v2340 = vpack.c.b16 %v2332, %v2332
        %v2341 = vpack.c.b16 %v2333, %v2333
        %v2342 = vpack.c.b16 %v2334, %v2334
        %v2343 = vpack.c.b16 %v2335, %v2335
        %v2344 = vpack.c.b16 %v2336, %v2336
        %v2345 = vrot.slane %v2337, 6
        %v2346 = vrot.slane %v2345, 4
        %v2347 = vrot.slane %v2338, 6
        %v2348 = vsel %vm733, %v2346, %v2347
        %v2349 = vrot.slane %v2347, 4
        %v2350 = vrot.slane %v2339, 6
        %v2351 = vrot.slane %v2350, 4
        %v2352 = vrot.slane %v2340, 6
        %v2353 = vsel %vm733, %v2351, %v2352
        %v2354 = vrot.slane %v2352, 4
        %v2355 = vrot.slane %v2341, 6
        %v2356 = vrot.slane %v2355, 4
        %v2357 = vrot.slane %v2342, 6
        %v2358 = vsel %vm733, %v2356, %v2357
        %v2359 = vrot.slane %v2357, 4
        %v2360 = vrot.slane %v2343, 6
        %v2361 = vrot.slane %v2360, 4
        %v2362 = vrot.slane %v2344, 6
        %v2363 = vsel %vm733, %v2361, %v2362
        %v2364 = vrot.slane %v2362, 4
        %2377 = vst [vmem:[#allocation2] sm:$0xc] %v2345
        %2378 = vst [vmem:[#allocation2 + $0x4] sm:$0xf] %v2348
        %2379 = vst [vmem:[#allocation2 + $0x8] sm:$0x3] %v2349
        %2380 = vst [vmem:[#allocation2 + $0xc] sm:$0xc] %v2350
        %2381 = vst [vmem:[#allocation2 + $0x10] sm:$0xf] %v2353
        %2382 = vst [vmem:[#allocation2 + $0x14] sm:$0x3] %v2354
        %2383 = vst [vmem:[#allocation2 + $0x18] sm:$0xc] %v2355
        %2384 = vst [vmem:[#allocation2 + $0x1c] sm:$0xf] %v2358
        %2385 = vst [vmem:[#allocation2 + $0x20] sm:$0x3] %v2359
        %2386 = vst [vmem:[#allocation2 + $0x24] sm:$0xc] %v2360
        %2387 = vst [vmem:[#allocation2 + $0x28] sm:$0xf] %v2363
        %2388 = vst [vmem:[#allocation2 + $0x2c] sm:$0x3] %v2364
        %v2389 = vld [vmem:[#allocation2] sm:$0xf]
        %v2390 = vld [vmem:[#allocation2 + $0x4] sm:$0xf]
        %v2391 = vld [vmem:[#allocation2 + $0xc] sm:$0xf]
        %v2392 = vld [vmem:[#allocation2 + $0x10] sm:$0xf]
        %v2393 = vld [vmem:[#allocation2 + $0x18] sm:$0xf]
        %v2394 = vld [vmem:[#allocation2 + $0x1c] sm:$0xf]
        %v2395 = vld [vmem:[#allocation2 + $0x24] sm:$0xf]
        %v2396 = vld [vmem:[#allocation2 + $0x28] sm:$0xf]
        %v2397 = vld [vmem:[#allocation2] sm:$0xc]
        %v2398 = vld [vmem:[#allocation2 + $0x8] sm:$0x3]
        %v2399 = vld [vmem:[#allocation2 + $0xc] sm:$0xc]
        %v2400 = vld [vmem:[#allocation2 + $0x14] sm:$0x3]
        %v2401 = vld [vmem:[#allocation2 + $0x18] sm:$0xc]
        %v2402 = vld [vmem:[#allocation2 + $0x20] sm:$0x3]
        %v2403 = vld [vmem:[#allocation2 + $0x24] sm:$0xc]
        %v2404 = vld [vmem:[#allocation2 + $0x2c] sm:$0x3]
        %v2413 = vunpack.c.l.b16 %v2389
        %v2414 = vunpack.c.l.b16 %v2390
        %v2415 = vunpack.c.l.b16 %v2391
        %v2416 = vunpack.c.l.b16 %v2392
        %v2417 = vunpack.c.l.b16 %v2393
        %v2418 = vunpack.c.l.b16 %v2394
        %v2419 = vunpack.c.l.b16 %v2395
        %v2420 = vunpack.c.l.b16 %v2396
        %v2421 = vpack.c.b16 %v2414, %v2413
        %v2422 = vpack.c.b16 %v2416, %v2415
        %v2423 = vpack.c.b16 %v2418, %v2417
        %v2424 = vpack.c.b16 %v2420, %v2419
        %v2437 = vunpack.c.l.b16 %v2397
        %v2438 = vunpack.c.l.b16 %v2398
        %v2439 = vunpack.c.l.b16 %v2399
        %v2440 = vunpack.c.l.b16 %v2400
        %v2441 = vunpack.c.l.b16 %v2401
        %v2442 = vunpack.c.l.b16 %v2402
        %v2443 = vunpack.c.l.b16 %v2403
        %v2444 = vunpack.c.l.b16 %v2404
        %v2445 = vpack.c.b16 %v2414, %v2437
        %v2446 = vpack.c.b16 %v2438, %v2438
        %v2447 = vpack.c.b16 %v2416, %v2439
        %v2448 = vpack.c.b16 %v2440, %v2440
        %v2449 = vpack.c.b16 %v2418, %v2441
        %v2450 = vpack.c.b16 %v2442, %v2442
        %v2451 = vpack.c.b16 %v2420, %v2443
        %v2452 = vpack.c.b16 %v2444, %v2444
        %v2453 = vrot.slane %v2445, 2
        %v2454 = vrot.slane %v2446, 2
        %v2455 = vsel %vm2096, %v2453, %v2454
        %v2456 = vrot.slane %v2447, 2
        %v2457 = vrot.slane %v2448, 2
        %v2458 = vsel %vm2096, %v2456, %v2457
        %v2459 = vrot.slane %v2449, 2
        %v2460 = vrot.slane %v2450, 2
        %v2461 = vsel %vm2096, %v2459, %v2460
        %v2462 = vrot.slane %v2451, 2
        %v2463 = vrot.slane %v2452, 2
        %v2464 = vsel %vm2096, %v2462, %v2463
        %v2469 = vld [vmem:[#allocation14] sm:$0xf]
        %v2470 = vld [vmem:[#allocation14 + $0x4] sm:$0xf]
        %v2471 = vld [vmem:[#allocation14 + $0x8] sm:$0xf]
        %v2472 = vld [vmem:[#allocation14 + $0xc] sm:$0xf]
        %v2473 = vld [vmem:[#allocation14 + $0x10] sm:$0xf]
        %v2474 = vld [vmem:[#allocation14 + $0x14] sm:$0xf]
        %v2475 = vld [vmem:[#allocation14 + $0x18] sm:$0xf]
        %v2476 = vld [vmem:[#allocation14 + $0x1c] sm:$0xf]
        %v2477 = vld [vmem:[#allocation14 + $0x20] sm:$0xf]
        %v2478 = vld [vmem:[#allocation14 + $0x24] sm:$0xf]
        %v2479 = vld [vmem:[#allocation14 + $0x28] sm:$0xf]
        %v2480 = vld [vmem:[#allocation14 + $0x2c] sm:$0xf]
        %v2481 = vld [vmem:[#allocation14 + $0x30] sm:$0xf]
        %v2482 = vld [vmem:[#allocation14 + $0x34] sm:$0xf]
        %v2483 = vld [vmem:[#allocation14 + $0x38] sm:$0xf]
        %v2484 = vld [vmem:[#allocation14 + $0x3c] sm:$0xf]
        %v2485 = vld [vmem:[#allocation14 + $0x40] sm:$0xf]
        %v2486 = vld [vmem:[#allocation14 + $0x44] sm:$0xf]
        %v2487 = vld [vmem:[#allocation14 + $0x48] sm:$0xf]
        %v2488 = vld [vmem:[#allocation14 + $0x4c] sm:$0xf]
        %v2489 = vld [vmem:[#allocation14 + $0x50] sm:$0xf]
        %v2490 = vld [vmem:[#allocation14 + $0x54] sm:$0xf]
        %v2491 = vld [vmem:[#allocation14 + $0x58] sm:$0xf]
        %v2492 = vld [vmem:[#allocation14 + $0x5c] sm:$0xf]
        %v2493 = vld [vmem:[#allocation14 + $0x60] sm:$0xf]
        %v2494 = vld [vmem:[#allocation14 + $0x64] sm:$0xf]
        %v2495 = vld [vmem:[#allocation14 + $0x68] sm:$0xf]
        %v2496 = vld [vmem:[#allocation14 + $0x6c] sm:$0xf]
        %v2497 = vld [vmem:[#allocation14 + $0x70] sm:$0xf]
        %v2498 = vld [vmem:[#allocation14 + $0x74] sm:$0xf]
        %v2499 = vld [vmem:[#allocation14 + $0x78] sm:$0xf]
        %v2500 = vld [vmem:[#allocation14 + $0x7c] sm:$0xf]
        %v2501 = vld [vmem:[#allocation15] sm:$0x1]
        %v2503 = vlaneseq
        %v2504 = vshrl.u32 %v2503, 7
        %v2505 = vsub.s32 0, %v2504
        %v2506 = vrot.slane %v2501, %v2505
        %v2540 = vunpack.c.l.b16 %v2469
        %v2541 = vunpack.c.l.b16 %v2470
        %v2542 = vunpack.c.l.b16 %v2471
        %v2543 = vunpack.c.l.b16 %v2472
        %v2544 = vunpack.c.l.b16 %v2473
        %v2545 = vunpack.c.l.b16 %v2474
        %v2546 = vunpack.c.l.b16 %v2475
        %v2547 = vunpack.c.l.b16 %v2476
        %v2548 = vunpack.c.l.b16 %v2477
        %v2549 = vunpack.c.l.b16 %v2478
        %v2550 = vunpack.c.l.b16 %v2479
        %v2551 = vunpack.c.l.b16 %v2480
        %v2552 = vunpack.c.l.b16 %v2481
        %v2553 = vunpack.c.l.b16 %v2482
        %v2554 = vunpack.c.l.b16 %v2483
        %v2555 = vunpack.c.l.b16 %v2484
        %v2556 = vunpack.c.l.b16 %v2485
        %v2557 = vunpack.c.l.b16 %v2486
        %v2558 = vunpack.c.l.b16 %v2487
        %v2559 = vunpack.c.l.b16 %v2488
        %v2560 = vunpack.c.l.b16 %v2489
        %v2561 = vunpack.c.l.b16 %v2490
        %v2562 = vunpack.c.l.b16 %v2491
        %v2563 = vunpack.c.l.b16 %v2492
        %v2564 = vunpack.c.l.b16 %v2493
        %v2565 = vunpack.c.l.b16 %v2494
        %v2566 = vunpack.c.l.b16 %v2495
        %v2567 = vunpack.c.l.b16 %v2496
        %v2568 = vunpack.c.l.b16 %v2497
        %v2569 = vunpack.c.l.b16 %v2498
        %v2570 = vunpack.c.l.b16 %v2499
        %v2571 = vunpack.c.l.b16 %v2500
        %v2572 = vpack.c.b16 %v2541, %v2540
        %v2573 = vpack.c.b16 %v2543, %v2542
        %v2574 = vpack.c.b16 %v2545, %v2544
        %v2575 = vpack.c.b16 %v2547, %v2546
        %v2576 = vpack.c.b16 %v2549, %v2548
        %v2577 = vpack.c.b16 %v2551, %v2550
        %v2578 = vpack.c.b16 %v2553, %v2552
        %v2579 = vpack.c.b16 %v2555, %v2554
        %v2580 = vpack.c.b16 %v2557, %v2556
        %v2581 = vpack.c.b16 %v2559, %v2558
        %v2582 = vpack.c.b16 %v2561, %v2560
        %v2583 = vpack.c.b16 %v2563, %v2562
        %v2584 = vpack.c.b16 %v2565, %v2564
        %v2585 = vpack.c.b16 %v2567, %v2566
        %v2586 = vpack.c.b16 %v2569, %v2568
        %v2587 = vpack.c.b16 %v2571, %v2570
        %2604 = vmatprep.subr.bf16.mxu0 0
        %2605 = vmatpush1.bf16.msra.mxu0 %v2572
        %2606 = vmatprep.subr.bf16.mxu0 0
        %2607 = vmatpush1.bf16.msra.mxu0 %v2573
        %2608 = vmatprep.subr.bf16.mxu0 0
        %2609 = vmatpush1.bf16.msra.mxu0 %v2574
        %2610 = vmatprep.subr.bf16.mxu0 0
        %2611 = vmatpush1.bf16.msra.mxu0 %v2575
        %2612 = vmatprep.subr.bf16.mxu0 0
        %2613 = vmatpush1.bf16.msra.mxu0 %v2576
        %2614 = vmatprep.subr.bf16.mxu0 0
        %2615 = vmatpush1.bf16.msra.mxu0 %v2577
        %2616 = vmatprep.subr.bf16.mxu0 0
        %2617 = vmatpush1.bf16.msra.mxu0 %v2578
        %2618 = vmatprep.subr.bf16.mxu0 0
        %2619 = vmatpush1.bf16.msra.mxu0 %v2579
        %2620 = vmatprep.subr.bf16.mxu0 0
        %2621 = vmatpush1.bf16.msra.mxu0 %v2580
        %2622 = vmatprep.subr.bf16.mxu0 0
        %2623 = vmatpush1.bf16.msra.mxu0 %v2581
        %2624 = vmatprep.subr.bf16.mxu0 0
        %2625 = vmatpush1.bf16.msra.mxu0 %v2582
        %2626 = vmatprep.subr.bf16.mxu0 0
        %2627 = vmatpush1.bf16.msra.mxu0 %v2583
        %2628 = vmatprep.subr.bf16.mxu0 0
        %2629 = vmatpush1.bf16.msra.mxu0 %v2584
        %2630 = vmatprep.subr.bf16.mxu0 0
        %2631 = vmatpush1.bf16.msra.mxu0 %v2585
        %2632 = vmatprep.subr.bf16.mxu0 0
        %2633 = vmatpush1.bf16.msra.mxu0 %v2586
        %2634 = vmatprep.subr.bf16.mxu0 0
        %2635 = vmatpush1.bf16.msra.mxu0 %v2587
        %2636 = vmatprep.mubr.bf16.mxu0 %v2455
        %2637 = vmatmul.mubr.bf16.gmra.mrb[0].mxu0 %v2421
        %v2638 = vpop.f32.mrb[0].mxu0
        %v2639 = vadd.f32 %v2506, %v2638
        %v2640 = vpop.f32.mrb[0].mxu0
        %v2641 = vpop.f32.mrb[0].mxu0
        %v2642 = vadd.f32 %v2506, %v2641
        %v2643 = vpop.f32.mrb[0].mxu0
        %2644 = vmatprep.mubr.bf16.mxu0 %v2458
        %2645 = vmatmul.mubr.bf16.gmra.mrb[0].mxu0 %v2422
        %v2646 = vpop.f32.mrb[0].mxu0
        %v2647 = vadd.f32 %v2506, %v2646
        %v2648 = vpop.f32.mrb[0].mxu0
        %v2649 = vpop.f32.mrb[0].mxu0
        %v2650 = vadd.f32 %v2506, %v2649
        %v2651 = vpop.f32.mrb[0].mxu0
        %2652 = vmatprep.mubr.bf16.mxu0 %v2461
        %2653 = vmatmul.mubr.bf16.gmra.mrb[0].mxu0 %v2423
        %v2654 = vpop.f32.mrb[0].mxu0
        %v2655 = vadd.f32 %v2506, %v2654
        %v2656 = vpop.f32.mrb[0].mxu0
        %v2657 = vpop.f32.mrb[0].mxu0
        %v2658 = vadd.f32 %v2506, %v2657
        %v2659 = vpop.f32.mrb[0].mxu0
        %2660 = vmatprep.mubr.bf16.mxu0 %v2464
        %2661 = vmatmul.mubr.bf16.gmra.mrb[0].mxu0 %v2424
        %v2662 = vpop.f32.mrb[0].mxu0
        %v2663 = vadd.f32 %v2506, %v2662
        %v2664 = vpop.f32.mrb[0].mxu0
        %v2665 = vpop.f32.mrb[0].mxu0
        %v2666 = vadd.f32 %v2506, %v2665
        %v2667 = vpop.f32.mrb[0].mxu0
        %2668 = vdwg.mxu0
        %v2669 = vmax.f32 %v2639, 0.0
        %v2670 = vmax.f32 %v2642, 0.0
        %v2671 = vmax.f32 %v2647, 0.0
        %v2672 = vmax.f32 %v2650, 0.0
        %v2673 = vmax.f32 %v2655, 0.0
        %v2674 = vmax.f32 %v2658, 0.0
        %v2675 = vmax.f32 %v2663, 0.0
        %v2676 = vmax.f32 %v2666, 0.0
        %v2677 = vadd.f32 %v2669, %v1956
        %v2678 = vadd.f32 %v2670, %v1957
        %v2679 = vadd.f32 %v2671, %v1958
        %v2680 = vadd.f32 %v2672, %v1959
        %v2681 = vadd.f32 %v2673, %v1960
        %v2682 = vadd.f32 %v2674, %v1961
        %v2683 = vadd.f32 %v2675, %v1962
        %v2684 = vadd.f32 %v2676, %v1963
        %v2685 = vmax.f32 %v2677, 0.0
        %v2686 = vmax.f32 %v2678, 0.0
        %v2687 = vmax.f32 %v2679, 0.0
        %v2688 = vmax.f32 %v2680, 0.0
        %v2689 = vmax.f32 %v2681, 0.0
        %v2690 = vmax.f32 %v2682, 0.0
        %v2691 = vmax.f32 %v2683, 0.0
        %v2692 = vmax.f32 %v2684, 0.0
        %v2693 = vpack.c.bf16 %v2686, %v2685
        %v2694 = vpack.c.bf16 %v2688, %v2687
        %v2695 = vpack.c.bf16 %v2690, %v2689
        %v2696 = vpack.c.bf16 %v2692, %v2691
        %v2697 = vld [vmem:[#allocation17] sm:$0xf]
        %v2698 = vld [vmem:[#allocation17 + $0x4] sm:$0xf]
        %v2699 = vld [vmem:[#allocation17 + $0x8] sm:$0xf]
        %v2700 = vld [vmem:[#allocation17 + $0xc] sm:$0xf]
        %v2701 = vld [vmem:[#allocation17 + $0x10] sm:$0xf]
        %v2702 = vld [vmem:[#allocation17 + $0x14] sm:$0xf]
        %v2703 = vld [vmem:[#allocation17 + $0x18] sm:$0xf]
        %v2704 = vld [vmem:[#allocation17 + $0x1c] sm:$0xf]
        %v2705 = vld [vmem:[#allocation17 + $0x20] sm:$0xf]
        %v2706 = vld [vmem:[#allocation17 + $0x24] sm:$0xf]
        %v2707 = vld [vmem:[#allocation17 + $0x28] sm:$0xf]
        %v2708 = vld [vmem:[#allocation17 + $0x2c] sm:$0xf]
        %v2709 = vld [vmem:[#allocation17 + $0x30] sm:$0xf]
        %v2710 = vld [vmem:[#allocation17 + $0x34] sm:$0xf]
        %v2711 = vld [vmem:[#allocation17 + $0x38] sm:$0xf]
        %v2712 = vld [vmem:[#allocation17 + $0x3c] sm:$0xf]
        %v2713 = vld [vmem:[#allocation18] sm:$0x1]
        %v2715 = vlaneseq
        %v2716 = vshrl.u32 %v2715, 7
        %v2717 = vsub.s32 0, %v2716
        %v2718 = vrot.slane %v2713, %v2717
        %v2736 = vunpack.c.l.b16 %v2697
        %v2737 = vunpack.c.l.b16 %v2698
        %v2738 = vunpack.c.l.b16 %v2699
        %v2739 = vunpack.c.l.b16 %v2700
        %v2740 = vunpack.c.l.b16 %v2701
        %v2741 = vunpack.c.l.b16 %v2702
        %v2742 = vunpack.c.l.b16 %v2703
        %v2743 = vunpack.c.l.b16 %v2704
        %v2744 = vunpack.c.l.b16 %v2705
        %v2745 = vunpack.c.l.b16 %v2706
        %v2746 = vunpack.c.l.b16 %v2707
        %v2747 = vunpack.c.l.b16 %v2708
        %v2748 = vunpack.c.l.b16 %v2709
        %v2749 = vunpack.c.l.b16 %v2710
        %v2750 = vunpack.c.l.b16 %v2711
        %v2751 = vunpack.c.l.b16 %v2712
        %v2752 = vpack.c.b16 %v2737, %v2736
        %v2753 = vpack.c.b16 %v2739, %v2738
        %v2754 = vpack.c.b16 %v2741, %v2740
        %v2755 = vpack.c.b16 %v2743, %v2742
        %v2756 = vpack.c.b16 %v2745, %v2744
        %v2757 = vpack.c.b16 %v2747, %v2746
        %v2758 = vpack.c.b16 %v2749, %v2748
        %v2759 = vpack.c.b16 %v2751, %v2750
        %2768 = vmatprep.subr.bf16.mxu0 0
        %2769 = vmatpush1.bf16.msra.mxu0 %v2752
        %2770 = vmatprep.subr.bf16.mxu0 0
        %2771 = vmatpush1.bf16.msra.mxu0 %v2753
        %2772 = vmatprep.subr.bf16.mxu0 0
        %2773 = vmatpush1.bf16.msra.mxu0 %v2754
        %2774 = vmatprep.subr.bf16.mxu0 0
        %2775 = vmatpush1.bf16.msra.mxu0 %v2755
        %2776 = vmatprep.subr.bf16.mxu0 0
        %2777 = vmatpush1.bf16.msra.mxu0 %v2756
        %2778 = vmatprep.subr.bf16.mxu0 0
        %2779 = vmatpush1.bf16.msra.mxu0 %v2757
        %2780 = vmatprep.subr.bf16.mxu0 0
        %2781 = vmatpush1.bf16.msra.mxu0 %v2758
        %2782 = vmatprep.subr.bf16.mxu0 0
        %2783 = vmatpush1.bf16.msra.mxu0 %v2759
        %2784 = vmatprep.subr.bf16.mxu0 0
        %2785 = vmatpush1.bf16.msra.mxu0 0
        %2786 = vmatprep.subr.bf16.mxu0 0
        %2787 = vmatpush1.bf16.msra.mxu0 0
        %2788 = vmatprep.subr.bf16.mxu0 0
        %2789 = vmatpush1.bf16.msra.mxu0 0
        %2790 = vmatprep.subr.bf16.mxu0 0
        %2791 = vmatpush1.bf16.msra.mxu0 0
        %2792 = vmatprep.subr.bf16.mxu0 0
        %2793 = vmatpush1.bf16.msra.mxu0 0
        %2794 = vmatprep.subr.bf16.mxu0 0
        %2795 = vmatpush1.bf16.msra.mxu0 0
        %2796 = vmatprep.subr.bf16.mxu0 0
        %2797 = vmatpush1.bf16.msra.mxu0 0
        %2798 = vmatprep.subr.bf16.mxu0 0
        %2799 = vmatpush1.bf16.msra.mxu0 0
        %2800 = vmatprep.mubr.bf16.mxu0 0
        %2801 = vmatmul.mubr.bf16.gmra.mrb[0].mxu0 %v2693
        %v2802 = vpop.f32.mrb[0].mxu0
        %v2803 = vadd.f32 %v2718, %v2802
        %v2804 = vpop.f32.mrb[0].mxu0
        %v2805 = vpop.f32.mrb[0].mxu0
        %v2806 = vadd.f32 %v2718, %v2805
        %v2807 = vpop.f32.mrb[0].mxu0
        %2808 = vmatprep.mubr.bf16.mxu0 0
        %2809 = vmatmul.mubr.bf16.gmra.mrb[0].mxu0 %v2694
        %v2810 = vpop.f32.mrb[0].mxu0
        %v2811 = vadd.f32 %v2718, %v2810
        %v2812 = vpop.f32.mrb[0].mxu0
        %v2813 = vpop.f32.mrb[0].mxu0
        %v2814 = vadd.f32 %v2718, %v2813
        %v2815 = vpop.f32.mrb[0].mxu0
        %2816 = vmatprep.mubr.bf16.mxu0 0
        %2817 = vmatmul.mubr.bf16.gmra.mrb[0].mxu0 %v2695
        %v2818 = vpop.f32.mrb[0].mxu0
        %v2819 = vadd.f32 %v2718, %v2818
        %v2820 = vpop.f32.mrb[0].mxu0
        %v2821 = vpop.f32.mrb[0].mxu0
        %v2822 = vadd.f32 %v2718, %v2821
        %v2823 = vpop.f32.mrb[0].mxu0
        %2824 = vmatprep.mubr.bf16.mxu0 0
        %2825 = vmatmul.mubr.bf16.gmra.mrb[0].mxu0 %v2696
        %v2826 = vpop.f32.mrb[0].mxu0
        %v2827 = vadd.f32 %v2718, %v2826
        %v2828 = vpop.f32.mrb[0].mxu0
        %v2829 = vpop.f32.mrb[0].mxu0
        %v2830 = vadd.f32 %v2718, %v2829
        %v2831 = vpop.f32.mrb[0].mxu0
        %2832 = vdwg.mxu0
        %v2833 = vmax.f32 %v2803, 0.0
        %v2834 = vmax.f32 %v2806, 0.0
        %v2835 = vmax.f32 %v2811, 0.0
        %v2836 = vmax.f32 %v2814, 0.0
        %v2837 = vmax.f32 %v2819, 0.0
        %v2838 = vmax.f32 %v2822, 0.0
        %v2839 = vmax.f32 %v2827, 0.0
        %v2840 = vmax.f32 %v2830, 0.0
        %v2841 = vpack.c.bf16 %v2834, %v2833
        %v2842 = vpack.c.bf16 %v2836, %v2835
        %v2843 = vpack.c.bf16 %v2838, %v2837
        %v2844 = vpack.c.bf16 %v2840, %v2839
        %v2845 = vld [vmem:[%s13] sm:$0xf]
        %v2846 = vld [vmem:[%s13 + $0x4] sm:$0xf]
        %v2847 = vld [vmem:[%s13 + $0x8] sm:$0xf]
        %v2848 = vld [vmem:[%s13 + $0xc] sm:$0xf]
        %v2849 = vld [vmem:[%s13 + $0x10] sm:$0xf]
        %v2850 = vld [vmem:[%s13 + $0x14] sm:$0xf]
        %v2851 = vld [vmem:[%s13 + $0x18] sm:$0xf]
        %v2852 = vld [vmem:[%s13 + $0x1c] sm:$0xf]
        %v2853 = vld [vmem:[%s13 + $0x20] sm:$0xf]
        %v2854 = vld [vmem:[%s13 + $0x24] sm:$0xf]
        %v2855 = vld [vmem:[%s13 + $0x28] sm:$0xf]
        %v2856 = vld [vmem:[%s13 + $0x2c] sm:$0xf]
        %v2857 = vld [vmem:[%s13 + $0x30] sm:$0xf]
        %v2858 = vld [vmem:[%s13 + $0x34] sm:$0xf]
        %v2859 = vld [vmem:[%s13 + $0x38] sm:$0xf]
        %v2860 = vld [vmem:[%s13 + $0x3c] sm:$0xf]
        %v2861 = vld [vmem:[%s14] sm:$0x1]
        %v2863 = vlaneseq
        %v2864 = vshrl.u32 %v2863, 7
        %v2865 = vsub.s32 0, %v2864
        %v2866 = vrot.slane %v2861, %v2865
        %v2884 = vunpack.c.l.b16 %v2845
        %v2885 = vunpack.c.l.b16 %v2846
        %v2886 = vunpack.c.l.b16 %v2847
        %v2887 = vunpack.c.l.b16 %v2848
        %v2888 = vunpack.c.l.b16 %v2849
        %v2889 = vunpack.c.l.b16 %v2850
        %v2890 = vunpack.c.l.b16 %v2851
        %v2891 = vunpack.c.l.b16 %v2852
        %v2892 = vunpack.c.l.b16 %v2853
        %v2893 = vunpack.c.l.b16 %v2854
        %v2894 = vunpack.c.l.b16 %v2855
        %v2895 = vunpack.c.l.b16 %v2856
        %v2896 = vunpack.c.l.b16 %v2857
        %v2897 = vunpack.c.l.b16 %v2858
        %v2898 = vunpack.c.l.b16 %v2859
        %v2899 = vunpack.c.l.b16 %v2860
        %v2900 = vpack.c.b16 %v2885, %v2884
        %v2901 = vpack.c.b16 %v2887, %v2886
        %v2902 = vpack.c.b16 %v2889, %v2888
        %v2903 = vpack.c.b16 %v2891, %v2890
        %v2904 = vpack.c.b16 %v2893, %v2892
        %v2905 = vpack.c.b16 %v2895, %v2894
        %v2906 = vpack.c.b16 %v2897, %v2896
        %v2907 = vpack.c.b16 %v2899, %v2898
        %2916 = vmatprep.subr.bf16.mxu0 0
        %2917 = vmatpush1.bf16.msra.mxu0 %v2900
        %2918 = vmatprep.subr.bf16.mxu0 0
        %2919 = vmatpush1.bf16.msra.mxu0 %v2901
        %2920 = vmatprep.subr.bf16.mxu0 0
        %2921 = vmatpush1.bf16.msra.mxu0 %v2902
        %2922 = vmatprep.subr.bf16.mxu0 0
        %2923 = vmatpush1.bf16.msra.mxu0 %v2903
        %2924 = vmatprep.subr.bf16.mxu0 0
        %2925 = vmatpush1.bf16.msra.mxu0 %v2904
        %2926 = vmatprep.subr.bf16.mxu0 0
        %2927 = vmatpush1.bf16.msra.mxu0 %v2905
        %2928 = vmatprep.subr.bf16.mxu0 0
        %2929 = vmatpush1.bf16.msra.mxu0 %v2906
        %2930 = vmatprep.subr.bf16.mxu0 0
        %2931 = vmatpush1.bf16.msra.mxu0 %v2907
        %2932 = vmatprep.subr.bf16.mxu0 0
        %2933 = vmatpush1.bf16.msra.mxu0 0
        %2934 = vmatprep.subr.bf16.mxu0 0
        %2935 = vmatpush1.bf16.msra.mxu0 0
        %2936 = vmatprep.subr.bf16.mxu0 0
        %2937 = vmatpush1.bf16.msra.mxu0 0
        %2938 = vmatprep.subr.bf16.mxu0 0
        %2939 = vmatpush1.bf16.msra.mxu0 0
        %2940 = vmatprep.subr.bf16.mxu0 0
        %2941 = vmatpush1.bf16.msra.mxu0 0
        %2942 = vmatprep.subr.bf16.mxu0 0
        %2943 = vmatpush1.bf16.msra.mxu0 0
        %2944 = vmatprep.subr.bf16.mxu0 0
        %2945 = vmatpush1.bf16.msra.mxu0 0
        %2946 = vmatprep.subr.bf16.mxu0 0
        %2947 = vmatpush1.bf16.msra.mxu0 0
        %2948 = vmatprep.mubr.bf16.mxu0 0
        %2949 = vmatmul.mubr.bf16.gmra.mrb[0].mxu0 %v2841
        %v2950 = vpop.f32.mrb[0].mxu0
        %v2951 = vadd.f32 %v2866, %v2950
        %v2952 = vpop.f32.mrb[0].mxu0
        %v2953 = vpop.f32.mrb[0].mxu0
        %v2954 = vadd.f32 %v2866, %v2953
        %v2955 = vpop.f32.mrb[0].mxu0
        %2956 = vmatprep.mubr.bf16.mxu0 0
        %2957 = vmatmul.mubr.bf16.gmra.mrb[0].mxu0 %v2842
        %v2958 = vpop.f32.mrb[0].mxu0
        %v2959 = vadd.f32 %v2866, %v2958
        %v2960 = vpop.f32.mrb[0].mxu0
        %v2961 = vpop.f32.mrb[0].mxu0
        %v2962 = vadd.f32 %v2866, %v2961
        %v2963 = vpop.f32.mrb[0].mxu0
        %2964 = vmatprep.mubr.bf16.mxu0 0
        %2965 = vmatmul.mubr.bf16.gmra.mrb[0].mxu0 %v2843
        %v2966 = vpop.f32.mrb[0].mxu0
        %v2967 = vadd.f32 %v2866, %v2966
        %v2968 = vpop.f32.mrb[0].mxu0
        %v2969 = vpop.f32.mrb[0].mxu0
        %v2970 = vadd.f32 %v2866, %v2969
        %v2971 = vpop.f32.mrb[0].mxu0
        %2972 = vmatprep.mubr.bf16.mxu0 0
        %2973 = vmatmul.mubr.bf16.gmra.mrb[0].mxu0 %v2844
        %v2974 = vpop.f32.mrb[0].mxu0
        %v2975 = vadd.f32 %v2866, %v2974
        %v2976 = vpop.f32.mrb[0].mxu0
        %v2977 = vpop.f32.mrb[0].mxu0
        %v2978 = vadd.f32 %v2866, %v2977
        %v2979 = vpop.f32.mrb[0].mxu0
        %2980 = vdwg.mxu0
        %v2981 = vmax.f32 %v2951, 0.0
        %v2982 = vmax.f32 %v2954, 0.0
        %v2983 = vmax.f32 %v2959, 0.0
        %v2984 = vmax.f32 %v2962, 0.0
        %v2985 = vmax.f32 %v2967, 0.0
        %v2986 = vmax.f32 %v2970, 0.0
        %v2987 = vmax.f32 %v2975, 0.0
        %v2988 = vmax.f32 %v2978, 0.0
        %v2989 = vld [vmem:[#allocation20] sm:$0xf]
        %v2990 = vld [vmem:[#allocation20 + $0x4] sm:$0xf]
        %v2991 = vld [vmem:[#allocation20 + $0x8] sm:$0xf]
        %v2992 = vld [vmem:[#allocation20 + $0xc] sm:$0xf]
        %v2993 = vld [vmem:[#allocation20 + $0x10] sm:$0xf]
        %v2994 = vld [vmem:[#allocation20 + $0x14] sm:$0xf]
        %v2995 = vld [vmem:[#allocation20 + $0x18] sm:$0xf]
        %v2996 = vld [vmem:[#allocation20 + $0x1c] sm:$0xf]
        %v2997 = vld [vmem:[#allocation20 + $0x20] sm:$0xf]
        %v2998 = vld [vmem:[#allocation20 + $0x24] sm:$0xf]
        %v2999 = vld [vmem:[#allocation20 + $0x28] sm:$0xf]
        %v3000 = vld [vmem:[#allocation20 + $0x2c] sm:$0xf]
        %v3001 = vld [vmem:[#allocation20 + $0x30] sm:$0xf]
        %v3002 = vld [vmem:[#allocation20 + $0x34] sm:$0xf]
        %v3003 = vld [vmem:[#allocation20 + $0x38] sm:$0xf]
        %v3004 = vld [vmem:[#allocation20 + $0x3c] sm:$0xf]
        %v3005 = vld [vmem:[%s16] sm:$0x1]
        %v3007 = vlaneseq
        %v3008 = vshrl.u32 %v3007, 7
        %v3009 = vsub.s32 0, %v3008
        %v3010 = vrot.slane %v3005, %v3009
        %v3028 = vunpack.c.l.b16 %v2989
        %v3029 = vunpack.c.l.b16 %v2990
        %v3030 = vunpack.c.l.b16 %v2991
        %v3031 = vunpack.c.l.b16 %v2992
        %v3032 = vunpack.c.l.b16 %v2993
        %v3033 = vunpack.c.l.b16 %v2994
        %v3034 = vunpack.c.l.b16 %v2995
        %v3035 = vunpack.c.l.b16 %v2996
        %v3036 = vunpack.c.l.b16 %v2997
        %v3037 = vunpack.c.l.b16 %v2998
        %v3038 = vunpack.c.l.b16 %v2999
        %v3039 = vunpack.c.l.b16 %v3000
        %v3040 = vunpack.c.l.b16 %v3001
        %v3041 = vunpack.c.l.b16 %v3002
        %v3042 = vunpack.c.l.b16 %v3003
        %v3043 = vunpack.c.l.b16 %v3004
        %v3044 = vpack.c.b16 %v3029, %v3028
        %v3045 = vpack.c.b16 %v3031, %v3030
        %v3046 = vpack.c.b16 %v3033, %v3032
        %v3047 = vpack.c.b16 %v3035, %v3034
        %v3048 = vpack.c.b16 %v3037, %v3036
        %v3049 = vpack.c.b16 %v3039, %v3038
        %v3050 = vpack.c.b16 %v3041, %v3040
        %v3051 = vpack.c.b16 %v3043, %v3042
        %3060 = vmatprep.subr.bf16.mxu0 0
        %3061 = vmatpush1.bf16.msra.mxu0 %v3044
        %3062 = vmatprep.subr.bf16.mxu0 0
        %3063 = vmatpush1.bf16.msra.mxu0 %v3045
        %3064 = vmatprep.subr.bf16.mxu0 0
        %3065 = vmatpush1.bf16.msra.mxu0 %v3046
        %3066 = vmatprep.subr.bf16.mxu0 0
        %3067 = vmatpush1.bf16.msra.mxu0 %v3047
        %3068 = vmatprep.subr.bf16.mxu0 0
        %3069 = vmatpush1.bf16.msra.mxu0 %v3048
        %3070 = vmatprep.subr.bf16.mxu0 0
        %3071 = vmatpush1.bf16.msra.mxu0 %v3049
        %3072 = vmatprep.subr.bf16.mxu0 0
        %3073 = vmatpush1.bf16.msra.mxu0 %v3050
        %3074 = vmatprep.subr.bf16.mxu0 0
        %3075 = vmatpush1.bf16.msra.mxu0 %v3051
        %3076 = vmatprep.subr.bf16.mxu0 0
        %3077 = vmatpush1.bf16.msra.mxu0 0
        %3078 = vmatprep.subr.bf16.mxu0 0
        %3079 = vmatpush1.bf16.msra.mxu0 0
        %3080 = vmatprep.subr.bf16.mxu0 0
        %3081 = vmatpush1.bf16.msra.mxu0 0
        %3082 = vmatprep.subr.bf16.mxu0 0
        %3083 = vmatpush1.bf16.msra.mxu0 0
        %3084 = vmatprep.subr.bf16.mxu0 0
        %3085 = vmatpush1.bf16.msra.mxu0 0
        %3086 = vmatprep.subr.bf16.mxu0 0
        %3087 = vmatpush1.bf16.msra.mxu0 0
        %3088 = vmatprep.subr.bf16.mxu0 0
        %3089 = vmatpush1.bf16.msra.mxu0 0
        %3090 = vmatprep.subr.bf16.mxu0 0
        %3091 = vmatpush1.bf16.msra.mxu0 0
        %3092 = vmatprep.mubr.bf16.mxu0 0
        %3093 = vmatmul.mubr.bf16.gmra.mrb[0].mxu0 %v2693
        %v3094 = vpop.f32.mrb[0].mxu0
        %v3095 = vadd.f32 %v3010, %v3094
        %v3096 = vpop.f32.mrb[0].mxu0
        %v3097 = vpop.f32.mrb[0].mxu0
        %v3098 = vadd.f32 %v3010, %v3097
        %v3099 = vpop.f32.mrb[0].mxu0
        %3100 = vmatprep.mubr.bf16.mxu0 0
        %3101 = vmatmul.mubr.bf16.gmra.mrb[0].mxu0 %v2694
        %v3102 = vpop.f32.mrb[0].mxu0
        %v3103 = vadd.f32 %v3010, %v3102
        %v3104 = vpop.f32.mrb[0].mxu0
        %v3105 = vpop.f32.mrb[0].mxu0
        %v3106 = vadd.f32 %v3010, %v3105
        %v3107 = vpop.f32.mrb[0].mxu0
        %3108 = vmatprep.mubr.bf16.mxu0 0
        %3109 = vmatmul.mubr.bf16.gmra.mrb[0].mxu0 %v2695
        %v3110 = vpop.f32.mrb[0].mxu0
        %v3111 = vadd.f32 %v3010, %v3110
        %v3112 = vpop.f32.mrb[0].mxu0
        %v3113 = vpop.f32.mrb[0].mxu0
        %v3114 = vadd.f32 %v3010, %v3113
        %v3115 = vpop.f32.mrb[0].mxu0
        %3116 = vmatprep.mubr.bf16.mxu0 0
        %3117 = vmatmul.mubr.bf16.gmra.mrb[0].mxu0 %v2696
        %v3118 = vpop.f32.mrb[0].mxu0
        %v3119 = vadd.f32 %v3010, %v3118
        %v3120 = vpop.f32.mrb[0].mxu0
        %v3121 = vpop.f32.mrb[0].mxu0
        %v3122 = vadd.f32 %v3010, %v3121
        %v3123 = vpop.f32.mrb[0].mxu0
        %3124 = vdwg.mxu0
        %v3125 = vadd.f32 %v2981, %v3095
        %v3126 = vadd.f32 %v2982, %v3098
        %v3127 = vadd.f32 %v2983, %v3103
        %v3128 = vadd.f32 %v2984, %v3106
        %v3129 = vadd.f32 %v2985, %v3111
        %v3130 = vadd.f32 %v2986, %v3114
        %v3131 = vadd.f32 %v2987, %v3119
        %v3132 = vadd.f32 %v2988, %v3122
        %v3133 = vmax.f32 %v3125, 0.0
        %v3134 = vmax.f32 %v3126, 0.0
        %v3135 = vmax.f32 %v3127, 0.0
        %v3136 = vmax.f32 %v3128, 0.0
        %v3137 = vmax.f32 %v3129, 0.0
        %v3138 = vmax.f32 %v3130, 0.0
        %v3139 = vmax.f32 %v3131, 0.0
        %v3140 = vmax.f32 %v3132, 0.0
        %v3141 = vadd.f32 %v3133, %v3134
        %v3142 = vrot.slane %v3141, 4
        %v3143 = vadd.f32 %v3141, %v3142
        %v3144 = vrot.slane %v3143, 2
        %v3145 = vadd.f32 %v3143, %v3144
        %v3146 = vrot.slane %v3145, 1
        %v3147 = vadd.f32 %v3145, %v3146
        %v3148 = vadd.f32 %v3135, %v3136
        %v3149 = vrot.slane %v3148, 4
        %v3150 = vadd.f32 %v3148, %v3149
        %v3151 = vrot.slane %v3150, 2
        %v3152 = vadd.f32 %v3150, %v3151
        %v3153 = vrot.slane %v3152, 1
        %v3154 = vadd.f32 %v3152, %v3153
        %v3155 = vadd.f32 %v3137, %v3138
        %v3156 = vrot.slane %v3155, 4
        %v3157 = vadd.f32 %v3155, %v3156
        %v3158 = vrot.slane %v3157, 2
        %v3159 = vadd.f32 %v3157, %v3158
        %v3160 = vrot.slane %v3159, 1
        %v3161 = vadd.f32 %v3159, %v3160
        %v3162 = vadd.f32 %v3139, %v3140
        %v3163 = vrot.slane %v3162, 4
        %v3164 = vadd.f32 %v3162, %v3163
        %v3165 = vrot.slane %v3164, 2
        %v3166 = vadd.f32 %v3164, %v3165
        %v3167 = vrot.slane %v3166, 1
        %v3168 = vadd.f32 %v3166, %v3167
        %v3169 = vmul.f32 %v3147, 0.0625
        %v3170 = vmul.f32 %v3154, 0.0625
        %v3171 = vmul.f32 %v3161, 0.0625
        %v3172 = vmul.f32 %v3168, 0.0625
        %vm3177 = vcmask 1041409
        %v3178 = vsel %vm3177, %v3170, %v3169
        %vm3179 = vcmask 1042434
        %v3180 = vsel %vm3179, %v3171, %v3178
        %vm3181 = vcmask 1043459
        %v3182 = vsel %vm3181, %v3172, %v3180
        %3184 = vst [vmem:[%s694] sm:$0xf] %v3182
        %s3185 = sand.u32 %s407, 1
        %s3186 = scalar_lea.sflag [#allocation5], %s3185
        %s3187 = sand.u32 %s407, 1
        %s3188 = smul.addr %s3187, 4
        %s3189 = scalar_lea.vmem [#allocation21], %s3188
        // Predicated region
        $region133: #{tpu_custom_call.1} parent=87 // pred_check
          %p3190 = pneg %p417
        $region134: #{tpu_custom_call.1} parent=87 // pred_check_branch
          %3192 = sbr.rel (%p3190) target = $region136
        $region135: #{tpu_custom_call.1} parent=87 // pred_region
          %s3194 = ssub.s32 64, 64
          %3195 = vsyncadd %s3186, %s3194
          %s3196 = smul.addr %s37, 64
          %s3197 = scalar_lea.hbm %s17, %s3196
          %s3199 = sshll.u32 %s3189, 4
          %s3200 = int_to_ptr.vmem [resolvable:$true] %s3199
          %3202 = dma.vmem_to_hbm [thread:$0]  %s3200, 64, %s3197, %s3186
        $region136: #{tpu_custom_call.1} parent=87 // pred_fallthru
          _
      $region88: #{tpu_custom_call.1} parent=5 // pred_fallthru
        _
      %p3203 = scmp.le.s32.totalorder 2, %s32
      // Predicated region
      $region137: #{tpu_custom_call.1} parent=5 // pred_check
        %p3204 = pneg %p3203
      $region138: #{tpu_custom_call.1} parent=5 // pred_check_branch
        %3206 = sbr.rel (%p3204) target = $region140
      $region139: #{tpu_custom_call.1} parent=5 // pred_region
        %s3207 = ssub.s32 %s32, 2
        // Predicated region
        $region141: #{tpu_custom_call.1} parent=139 // pred_check
          %p3208 = pneg %p423
        $region142: #{tpu_custom_call.1} parent=139 // pred_check_branch
          %3210 = sbr.rel (%p3208) target = $region144
        $region143: #{tpu_custom_call.1} parent=139 // pred_region
          %s3211 = sand.u32 %s408, 1
          %s3212 = scalar_lea.sflag [#allocation5], %s3211
          %s3213 = sand.u32 %s408, 1
          %s3214 = smul.addr %s3213, 4
          %s3215 = scalar_lea.vmem [#allocation21], %s3214
          %3216 = dma.done %s3212, 64
        $region144: #{tpu_custom_call.1} parent=139 // pred_fallthru
          _
      $region140: #{tpu_custom_call.1} parent=5 // pred_fallthru
        _
    $region6: #{tpu_custom_call.1} parent=1 // loop_footer
      %s36 = sadd.s32 1, %s32
    $region7: #{tpu_custom_call.1} parent=1 // loop_footer_branch
      %31 = sbr.rel target = $region3
    $region8: #{tpu_custom_call.1} parent=1 // loop_exit
      _
    %3217 = vsyncpa [#allocation4], 1
    %s3218 = scalar_lea.sflag [#allocation4], 1
    %3219 = vsyncpa %s3218, 1
    %3220 = vsyncpa [#allocation7], 1
    %3221 = vsyncpa [#allocation10], 1
    %3222 = vsyncpa [#allocation13], 1
    %3223 = vsyncpa [#allocation16], 1
    %3224 = vsyncpa [#allocation19], 1
    %3225 = vsyncpa [#allocation5], 1
    %s3226 = scalar_lea.sflag [#allocation5], 1
    %3227 = vsyncpa %s3226, 1

</llo_original>
